<compile_context>
chip_gen: v7x
topology: tpu7x:2x2x1
jax: 0.10.0
libtpu: 0.0.40
codegen_flags: <defaults>
</compile_context>

<pallas_src>
import math
import numpy as np
import jax
import jax.numpy as jnp
from jax.experimental import pallas as pl
from jax.experimental.pallas import tpu as pltpu


def _fft_deblur_kernel(x_ref, fwd_ref, m1_ref, m2_ref, inv_ref, ia_ref, ib_ref,
                       bias_ref, o_ref):
    f32, bf16 = jnp.float32, jnp.bfloat16
    n_sp = fwd_ref.shape[0] // 2    # Bt*2H   rows of the stacked Re/Im row-spectrum
    n_row = inv_ref.shape[0] // 2   # Bt*H    output rows

    x = x_ref[...]                                                  # [Bt*H, Cp*W] bf16

    # Row-direction forward FFT: one stacked left matmul.
    #   rows 0:n_sp  -> (Re ; Im) spectrum,   rows n_sp: -> [[0,-I],[I,0]]-mixed copy.
    xa = jnp.dot(fwd_ref[...], x, preferred_element_type=f32).astype(bf16)

    # W-direction rFFT + both 1x1 convs (weights folded host-side into M1/M2).
    z = (jnp.dot(xa[:n_sp], m1_ref[...], preferred_element_type=f32) +
         jnp.dot(xa[n_sp:], m2_ref[...], preferred_element_type=f32)).astype(bf16)

    # Row-direction inverse FFT: one stacked left matmul (rows 0:n_row = Re,
    # rows n_row: = Im of the half-spectrum).
    zz = jnp.dot(inv_ref[...], z, preferred_element_type=f32).astype(bf16)

    # W-direction inverse rFFT (real output) + folded constant bias image.
    o_ref[...] = (jnp.dot(zz[:n_row], ia_ref[...], preferred_element_type=f32) +
                  jnp.dot(zz[n_row:], ib_ref[...], preferred_element_type=f32) +
                  bias_ref[...])


def _channel_pad(c, W):
    """Smallest padded channel count so that c_pad * W is a multiple of 128."""
    m = 128 // math.gcd(W, 128)
    return ((c + m - 1) // m) * m


def _build_operators(c_in, c_out, H, W, w1, b1, w2, b2, bt):
    """Host-side construction of the folded DFT/conv operators."""
    Wf = W // 2 + 1
    cp_in, cp_out = _channel_pad(c_in, W), _channel_pad(c_out, W)

    w1 = np.asarray(w1, np.float64); b1 = np.asarray(b1, np.float64)
    w2 = np.asarray(w2, np.float64); b2 = np.asarray(b2, np.float64)

    # The two 1x1 convs are one linear channel map + bias (same for Re and Im).
    wc = w2 @ w1                                   # [c_out, c_in]
    bc = w2 @ b1 + b2                              # [c_out]
    wc_p = np.zeros((cp_out, cp_in)); wc_p[:c_out, :c_in] = wc
    bc_p = np.zeros((cp_out,));       bc_p[:c_out] = bc

    hh, ww, kk = np.arange(H), np.arange(W), np.arange(Wf)

    # Forward FFT over H: X[m] = sum_h x[h] exp(-2*pi*i*m*h/H), stacked (Re ; Im).
    ang_h = 2.0 * np.pi * np.outer(hh, hh) / H
    Ch, Sh = np.cos(ang_h), -np.sin(ang_h)
    fwd_re = np.concatenate([Ch, Sh], axis=0)      # [2H, H]
    fwd_im = np.concatenate([-Sh, Ch], axis=0)     # [[0,-I],[I,0]] @ fwd_re

    # Forward rFFT over W with the conv channel map folded in:
    # M1 = kron(I, Cw) @ kron(wc^T, I) = kron(wc^T, Cw), same for the sin part.
    ang_w = 2.0 * np.pi * np.outer(ww, kk) / W
    Cw, Sw = np.cos(ang_w), -np.sin(ang_w)
    m1 = np.kron(wc_p.T, Cw)                       # [cp_in*W, cp_out*Wf]
    m2 = np.kron(wc_p.T, Sw)

    # Inverse FFT over H (norm="backward").
    gr = np.concatenate([np.cos(ang_h), -np.sin(ang_h)], axis=1) / H   # [H, 2H]
    gi = np.concatenate([np.sin(ang_h),  np.cos(ang_h)], axis=1) / H

    # Inverse rFFT over W (real output); alpha handles DC / Nyquist Hermitian terms.
    alpha = np.full(Wf, 2.0); alpha[0] = 1.0
    if W % 2 == 0:
        alpha[-1] = 1.0
    ang_kw = 2.0 * np.pi * np.outer(kk, ww) / W
    Awk = (alpha[:, None] * np.cos(ang_kw)) / W    # [Wf, W]
    Bwk = (-alpha[:, None] * np.sin(ang_kw)) / W
    ia = np.kron(np.eye(cp_out), Awk)              # [cp_out*Wf, cp_out*W]
    ib = np.kron(np.eye(cp_out), Bwk)

    # Constant bias image: bias added to Re & Im of every spectral bin -> irfft2.
    bias_z = np.repeat(bc_p, Wf)[None, :]          # [1, cp_out*Wf]
    Bz = np.ones((2 * H, 1)) @ bias_z              # [2H, cp_out*Wf]
    bias_img = gr @ Bz @ ia + gi @ Bz @ ib         # [H, cp_out*W]

    # Batched (block-diagonal) + Re/Im-stacked left operators.
    eye_bt = np.eye(bt)
    fwd_stack = np.concatenate([np.kron(eye_bt, fwd_re),
                                np.kron(eye_bt, fwd_im)], axis=0)   # [4H*bt, H*bt]
    inv_stack = np.concatenate([np.kron(eye_bt, gr),
                                np.kron(eye_bt, gi)], axis=0)       # [2H*bt, 2H*bt]
    bias_tiled = np.tile(bias_img, (bt, 1))                         # [H*bt, cp_out*W]

    bf = jnp.bfloat16
    return (cp_in, cp_out,
            jnp.asarray(fwd_stack, bf), jnp.asarray(m1, bf), jnp.asarray(m2, bf),
            jnp.asarray(inv_stack, bf), jnp.asarray(ia, bf), jnp.asarray(ib, bf),
            jnp.asarray(bias_tiled, jnp.float32))


def fft_deblur_forward(x, w1, b1, w2, b2, images_per_step=None):
    """x: [B, C, H, W] float32; w1/b1, w2/b2: the two 1x1 conv params."""
    B, C, H, W = x.shape
    c_out = w2.shape[0]
    Wf = W // 2 + 1

    # Default: keep >= 2 grid steps (one per v7x TensorCore) but batch a few
    # images per step when B is large to amortize per-step overhead on v5e/v6e.
    if images_per_step is None:
        images_per_step = 1
        for cand in (4, 3, 2):
            if B % cand == 0 and B // cand >= 2:
                images_per_step = cand
                break
    bt = images_per_step
    assert B % bt == 0, "batch must be divisible by images_per_step"
    steps = B // bt

    (cp_in, cp_out, fwd, m1, m2, inv, ia, ib, bias) = _build_operators(
        C, c_out, H, W, w1, b1, w2, b2, bt)

    cw_in, cw_out = cp_in * W, cp_out * W
    cf_out = cp_out * Wf
    rows_blk = bt * H

    # Lane-dense, channel-padded layout: rows = (image, H), lanes = (channel, W).
    xp = jnp.pad(x, ((0, 0), (0, cp_in - C), (0, 0), (0, 0)))
    x_rows = jnp.transpose(xp, (0, 2, 1, 3)).reshape(B * H, cw_in).astype(jnp.bfloat16)

    const = lambda a: pl.BlockSpec(a.shape, lambda i: (0, 0))

    flops = 2 * steps * (
        (4 * H * bt) * (H * bt) * cw_in            # stacked forward row-FFT
        + 2 * (2 * H * bt) * cw_in * cf_out        # M1, M2
        + (2 * H * bt) * (2 * H * bt) * cf_out     # stacked inverse row-FFT
        + 2 * (H * bt) * cf_out * cw_out)          # ia, ib
    const_bytes = sum(int(np.prod(a.shape)) * a.dtype.itemsize
                      for a in (fwd, m1, m2, inv, ia, ib, bias))
    bytes_accessed = const_bytes + x_rows.size * 2 + B * H * cw_out * 4

    out = pl.pallas_call(
        _fft_deblur_kernel,
        out_shape=jax.ShapeDtypeStruct((B * H, cw_out), jnp.float32),
        grid=(steps,),
        in_specs=[
            pl.BlockSpec((rows_blk, cw_in), lambda i: (i, 0)),   # x (bt images)
            const(fwd),    # stacked forward row-FFT operator
            const(m1),     # forward W-rFFT (cos)  + fused 1x1 convs
            const(m2),     # forward W-rFFT (sin)  + fused 1x1 convs
            const(inv),    # stacked inverse row-FFT operator
            const(ia),     # inverse W-rFFT (cos)
            const(ib),     # inverse W-rFFT (sin)
            const(bias),   # constant bias image (conv biases through the irfft2)
        ],
        out_specs=pl.BlockSpec((rows_blk, cw_out), lambda i: (i, 0)),
        compiler_params=pltpu.CompilerParams(
            dimension_semantics=("parallel",),
            vmem_limit_bytes=32 * 1024 * 1024),
        cost_estimate=pl.CostEstimate(flops=int(flops), transcendentals=0,
                                      bytes_accessed=int(bytes_accessed)),
    )(x_rows, fwd, m1, m2, inv, ia, ib, bias)

    out = out.reshape(B, H, cp_out, W)[:, :, :c_out, :]
    return jnp.transpose(out, (0, 2, 1, 3))


def fft_deblur_reference(x, w1, b1, w2, b2):
    """Pure-JAX reference matching the PyTorch forward semantics."""
    _, _, H, W = x.shape
    y = jnp.fft.rfft2(x, axes=(-2, -1))

    def conv1x1(t, w, bb):
        return jnp.einsum('oc,bchw->bohw', w, t) + bb[None, :, None, None]

    def fft_res(t):
        return conv1x1(conv1x1(t, w1, b1), w2, b2)

    y_imag = fft_res(jnp.imag(y))
    y_real = fft_res(jnp.real(y))
    return jnp.fft.irfft2(y_real + 1j * y_imag, s=(H, W), axes=(-2, -1))


if __name__ == "__main__":
    B, H, W = 2, 16, 16
    dim, outdim = 31, 31          # defaults of the PyTorch module

    key = jax.random.PRNGKey(0)
    ks = jax.random.split(key, 5)
    x = jax.random.normal(ks[0], (B, dim, H, W), jnp.float32)
    w1 = 0.1 * jax.random.normal(ks[1], (dim, dim), jnp.float32)
    b1 = 0.1 * jax.random.normal(ks[2], (dim,), jnp.float32)
    w2 = 0.1 * jax.random.normal(ks[3], (outdim, dim), jnp.float32)
    b2 = 0.1 * jax.random.normal(ks[4], (outdim,), jnp.float32)

    out = fft_deblur_forward(x, w1, b1, w2, b2)
    out = jax.block_until_ready(out)

    ref = fft_deblur_reference(x, w1, b1, w2, b2)
    assert out.shape == (B, outdim, H, W)
    max_err = float(jnp.max(jnp.abs(out - ref)))
    if not bool(jnp.allclose(out, ref, atol=2e-2, rtol=2e-2)):
        raise AssertionError(f"kernel mismatch, max abs err = {max_err}")

    print("KERNEL_OK")
</pallas_src>

<mosaic_0001>
module attributes {stable_mosaic.version = 11 : i64} {
  func.func @_fft_deblur_kernel(%arg0: i32, %arg1: memref<16x512xbf16, #tpu.memory_space<vmem>>, %arg2: memref<64x16xbf16, #tpu.memory_space<vmem>>, %arg3: memref<512x288xbf16, #tpu.memory_space<vmem>>, %arg4: memref<512x288xbf16, #tpu.memory_space<vmem>>, %arg5: memref<32x32xbf16, #tpu.memory_space<vmem>>, %arg6: memref<288x512xbf16, #tpu.memory_space<vmem>>, %arg7: memref<288x512xbf16, #tpu.memory_space<vmem>>, %arg8: memref<16x512xf32, #tpu.memory_space<vmem>>, %arg9: memref<16x512xf32, #tpu.memory_space<vmem>>) attributes {dimension_semantics = [#tpu.dimension_semantics<parallel>], iteration_bounds = array<i64: 2>, scalar_prefetch = 0 : i64, scratch_operands = 0 : i64, tpu.core_type = #tpu.core_type<tc>, window_params = [{transform_indices = @transform_0, window_bounds = array<i64: 16, 512>}, {pipeline_mode = #tpu.pipeline_mode<synchronous>, transform_indices = @transform_1, window_bounds = array<i64: 64, 16>}, {pipeline_mode = #tpu.pipeline_mode<synchronous>, transform_indices = @transform_2, window_bounds = array<i64: 512, 288>}, {pipeline_mode = #tpu.pipeline_mode<synchronous>, transform_indices = @transform_3, window_bounds = array<i64: 512, 288>}, {pipeline_mode = #tpu.pipeline_mode<synchronous>, transform_indices = @transform_4, window_bounds = array<i64: 32, 32>}, {pipeline_mode = #tpu.pipeline_mode<synchronous>, transform_indices = @transform_5, window_bounds = array<i64: 288, 512>}, {pipeline_mode = #tpu.pipeline_mode<synchronous>, transform_indices = @transform_6, window_bounds = array<i64: 288, 512>}, {pipeline_mode = #tpu.pipeline_mode<synchronous>, transform_indices = @transform_7, window_bounds = array<i64: 16, 512>}, {transform_indices = @transform_8, window_bounds = array<i64: 16, 512>}]} {
    %c0 = arith.constant 0 : index
    %c0_0 = arith.constant 0 : index
    %0 = vector.load %arg1[%c0, %c0_0] : memref<16x512xbf16, #tpu.memory_space<vmem>>, vector<16x512xbf16>
    %c0_1 = arith.constant 0 : index
    %c0_2 = arith.constant 0 : index
    %1 = vector.load %arg2[%c0_1, %c0_2] : memref<64x16xbf16, #tpu.memory_space<vmem>>, vector<64x16xbf16>
    %cst = arith.constant dense<0.000000e+00> : vector<64x512xf32>
    %2 = tpu.matmul %1, %0, %cst {dimension_numbers = #tpu.dot_dimension_numbers<[1], [0], [0], [1], [0, 0, 1, 1], [], []>} : vector<64x16xbf16>, vector<16x512xbf16>, vector<64x512xf32> -> vector<64x512xf32>
    %3 = arith.truncf %2 : vector<64x512xf32> to vector<64x512xbf16>
    %4 = vector.extract_strided_slice %3 {offsets = [0, 0], sizes = [32, 512], strides = [1, 1]} : vector<64x512xbf16> to vector<32x512xbf16>
    %c0_3 = arith.constant 0 : index
    %c0_4 = arith.constant 0 : index
    %5 = vector.load %arg3[%c0_3, %c0_4] : memref<512x288xbf16, #tpu.memory_space<vmem>>, vector<512x288xbf16>
    %cst_5 = arith.constant dense<0.000000e+00> : vector<32x288xf32>
    %6 = tpu.matmul %4, %5, %cst_5 {dimension_numbers = #tpu.dot_dimension_numbers<[1], [0], [0], [1], [0, 0, 1, 1], [], []>} : vector<32x512xbf16>, vector<512x288xbf16>, vector<32x288xf32> -> vector<32x288xf32>
    %7 = vector.extract_strided_slice %3 {offsets = [32, 0], sizes = [32, 512], strides = [1, 1]} : vector<64x512xbf16> to vector<32x512xbf16>
    %c0_6 = arith.constant 0 : index
    %c0_7 = arith.constant 0 : index
    %8 = vector.load %arg4[%c0_6, %c0_7] : memref<512x288xbf16, #tpu.memory_space<vmem>>, vector<512x288xbf16>
    %cst_8 = arith.constant dense<0.000000e+00> : vector<32x288xf32>
    %9 = tpu.matmul %7, %8, %cst_8 {dimension_numbers = #tpu.dot_dimension_numbers<[1], [0], [0], [1], [0, 0, 1, 1], [], []>} : vector<32x512xbf16>, vector<512x288xbf16>, vector<32x288xf32> -> vector<32x288xf32>
    %10 = arith.addf %6, %9 : vector<32x288xf32>
    %11 = arith.truncf %10 : vector<32x288xf32> to vector<32x288xbf16>
    %c0_9 = arith.constant 0 : index
    %c0_10 = arith.constant 0 : index
    %12 = vector.load %arg5[%c0_9, %c0_10] : memref<32x32xbf16, #tpu.memory_space<vmem>>, vector<32x32xbf16>
    %cst_11 = arith.constant dense<0.000000e+00> : vector<32x288xf32>
    %13 = tpu.matmul %12, %11, %cst_11 {dimension_numbers = #tpu.dot_dimension_numbers<[1], [0], [0], [1], [0, 0, 1, 1], [], []>} : vector<32x32xbf16>, vector<32x288xbf16>, vector<32x288xf32> -> vector<32x288xf32>
    %14 = arith.truncf %13 : vector<32x288xf32> to vector<32x288xbf16>
    %15 = vector.extract_strided_slice %14 {offsets = [0, 0], sizes = [16, 288], strides = [1, 1]} : vector<32x288xbf16> to vector<16x288xbf16>
    %c0_12 = arith.constant 0 : index
    %c0_13 = arith.constant 0 : index
    %16 = vector.load %arg6[%c0_12, %c0_13] : memref<288x512xbf16, #tpu.memory_space<vmem>>, vector<288x512xbf16>
    %cst_14 = arith.constant dense<0.000000e+00> : vector<16x512xf32>
    %17 = tpu.matmul %15, %16, %cst_14 {dimension_numbers = #tpu.dot_dimension_numbers<[1], [0], [0], [1], [0, 0, 1, 1], [], []>} : vector<16x288xbf16>, vector<288x512xbf16>, vector<16x512xf32> -> vector<16x512xf32>
    %18 = vector.extract_strided_slice %14 {offsets = [16, 0], sizes = [16, 288], strides = [1, 1]} : vector<32x288xbf16> to vector<16x288xbf16>
    %c0_15 = arith.constant 0 : index
    %c0_16 = arith.constant 0 : index
    %19 = vector.load %arg7[%c0_15, %c0_16] : memref<288x512xbf16, #tpu.memory_space<vmem>>, vector<288x512xbf16>
    %cst_17 = arith.constant dense<0.000000e+00> : vector<16x512xf32>
    %20 = tpu.matmul %18, %19, %cst_17 {dimension_numbers = #tpu.dot_dimension_numbers<[1], [0], [0], [1], [0, 0, 1, 1], [], []>} : vector<16x288xbf16>, vector<288x512xbf16>, vector<16x512xf32> -> vector<16x512xf32>
    %21 = arith.addf %17, %20 : vector<16x512xf32>
    %c0_18 = arith.constant 0 : index
    %c0_19 = arith.constant 0 : index
    %22 = vector.load %arg8[%c0_18, %c0_19] : memref<16x512xf32, #tpu.memory_space<vmem>>, vector<16x512xf32>
    %23 = arith.addf %21, %22 : vector<16x512xf32>
    %c0_20 = arith.constant 0 : index
    %c0_21 = arith.constant 0 : index
    %24 = vector.load %arg9[%c0_20, %c0_21] : memref<16x512xf32, #tpu.memory_space<vmem>>, vector<16x512xf32>
    tpu.vector_store %arg9[%c0_20, %c0_21], %23 {strides = array<i32>} : memref<16x512xf32, #tpu.memory_space<vmem>>, vector<16x512xf32>,
    return
  }
  func.func @transform_0(%arg0: i32) -> (i32, i32) {
    %c0_i32 = arith.constant 0 : i32
    %c0_i32_0 = arith.constant 0 : i32
    return %arg0, %c0_i32 : i32, i32
  }
  func.func @transform_1(%arg0: i32) -> (i32, i32) {
    %c0_i32 = arith.constant 0 : i32
    %c0_i32_0 = arith.constant 0 : i32
    %c0_i32_1 = arith.constant 0 : i32
    return %c0_i32, %c0_i32_0 : i32, i32
  }
  func.func @transform_2(%arg0: i32) -> (i32, i32) {
    %c0_i32 = arith.constant 0 : i32
    %c0_i32_0 = arith.constant 0 : i32
    %c0_i32_1 = arith.constant 0 : i32
    return %c0_i32, %c0_i32_0 : i32, i32
  }
  func.func @transform_3(%arg0: i32) -> (i32, i32) {
    %c0_i32 = arith.constant 0 : i32
    %c0_i32_0 = arith.constant 0 : i32
    %c0_i32_1 = arith.constant 0 : i32
    return %c0_i32, %c0_i32_0 : i32, i32
  }
  func.func @transform_4(%arg0: i32) -> (i32, i32) {
    %c0_i32 = arith.constant 0 : i32
    %c0_i32_0 = arith.constant 0 : i32
    %c0_i32_1 = arith.constant 0 : i32
    return %c0_i32, %c0_i32_0 : i32, i32
  }
  func.func @transform_5(%arg0: i32) -> (i32, i32) {
    %c0_i32 = arith.constant 0 : i32
    %c0_i32_0 = arith.constant 0 : i32
    %c0_i32_1 = arith.constant 0 : i32
    return %c0_i32, %c0_i32_0 : i32, i32
  }
  func.func @transform_6(%arg0: i32) -> (i32, i32) {
    %c0_i32 = arith.constant 0 : i32
    %c0_i32_0 = arith.constant 0 : i32
    %c0_i32_1 = arith.constant 0 : i32
    return %c0_i32, %c0_i32_0 : i32, i32
  }
  func.func @transform_7(%arg0: i32) -> (i32, i32) {
    %c0_i32 = arith.constant 0 : i32
    %c0_i32_0 = arith.constant 0 : i32
    %c0_i32_1 = arith.constant 0 : i32
    return %c0_i32, %c0_i32_0 : i32, i32
  }
  func.func @transform_8(%arg0: i32) -> (i32, i32) {
    %c0_i32 = arith.constant 0 : i32
    %c0_i32_0 = arith.constant 0 : i32
    return %arg0, %c0_i32 : i32, i32
  }
}

</mosaic_0001>

<llo_original>
// kernel: tpu_custom_call.1
$region0: #{tpu_custom_call.1}
  #allocation0 [shape = 'u32[]', space=smem, size = 0x4, offset = 0x4, fixed_abs, tag = 'smem constant byte address 0x4 - core index']
  #allocation1 [shape = 'u32[144,128]{1,0:T(1,128)}', space=vmem, size = 0x12000, scoped, tag = 'internal scratch']
  %s0 = inlined_call_operand.vmem [shape: bf16[32,512], index: 0, kind: input, shape index: {}]
  %s1 = inlined_call_operand.vmem [shape: bf16[64,16], index: 1, kind: input, shape index: {}]
  %s2 = inlined_call_operand.vmem [shape: bf16[512,288], index: 2, kind: input, shape index: {}]
  %s3 = inlined_call_operand.vmem [shape: bf16[512,288], index: 3, kind: input, shape index: {}]
  %s4 = inlined_call_operand.vmem [shape: bf16[32,32], index: 4, kind: input, shape index: {}]
  %s5 = inlined_call_operand.vmem [shape: bf16[288,512], index: 5, kind: input, shape index: {}]
  %s6 = inlined_call_operand.vmem [shape: bf16[288,512], index: 6, kind: input, shape index: {}]
  %s7 = inlined_call_operand.vmem [shape: f32[16,512], index: 7, kind: input, shape index: {}]
  %s8 = inlined_call_operand.hbm [shape: f32[32,512], index: 8, kind: output, shape index: {}]
  %s9 = sld [smem:[#allocation0]]
  $region65: #{tpu_custom_call.1} parent=0
    _
  %s11 = ssub.s32 1, %s9
  %s12 = scalar_select 0, %s11, %s9
  $region1: #{tpu_custom_call.1} parent=0
    #allocation2 [shape = 'u8[65536]{0}', space=vmem, size = 0x10000, scoped, tag = 'output window, operand 0']
    #allocation3 [shape = 's32[2]{0}', space=sflag, size = 0x8, scoped, tag = 'scoped memory for tpu_custom_call.1']
    %13 = vsyncpa [#allocation3], 0
    %s14 = scalar_lea.sflag [#allocation3], 1
    %15 = vsyncpa %s14, 0
    loop: start=0, step=1, limit=4
    $region2: #{tpu_custom_call.1} parent=1 // loop_pre_header
      _
    $region3: #{tpu_custom_call.1} parent=1 // loop_header
      %s17 = sphi 0, %s21
      %p18 = scmp.ge.s32.totalorder %s17, 4
      %s27 = sphi 0, %s29
      %s30 = sphi 0, %s27
      %s31 = sphi 0, %s30
      %s47 = sphi 0, %s31
      %s51 = sphi 0, %s51
      %s53 = sphi 0, %s51
      %s54 = sphi 0, %s53
      %s68 = sphi 0, %s54
      %s72 = sphi 0, %s72
      %s74 = sphi 0, %s72
      %s75 = sphi 0, %s74
      %s89 = sphi 0, %s75
      %s93 = sphi 0, %s93
      %s95 = sphi 0, %s93
      %s96 = sphi 0, %s95
      %s110 = sphi 0, %s96
      %s114 = sphi 0, %s114
      %s116 = sphi 0, %s114
      %s117 = sphi 0, %s116
      %s131 = sphi 0, %s117
      %s135 = sphi 0, %s135
      %s137 = sphi 0, %s135
      %s138 = sphi 0, %s137
      %s152 = sphi 0, %s138
      %s156 = sphi 0, %s156
      %s158 = sphi 0, %s156
      %s159 = sphi 0, %s158
      %s173 = sphi 0, %s159
      %s177 = sphi 0, %s177
      %s179 = sphi 0, %s177
      %s180 = sphi 0, %s179
      %s194 = sphi 0, %s180
      %s200 = sphi 0, %s202
      %s203 = sphi 0, %s200
      %s204 = sphi 0, %s203
      %s220 = sphi 0, %s204
    $region4: #{tpu_custom_call.1} parent=1 // loop_header_branch
      %20 = sbr.rel (%p18) target = $region8
    $region5: #{tpu_custom_call.1} parent=1 // loop_body
      %s22 = ssub.s32 %s17, 1
      %s23 = ssub.s32 %s17, 2
      %s24 = sadd.s32 %s17, 1
      %s25 = ssub.s32 %s17, %s24
      %p26 = scmp.eq.s32.totalorder %s25, 0
      %s28 = sadd.s32 %s27, 1
      %s29 = scalar_select %p26, %s27, %s28
      %p32 = pneg %p26
      %p33 = scmp.eq.s32.totalorder %s17, 1
      %p34 = por %p32, %p33
      %p35 = scmp.ne.s32.totalorder %s27, %s30
      %p36 = scmp.eq.s32.totalorder %s17, 0
      %p37 = por %p35, %p36
      %p38 = scmp.ne.s32.totalorder %s27, %s30
      %p39 = scmp.eq.s32.totalorder %s22, 1
      %p40 = por %p38, %p39
      %p41 = scmp.ne.s32.totalorder %s30, %s31
      %p42 = scmp.eq.s32.totalorder %s22, 0
      %p43 = por %p41, %p42
      %p44 = scmp.ne.s32.totalorder %s30, %s31
      %p45 = scmp.eq.s32.totalorder %s23, 1
      %p46 = por %p44, %p45
      %p48 = scmp.ne.s32.totalorder %s31, %s47
      %p49 = scmp.eq.s32.totalorder %s23, 0
      %p50 = por %p48, %p49
      %s52 = sadd.s32 %s51, 1
      %p55 = scmp.eq.s32.totalorder %s17, 1
      %p56 = scmp.ne.s32.totalorder %s51, %s53
      %p57 = scmp.eq.s32.totalorder %s17, 0
      %p58 = por %p56, %p57
      %p59 = scmp.ne.s32.totalorder %s51, %s53
      %p60 = scmp.eq.s32.totalorder %s22, 1
      %p61 = por %p59, %p60
      %p62 = scmp.ne.s32.totalorder %s53, %s54
      %p63 = scmp.eq.s32.totalorder %s22, 0
      %p64 = por %p62, %p63
      %p65 = scmp.ne.s32.totalorder %s53, %s54
      %p66 = scmp.eq.s32.totalorder %s23, 1
      %p67 = por %p65, %p66
      %p69 = scmp.ne.s32.totalorder %s54, %s68
      %p70 = scmp.eq.s32.totalorder %s23, 0
      %p71 = por %p69, %p70
      %s73 = sadd.s32 %s72, 1
      %p76 = scmp.eq.s32.totalorder %s17, 1
      %p77 = scmp.ne.s32.totalorder %s72, %s74
      %p78 = scmp.eq.s32.totalorder %s17, 0
      %p79 = por %p77, %p78
      %p80 = scmp.ne.s32.totalorder %s72, %s74
      %p81 = scmp.eq.s32.totalorder %s22, 1
      %p82 = por %p80, %p81
      %p83 = scmp.ne.s32.totalorder %s74, %s75
      %p84 = scmp.eq.s32.totalorder %s22, 0
      %p85 = por %p83, %p84
      %p86 = scmp.ne.s32.totalorder %s74, %s75
      %p87 = scmp.eq.s32.totalorder %s23, 1
      %p88 = por %p86, %p87
      %p90 = scmp.ne.s32.totalorder %s75, %s89
      %p91 = scmp.eq.s32.totalorder %s23, 0
      %p92 = por %p90, %p91
      %s94 = sadd.s32 %s93, 1
      %p97 = scmp.eq.s32.totalorder %s17, 1
      %p98 = scmp.ne.s32.totalorder %s93, %s95
      %p99 = scmp.eq.s32.totalorder %s17, 0
      %p100 = por %p98, %p99
      %p101 = scmp.ne.s32.totalorder %s93, %s95
      %p102 = scmp.eq.s32.totalorder %s22, 1
      %p103 = por %p101, %p102
      %p104 = scmp.ne.s32.totalorder %s95, %s96
      %p105 = scmp.eq.s32.totalorder %s22, 0
      %p106 = por %p104, %p105
      %p107 = scmp.ne.s32.totalorder %s95, %s96
      %p108 = scmp.eq.s32.totalorder %s23, 1
      %p109 = por %p107, %p108
      %p111 = scmp.ne.s32.totalorder %s96, %s110
      %p112 = scmp.eq.s32.totalorder %s23, 0
      %p113 = por %p111, %p112
      %s115 = sadd.s32 %s114, 1
      %p118 = scmp.eq.s32.totalorder %s17, 1
      %p119 = scmp.ne.s32.totalorder %s114, %s116
      %p120 = scmp.eq.s32.totalorder %s17, 0
      %p121 = por %p119, %p120
      %p122 = scmp.ne.s32.totalorder %s114, %s116
      %p123 = scmp.eq.s32.totalorder %s22, 1
      %p124 = por %p122, %p123
      %p125 = scmp.ne.s32.totalorder %s116, %s117
      %p126 = scmp.eq.s32.totalorder %s22, 0
      %p127 = por %p125, %p126
      %p128 = scmp.ne.s32.totalorder %s116, %s117
      %p129 = scmp.eq.s32.totalorder %s23, 1
      %p130 = por %p128, %p129
      %p132 = scmp.ne.s32.totalorder %s117, %s131
      %p133 = scmp.eq.s32.totalorder %s23, 0
      %p134 = por %p132, %p133
      %s136 = sadd.s32 %s135, 1
      %p139 = scmp.eq.s32.totalorder %s17, 1
      %p140 = scmp.ne.s32.totalorder %s135, %s137
      %p141 = scmp.eq.s32.totalorder %s17, 0
      %p142 = por %p140, %p141
      %p143 = scmp.ne.s32.totalorder %s135, %s137
      %p144 = scmp.eq.s32.totalorder %s22, 1
      %p145 = por %p143, %p144
      %p146 = scmp.ne.s32.totalorder %s137, %s138
      %p147 = scmp.eq.s32.totalorder %s22, 0
      %p148 = por %p146, %p147
      %p149 = scmp.ne.s32.totalorder %s137, %s138
      %p150 = scmp.eq.s32.totalorder %s23, 1
      %p151 = por %p149, %p150
      %p153 = scmp.ne.s32.totalorder %s138, %s152
      %p154 = scmp.eq.s32.totalorder %s23, 0
      %p155 = por %p153, %p154
      %s157 = sadd.s32 %s156, 1
      %p160 = scmp.eq.s32.totalorder %s17, 1
      %p161 = scmp.ne.s32.totalorder %s156, %s158
      %p162 = scmp.eq.s32.totalorder %s17, 0
      %p163 = por %p161, %p162
      %p164 = scmp.ne.s32.totalorder %s156, %s158
      %p165 = scmp.eq.s32.totalorder %s22, 1
      %p166 = por %p164, %p165
      %p167 = scmp.ne.s32.totalorder %s158, %s159
      %p168 = scmp.eq.s32.totalorder %s22, 0
      %p169 = por %p167, %p168
      %p170 = scmp.ne.s32.totalorder %s158, %s159
      %p171 = scmp.eq.s32.totalorder %s23, 1
      %p172 = por %p170, %p171
      %p174 = scmp.ne.s32.totalorder %s159, %s173
      %p175 = scmp.eq.s32.totalorder %s23, 0
      %p176 = por %p174, %p175
      %s178 = sadd.s32 %s177, 1
      %p181 = scmp.eq.s32.totalorder %s17, 1
      %p182 = scmp.ne.s32.totalorder %s177, %s179
      %p183 = scmp.eq.s32.totalorder %s17, 0
      %p184 = por %p182, %p183
      %p185 = scmp.ne.s32.totalorder %s177, %s179
      %p186 = scmp.eq.s32.totalorder %s22, 1
      %p187 = por %p185, %p186
      %p188 = scmp.ne.s32.totalorder %s179, %s180
      %p189 = scmp.eq.s32.totalorder %s22, 0
      %p190 = por %p188, %p189
      %p191 = scmp.ne.s32.totalorder %s179, %s180
      %p192 = scmp.eq.s32.totalorder %s23, 1
      %p193 = por %p191, %p192
      %p195 = scmp.ne.s32.totalorder %s180, %s194
      %p196 = scmp.eq.s32.totalorder %s23, 0
      %p197 = por %p195, %p196
      %s198 = ssub.s32 %s17, %s24
      %p199 = scmp.eq.s32.totalorder %s198, 0
      %s201 = sadd.s32 %s200, 1
      %s202 = scalar_select %p199, %s200, %s201
      %p205 = pneg %p199
      %p206 = scmp.eq.s32.totalorder %s17, 1
      %p207 = por %p205, %p206
      %p208 = scmp.ne.s32.totalorder %s200, %s203
      %p209 = scmp.eq.s32.totalorder %s17, 0
      %p210 = por %p208, %p209
      %p211 = scmp.ne.s32.totalorder %s200, %s203
      %p212 = scmp.eq.s32.totalorder %s22, 1
      %p213 = por %p211, %p212
      %p214 = scmp.ne.s32.totalorder %s203, %s204
      %p215 = scmp.eq.s32.totalorder %s22, 0
      %p216 = por %p214, %p215
      %p217 = scmp.ne.s32.totalorder %s203, %s204
      %p218 = scmp.eq.s32.totalorder %s23, 1
      %p219 = por %p217, %p218
      %p221 = scmp.ne.s32.totalorder %s204, %s220
      %p222 = scmp.eq.s32.totalorder %s23, 0
      %p223 = por %p221, %p222
      %p224 = scmp.le.s32.totalorder 1, %s17
      %p225 = scmp.lt.s32.totalorder %s17, 3
      %p226 = pnand %p224, %p225
      %p227 = pneg %p226
      // Predicated region
      $region9: #{tpu_custom_call.1} parent=5 // pred_check
        _
      $region10: #{tpu_custom_call.1} parent=5 // pred_check_branch
        %229 = sbr.rel (%p226) target = $region12
      $region11: #{tpu_custom_call.1} parent=5 // pred_region
        %s230 = ssub.s32 %s17, 1
        // Predicated region
        $region13: #{tpu_custom_call.1} parent=11 // pred_check
          %p231 = pneg %p64
        $region14: #{tpu_custom_call.1} parent=11 // pred_check_branch
          %233 = sbr.rel (%p231) target = $region16
        $region15: #{tpu_custom_call.1} parent=11 // pred_region
          _
        $region16: #{tpu_custom_call.1} parent=11 // pred_fallthru
          _
        // Predicated region
        $region17: #{tpu_custom_call.1} parent=11 // pred_check
          %p234 = pneg %p85
        $region18: #{tpu_custom_call.1} parent=11 // pred_check_branch
          %236 = sbr.rel (%p234) target = $region20
        $region19: #{tpu_custom_call.1} parent=11 // pred_region
          _
        $region20: #{tpu_custom_call.1} parent=11 // pred_fallthru
          _
        // Predicated region
        $region21: #{tpu_custom_call.1} parent=11 // pred_check
          %p237 = pneg %p106
        $region22: #{tpu_custom_call.1} parent=11 // pred_check_branch
          %239 = sbr.rel (%p237) target = $region24
        $region23: #{tpu_custom_call.1} parent=11 // pred_region
          _
        $region24: #{tpu_custom_call.1} parent=11 // pred_fallthru
          _
        // Predicated region
        $region25: #{tpu_custom_call.1} parent=11 // pred_check
          %p240 = pneg %p127
        $region26: #{tpu_custom_call.1} parent=11 // pred_check_branch
          %242 = sbr.rel (%p240) target = $region28
        $region27: #{tpu_custom_call.1} parent=11 // pred_region
          _
        $region28: #{tpu_custom_call.1} parent=11 // pred_fallthru
          _
        // Predicated region
        $region29: #{tpu_custom_call.1} parent=11 // pred_check
          %p243 = pneg %p148
        $region30: #{tpu_custom_call.1} parent=11 // pred_check_branch
          %245 = sbr.rel (%p243) target = $region32
        $region31: #{tpu_custom_call.1} parent=11 // pred_region
          _
        $region32: #{tpu_custom_call.1} parent=11 // pred_fallthru
          _
        // Predicated region
        $region33: #{tpu_custom_call.1} parent=11 // pred_check
          %p246 = pneg %p169
        $region34: #{tpu_custom_call.1} parent=11 // pred_check_branch
          %248 = sbr.rel (%p246) target = $region36
        $region35: #{tpu_custom_call.1} parent=11 // pred_region
          _
        $region36: #{tpu_custom_call.1} parent=11 // pred_fallthru
          _
        // Predicated region
        $region37: #{tpu_custom_call.1} parent=11 // pred_check
          %p249 = pneg %p190
        $region38: #{tpu_custom_call.1} parent=11 // pred_check_branch
          %251 = sbr.rel (%p249) target = $region40
        $region39: #{tpu_custom_call.1} parent=11 // pred_region
          _
        $region40: #{tpu_custom_call.1} parent=11 // pred_fallthru
          _
      $region12: #{tpu_custom_call.1} parent=5 // pred_fallthru
        _
      %p252 = scmp.lt.s32.totalorder %s17, 2
      // Predicated region
      $region41: #{tpu_custom_call.1} parent=5 // pred_check
        %p253 = pneg %p252
      $region42: #{tpu_custom_call.1} parent=5 // pred_check_branch
        %255 = sbr.rel (%p253) target = $region44
      $region43: #{tpu_custom_call.1} parent=5 // pred_region
        // Predicated region
        $region45: #{tpu_custom_call.1} parent=43 // pred_check
          %p256 = pneg %p37
        $region46: #{tpu_custom_call.1} parent=43 // pred_check_branch
          %258 = sbr.rel (%p256) target = $region48
        $region47: #{tpu_custom_call.1} parent=43 // pred_region
          %s259 = smul.u32 2, %s17
          %p260 = scmp.lt.s32.totalorder %s259, 3
          %s261 = scalar_select %p260, %s259, 3
          %s262 = smul.addr %s261, 4
          %s263 = smul.addr %s262, 4
          %s264 = scalar_lea.vmem %s0, %s263
          %s265 = smul.u32 2, %s17
        $region48: #{tpu_custom_call.1} parent=43 // pred_fallthru
          _
      $region44: #{tpu_custom_call.1} parent=5 // pred_fallthru
        _
      %p266 = scmp.le.s32.totalorder 1, %s17
      %p267 = scmp.lt.s32.totalorder %s17, 3
      %p268 = pnand %p266, %p267
      %p269 = pneg %p268
      // Predicated region
      $region49: #{tpu_custom_call.1} parent=5 // pred_check
        _
      $region50: #{tpu_custom_call.1} parent=5 // pred_check_branch
        %271 = sbr.rel (%p268) target = $region52
      $region51: #{tpu_custom_call.1} parent=5 // pred_region
        %s272 = ssub.s32 %s17, 1
        %s273 = smul.u32 2, %s22
        %p274 = scmp.lt.s32.totalorder %s273, 3
        %s275 = scalar_select %p274, %s273, 3
        %s276 = smul.addr %s275, 4
        %s277 = smul.addr %s276, 4
        %s278 = scalar_lea.vmem %s0, %s277
        %p279 = pneg %p43
        %p280 = pneg %p40
        %p281 = pneg %p64
        %p282 = pneg %p61
        %p283 = pneg %p85
        %p284 = pneg %p82
        %p285 = pneg %p106
        %p286 = pneg %p103
        %p287 = pneg %p127
        %p288 = pneg %p124
        %p289 = pneg %p148
        %p290 = pneg %p145
        %p291 = pneg %p169
        %p292 = pneg %p166
        %p293 = pneg %p190
        %p294 = pneg %p187
        %p295 = pneg %p216
        %p296 = pneg %p213
        %s297 = sand.u32 %s203, 1
        %s298 = scalar_lea.sflag [#allocation3], %s297
        %s299 = sand.u32 %s203, 1
        %s300 = smul.addr %s299, 64
        %s301 = scalar_lea.vmem [#allocation2], %s300
        %s302 = smul.u32 2, %s22
        %p303 = scmp.lt.s32.totalorder %s302, 3
        %s304 = scalar_select %p303, %s302, 3
        %s305 = smul.addr %s304, 4
        %s306 = smul.addr %s305, 4
        %s307 = scalar_lea.vmem %s0, %s306
        %s308 = smul.u32 2, %s22
        %s309 = smul.u32 2, %s22
        %v311 = vld [vmem:[%s307] sm:$0xff]
        %v312 = vld [vmem:[%s307 + $0x8] sm:$0xff]
        %v313 = vld [vmem:[%s307 + $0x10] sm:$0xff]
        %v314 = vld [vmem:[%s307 + $0x18] sm:$0xff]
        %v315 = vld [vmem:[%s1] sm:$0xf]
        %v316 = vld [vmem:[%s1 + $0x4] sm:$0xf]
        %v317 = vld [vmem:[%s1 + $0x8] sm:$0xf]
        %v318 = vld [vmem:[%s1 + $0xc] sm:$0xf]
        %v319 = vld [vmem:[%s1 + $0x10] sm:$0xf]
        %v320 = vld [vmem:[%s1 + $0x14] sm:$0xf]
        %v321 = vld [vmem:[%s1 + $0x18] sm:$0xf]
        %v322 = vld [vmem:[%s1 + $0x1c] sm:$0xf]
        %v331 = vunpack.c.l.b16 %v315
        %v332 = vunpack.c.l.b16 %v316
        %v333 = vunpack.c.l.b16 %v317
        %v334 = vunpack.c.l.b16 %v318
        %v335 = vunpack.c.l.b16 %v319
        %v336 = vunpack.c.l.b16 %v320
        %v337 = vunpack.c.l.b16 %v321
        %v338 = vunpack.c.l.b16 %v322
        %v339 = vpack.c.b16 %v332, %v331
        %v340 = vpack.c.b16 %v334, %v333
        %v341 = vpack.c.b16 %v336, %v335
        %v342 = vpack.c.b16 %v338, %v337
        %v347 = vunpack.c.l.b16 %v311
        %v348 = vunpack.c.h.b16 %v311
        %v349 = vunpack.c.l.b16 %v312
        %v350 = vunpack.c.h.b16 %v312
        %v351 = vunpack.c.l.b16 %v313
        %v352 = vunpack.c.h.b16 %v313
        %v353 = vunpack.c.l.b16 %v314
        %v354 = vunpack.c.h.b16 %v314
        %v355 = vpack.c.b16 %v351, %v347
        %v356 = vpack.c.b16 %v352, %v348
        %v357 = vpack.c.b16 %v353, %v349
        %v358 = vpack.c.b16 %v354, %v350
        %vm363 = vcmask 130048
        %v365 = vsel %vm363, %v339, 0
        %v368 = vsel %vm363, %v340, 0
        %v371 = vsel %vm363, %v341, 0
        %v374 = vsel %vm363, %v342, 0
        %376 = vmatprep.subr.bf16.mxu0 %v356
        %377 = vmatpush1.bf16.msra.mxu0 %v355
        %378 = vmatprep.subr.bf16.mxu0 0
        %379 = vmatpush1.bf16.msra.mxu0 0
        %380 = vmatprep.subr.bf16.mxu0 0
        %381 = vmatpush1.bf16.msra.mxu0 0
        %382 = vmatprep.subr.bf16.mxu0 0
        %383 = vmatpush1.bf16.msra.mxu0 0
        %384 = vmatprep.subr.bf16.mxu0 0
        %385 = vmatpush1.bf16.msra.mxu0 0
        %386 = vmatprep.subr.bf16.mxu0 0
        %387 = vmatpush1.bf16.msra.mxu0 0
        %388 = vmatprep.subr.bf16.mxu0 0
        %389 = vmatpush1.bf16.msra.mxu0 0
        %390 = vmatprep.subr.bf16.mxu0 0
        %391 = vmatpush1.bf16.msra.mxu0 0
        %392 = vmatprep.subr.bf16.mxu0 0
        %393 = vmatpush1.bf16.msra.mxu0 0
        %394 = vmatprep.subr.bf16.mxu0 0
        %395 = vmatpush1.bf16.msra.mxu0 0
        %396 = vmatprep.subr.bf16.mxu0 0
        %397 = vmatpush1.bf16.msra.mxu0 0
        %398 = vmatprep.subr.bf16.mxu0 0
        %399 = vmatpush1.bf16.msra.mxu0 0
        %400 = vmatprep.subr.bf16.mxu0 0
        %401 = vmatpush1.bf16.msra.mxu0 0
        %402 = vmatprep.subr.bf16.mxu0 0
        %403 = vmatpush1.bf16.msra.mxu0 0
        %404 = vmatprep.subr.bf16.mxu0 0
        %405 = vmatpush1.bf16.msra.mxu0 0
        %406 = vmatprep.subr.bf16.mxu0 0
        %407 = vmatpush1.bf16.msra.mxu0 0
        %408 = vmatprep.mubr.bf16.mxu0 0
        %409 = vmatmul.mubr.bf16.gmra.mrb[0].mxu0 %v365
        %v410 = vpop.f32.mrb[0].mxu0
        %v411 = vadd.f32 0.0, %v410
        %v412 = vpop.f32.mrb[0].mxu0
        %v413 = vadd.f32 0.0, %v412
        %v414 = vpop.f32.mrb[0].mxu0
        %v415 = vadd.f32 0.0, %v414
        %v416 = vpop.f32.mrb[0].mxu0
        %v417 = vadd.f32 0.0, %v416
        %418 = vmatprep.mubr.bf16.mxu0 0
        %419 = vmatmul.mubr.bf16.gmra.mrb[0].mxu0 %v368
        %v420 = vpop.f32.mrb[0].mxu0
        %v421 = vadd.f32 0.0, %v420
        %v422 = vpop.f32.mrb[0].mxu0
        %v423 = vadd.f32 0.0, %v422
        %v424 = vpop.f32.mrb[0].mxu0
        %v425 = vadd.f32 0.0, %v424
        %v426 = vpop.f32.mrb[0].mxu0
        %v427 = vadd.f32 0.0, %v426
        %428 = vmatprep.mubr.bf16.mxu0 0
        %429 = vmatmul.mubr.bf16.gmra.mrb[0].mxu0 %v371
        %v430 = vpop.f32.mrb[0].mxu0
        %v431 = vadd.f32 0.0, %v430
        %v432 = vpop.f32.mrb[0].mxu0
        %v433 = vadd.f32 0.0, %v432
        %v434 = vpop.f32.mrb[0].mxu0
        %v435 = vadd.f32 0.0, %v434
        %v436 = vpop.f32.mrb[0].mxu0
        %v437 = vadd.f32 0.0, %v436
        %438 = vmatprep.mubr.bf16.mxu0 0
        %439 = vmatmul.mubr.bf16.gmra.mrb[0].mxu0 %v374
        %v440 = vpop.f32.mrb[0].mxu0
        %v441 = vadd.f32 0.0, %v440
        %v442 = vpop.f32.mrb[0].mxu0
        %v443 = vadd.f32 0.0, %v442
        %v444 = vpop.f32.mrb[0].mxu0
        %v445 = vadd.f32 0.0, %v444
        %v446 = vpop.f32.mrb[0].mxu0
        %v447 = vadd.f32 0.0, %v446
        %448 = vdwg.mxu0
        %449 = vmatprep.subr.bf16.mxu0 %v358
        %450 = vmatpush1.bf16.msra.mxu0 %v357
        %451 = vmatprep.subr.bf16.mxu0 0
        %452 = vmatpush1.bf16.msra.mxu0 0
        %453 = vmatprep.subr.bf16.mxu0 0
        %454 = vmatpush1.bf16.msra.mxu0 0
        %455 = vmatprep.subr.bf16.mxu0 0
        %456 = vmatpush1.bf16.msra.mxu0 0
        %457 = vmatprep.subr.bf16.mxu0 0
        %458 = vmatpush1.bf16.msra.mxu0 0
        %459 = vmatprep.subr.bf16.mxu0 0
        %460 = vmatpush1.bf16.msra.mxu0 0
        %461 = vmatprep.subr.bf16.mxu0 0
        %462 = vmatpush1.bf16.msra.mxu0 0
        %463 = vmatprep.subr.bf16.mxu0 0
        %464 = vmatpush1.bf16.msra.mxu0 0
        %465 = vmatprep.subr.bf16.mxu0 0
        %466 = vmatpush1.bf16.msra.mxu0 0
        %467 = vmatprep.subr.bf16.mxu0 0
        %468 = vmatpush1.bf16.msra.mxu0 0
        %469 = vmatprep.subr.bf16.mxu0 0
        %470 = vmatpush1.bf16.msra.mxu0 0
        %471 = vmatprep.subr.bf16.mxu0 0
        %472 = vmatpush1.bf16.msra.mxu0 0
        %473 = vmatprep.subr.bf16.mxu0 0
        %474 = vmatpush1.bf16.msra.mxu0 0
        %475 = vmatprep.subr.bf16.mxu0 0
        %476 = vmatpush1.bf16.msra.mxu0 0
        %477 = vmatprep.subr.bf16.mxu0 0
        %478 = vmatpush1.bf16.msra.mxu0 0
        %479 = vmatprep.subr.bf16.mxu0 0
        %480 = vmatpush1.bf16.msra.mxu0 0
        %481 = vmatprep.mubr.bf16.mxu0 0
        %482 = vmatmul.mubr.bf16.gmra.mrb[0].mxu0 %v365
        %v483 = vpop.f32.mrb[0].mxu0
        %v484 = vadd.f32 0.0, %v483
        %v485 = vpop.f32.mrb[0].mxu0
        %v486 = vadd.f32 0.0, %v485
        %v487 = vpop.f32.mrb[0].mxu0
        %v488 = vadd.f32 0.0, %v487
        %v489 = vpop.f32.mrb[0].mxu0
        %v490 = vadd.f32 0.0, %v489
        %491 = vmatprep.mubr.bf16.mxu0 0
        %492 = vmatmul.mubr.bf16.gmra.mrb[0].mxu0 %v368
        %v493 = vpop.f32.mrb[0].mxu0
        %v494 = vadd.f32 0.0, %v493
        %v495 = vpop.f32.mrb[0].mxu0
        %v496 = vadd.f32 0.0, %v495
        %v497 = vpop.f32.mrb[0].mxu0
        %v498 = vadd.f32 0.0, %v497
        %v499 = vpop.f32.mrb[0].mxu0
        %v500 = vadd.f32 0.0, %v499
        %501 = vmatprep.mubr.bf16.mxu0 0
        %502 = vmatmul.mubr.bf16.gmra.mrb[0].mxu0 %v371
        %v503 = vpop.f32.mrb[0].mxu0
        %v504 = vadd.f32 0.0, %v503
        %v505 = vpop.f32.mrb[0].mxu0
        %v506 = vadd.f32 0.0, %v505
        %v507 = vpop.f32.mrb[0].mxu0
        %v508 = vadd.f32 0.0, %v507
        %v509 = vpop.f32.mrb[0].mxu0
        %v510 = vadd.f32 0.0, %v509
        %511 = vmatprep.mubr.bf16.mxu0 0
        %512 = vmatmul.mubr.bf16.gmra.mrb[0].mxu0 %v374
        %v513 = vpop.f32.mrb[0].mxu0
        %v514 = vadd.f32 0.0, %v513
        %v515 = vpop.f32.mrb[0].mxu0
        %v516 = vadd.f32 0.0, %v515
        %v517 = vpop.f32.mrb[0].mxu0
        %v518 = vadd.f32 0.0, %v517
        %v519 = vpop.f32.mrb[0].mxu0
        %v520 = vadd.f32 0.0, %v519
        %521 = vdwg.mxu0
        %v522 = vpack.c.bf16 %v415, %v411
        %v523 = vpack.c.bf16 %v417, %v413
        %v524 = vpack.c.bf16 %v488, %v484
        %v525 = vpack.c.bf16 %v490, %v486
        %v526 = vpack.c.bf16 %v425, %v421
        %v527 = vpack.c.bf16 %v427, %v423
        %v528 = vpack.c.bf16 %v498, %v494
        %v529 = vpack.c.bf16 %v500, %v496
        %v530 = vpack.c.bf16 %v435, %v431
        %v531 = vpack.c.bf16 %v437, %v433
        %v532 = vpack.c.bf16 %v508, %v504
        %v533 = vpack.c.bf16 %v510, %v506
        %v534 = vpack.c.bf16 %v445, %v441
        %v535 = vpack.c.bf16 %v447, %v443
        %v536 = vpack.c.bf16 %v518, %v514
        %v537 = vpack.c.bf16 %v520, %v516
        %v538 = vld [vmem:[%s2] sm:$0xff]
        %v539 = vld [vmem:[%s2 + $0x8] sm:$0xf]
        %v540 = vld [vmem:[%s2 + $0xc] sm:$0xff]
        %v541 = vld [vmem:[%s2 + $0x14] sm:$0xf]
        %v542 = vld [vmem:[%s2 + $0x18] sm:$0xff]
        %v543 = vld [vmem:[%s2 + $0x20] sm:$0xf]
        %v544 = vld [vmem:[%s2 + $0x24] sm:$0xff]
        %v545 = vld [vmem:[%s2 + $0x2c] sm:$0xf]
        %v546 = vld [vmem:[%s2 + $0x30] sm:$0xff]
        %v547 = vld [vmem:[%s2 + $0x38] sm:$0xf]
        %v548 = vld [vmem:[%s2 + $0x3c] sm:$0xff]
        %v549 = vld [vmem:[%s2 + $0x44] sm:$0xf]
        %v550 = vld [vmem:[%s2 + $0x48] sm:$0xff]
        %v551 = vld [vmem:[%s2 + $0x50] sm:$0xf]
        %v552 = vld [vmem:[%s2 + $0x54] sm:$0xff]
        %v553 = vld [vmem:[%s2 + $0x5c] sm:$0xf]
        %v554 = vld [vmem:[%s2 + $0x60] sm:$0xff]
        %v555 = vld [vmem:[%s2 + $0x68] sm:$0xf]
        %v556 = vld [vmem:[%s2 + $0x6c] sm:$0xff]
        %v557 = vld [vmem:[%s2 + $0x74] sm:$0xf]
        %v558 = vld [vmem:[%s2 + $0x78] sm:$0xff]
        %v559 = vld [vmem:[%s2 + $0x80] sm:$0xf]
        %v560 = vld [vmem:[%s2 + $0x84] sm:$0xff]
        %v561 = vld [vmem:[%s2 + $0x8c] sm:$0xf]
        %v562 = vld [vmem:[%s2 + $0x90] sm:$0xff]
        %v563 = vld [vmem:[%s2 + $0x98] sm:$0xf]
        %v564 = vld [vmem:[%s2 + $0x9c] sm:$0xff]
        %v565 = vld [vmem:[%s2 + $0xa4] sm:$0xf]
        %v566 = vld [vmem:[%s2 + $0xa8] sm:$0xff]
        %v567 = vld [vmem:[%s2 + $0xb0] sm:$0xf]
        %v568 = vld [vmem:[%s2 + $0xb4] sm:$0xff]
        %v569 = vld [vmem:[%s2 + $0xbc] sm:$0xf]
        %v570 = vld [vmem:[%s2 + $0xc0] sm:$0xff]
        %v571 = vld [vmem:[%s2 + $0xc8] sm:$0xf]
        %v572 = vld [vmem:[%s2 + $0xcc] sm:$0xff]
        %v573 = vld [vmem:[%s2 + $0xd4] sm:$0xf]
        %v574 = vld [vmem:[%s2 + $0xd8] sm:$0xff]
        %v575 = vld [vmem:[%s2 + $0xe0] sm:$0xf]
        %v576 = vld [vmem:[%s2 + $0xe4] sm:$0xff]
        %v577 = vld [vmem:[%s2 + $0xec] sm:$0xf]
        %v578 = vld [vmem:[%s2 + $0xf0] sm:$0xff]
        %v579 = vld [vmem:[%s2 + $0xf8] sm:$0xf]
        %v580 = vld [vmem:[%s2 + $0xfc] sm:$0xff]
        %v581 = vld [vmem:[%s2 + $0x104] sm:$0xf]
        %v582 = vld [vmem:[%s2 + $0x108] sm:$0xff]
        %v583 = vld [vmem:[%s2 + $0x110] sm:$0xf]
        %v584 = vld [vmem:[%s2 + $0x114] sm:$0xff]
        %v585 = vld [vmem:[%s2 + $0x11c] sm:$0xf]
        %v586 = vld [vmem:[%s2 + $0x120] sm:$0xff]
        %v587 = vld [vmem:[%s2 + $0x128] sm:$0xf]
        %v588 = vld [vmem:[%s2 + $0x12c] sm:$0xff]
        %v589 = vld [vmem:[%s2 + $0x134] sm:$0xf]
        %v590 = vld [vmem:[%s2 + $0x138] sm:$0xff]
        %v591 = vld [vmem:[%s2 + $0x140] sm:$0xf]
        %v592 = vld [vmem:[%s2 + $0x144] sm:$0xff]
        %v593 = vld [vmem:[%s2 + $0x14c] sm:$0xf]
        %v594 = vld [vmem:[%s2 + $0x150] sm:$0xff]
        %v595 = vld [vmem:[%s2 + $0x158] sm:$0xf]
        %v596 = vld [vmem:[%s2 + $0x15c] sm:$0xff]
        %v597 = vld [vmem:[%s2 + $0x164] sm:$0xf]
        %v598 = vld [vmem:[%s2 + $0x168] sm:$0xff]
        %v599 = vld [vmem:[%s2 + $0x170] sm:$0xf]
        %v600 = vld [vmem:[%s2 + $0x174] sm:$0xff]
        %v601 = vld [vmem:[%s2 + $0x17c] sm:$0xf]
        %v602 = vld [vmem:[%s2 + $0x180] sm:$0xff]
        %v603 = vld [vmem:[%s2 + $0x188] sm:$0xf]
        %v604 = vld [vmem:[%s2 + $0x18c] sm:$0xff]
        %v605 = vld [vmem:[%s2 + $0x194] sm:$0xf]
        %v606 = vld [vmem:[%s2 + $0x198] sm:$0xff]
        %v607 = vld [vmem:[%s2 + $0x1a0] sm:$0xf]
        %v608 = vld [vmem:[%s2 + $0x1a4] sm:$0xff]
        %v609 = vld [vmem:[%s2 + $0x1ac] sm:$0xf]
        %v610 = vld [vmem:[%s2 + $0x1b0] sm:$0xff]
        %v611 = vld [vmem:[%s2 + $0x1b8] sm:$0xf]
        %v612 = vld [vmem:[%s2 + $0x1bc] sm:$0xff]
        %v613 = vld [vmem:[%s2 + $0x1c4] sm:$0xf]
        %v614 = vld [vmem:[%s2 + $0x1c8] sm:$0xff]
        %v615 = vld [vmem:[%s2 + $0x1d0] sm:$0xf]
        %v616 = vld [vmem:[%s2 + $0x1d4] sm:$0xff]
        %v617 = vld [vmem:[%s2 + $0x1dc] sm:$0xf]
        %v618 = vld [vmem:[%s2 + $0x1e0] sm:$0xff]
        %v619 = vld [vmem:[%s2 + $0x1e8] sm:$0xf]
        %v620 = vld [vmem:[%s2 + $0x1ec] sm:$0xff]
        %v621 = vld [vmem:[%s2 + $0x1f4] sm:$0xf]
        %v622 = vld [vmem:[%s2 + $0x1f8] sm:$0xff]
        %v623 = vld [vmem:[%s2 + $0x200] sm:$0xf]
        %v624 = vld [vmem:[%s2 + $0x204] sm:$0xff]
        %v625 = vld [vmem:[%s2 + $0x20c] sm:$0xf]
        %v626 = vld [vmem:[%s2 + $0x210] sm:$0xff]
        %v627 = vld [vmem:[%s2 + $0x218] sm:$0xf]
        %v628 = vld [vmem:[%s2 + $0x21c] sm:$0xff]
        %v629 = vld [vmem:[%s2 + $0x224] sm:$0xf]
        %v630 = vld [vmem:[%s2 + $0x228] sm:$0xff]
        %v631 = vld [vmem:[%s2 + $0x230] sm:$0xf]
        %v632 = vld [vmem:[%s2 + $0x234] sm:$0xff]
        %v633 = vld [vmem:[%s2 + $0x23c] sm:$0xf]
        %v634 = vld [vmem:[%s2 + $0x240] sm:$0xff]
        %v635 = vld [vmem:[%s2 + $0x248] sm:$0xf]
        %v636 = vld [vmem:[%s2 + $0x24c] sm:$0xff]
        %v637 = vld [vmem:[%s2 + $0x254] sm:$0xf]
        %v638 = vld [vmem:[%s2 + $0x258] sm:$0xff]
        %v639 = vld [vmem:[%s2 + $0x260] sm:$0xf]
        %v640 = vld [vmem:[%s2 + $0x264] sm:$0xff]
        %v641 = vld [vmem:[%s2 + $0x26c] sm:$0xf]
        %v642 = vld [vmem:[%s2 + $0x270] sm:$0xff]
        %v643 = vld [vmem:[%s2 + $0x278] sm:$0xf]
        %v644 = vld [vmem:[%s2 + $0x27c] sm:$0xff]
        %v645 = vld [vmem:[%s2 + $0x284] sm:$0xf]
        %v646 = vld [vmem:[%s2 + $0x288] sm:$0xff]
        %v647 = vld [vmem:[%s2 + $0x290] sm:$0xf]
        %v648 = vld [vmem:[%s2 + $0x294] sm:$0xff]
        %v649 = vld [vmem:[%s2 + $0x29c] sm:$0xf]
        %v650 = vld [vmem:[%s2 + $0x2a0] sm:$0xff]
        %v651 = vld [vmem:[%s2 + $0x2a8] sm:$0xf]
        %v652 = vld [vmem:[%s2 + $0x2ac] sm:$0xff]
        %v653 = vld [vmem:[%s2 + $0x2b4] sm:$0xf]
        %v654 = vld [vmem:[%s2 + $0x2b8] sm:$0xff]
        %v655 = vld [vmem:[%s2 + $0x2c0] sm:$0xf]
        %v656 = vld [vmem:[%s2 + $0x2c4] sm:$0xff]
        %v657 = vld [vmem:[%s2 + $0x2cc] sm:$0xf]
        %v658 = vld [vmem:[%s2 + $0x2d0] sm:$0xff]
        %v659 = vld [vmem:[%s2 + $0x2d8] sm:$0xf]
        %v660 = vld [vmem:[%s2 + $0x2dc] sm:$0xff]
        %v661 = vld [vmem:[%s2 + $0x2e4] sm:$0xf]
        %v662 = vld [vmem:[%s2 + $0x2e8] sm:$0xff]
        %v663 = vld [vmem:[%s2 + $0x2f0] sm:$0xf]
        %v664 = vld [vmem:[%s2 + $0x2f4] sm:$0xff]
        %v665 = vld [vmem:[%s2 + $0x2fc] sm:$0xf]
        %v666 = vld [vmem:[%s3] sm:$0xff]
        %v667 = vld [vmem:[%s3 + $0x8] sm:$0xf]
        %v668 = vld [vmem:[%s3 + $0xc] sm:$0xff]
        %v669 = vld [vmem:[%s3 + $0x14] sm:$0xf]
        %v670 = vld [vmem:[%s3 + $0x18] sm:$0xff]
        %v671 = vld [vmem:[%s3 + $0x20] sm:$0xf]
        %v672 = vld [vmem:[%s3 + $0x24] sm:$0xff]
        %v673 = vld [vmem:[%s3 + $0x2c] sm:$0xf]
        %v674 = vld [vmem:[%s3 + $0x30] sm:$0xff]
        %v675 = vld [vmem:[%s3 + $0x38] sm:$0xf]
        %v676 = vld [vmem:[%s3 + $0x3c] sm:$0xff]
        %v677 = vld [vmem:[%s3 + $0x44] sm:$0xf]
        %v678 = vld [vmem:[%s3 + $0x48] sm:$0xff]
        %v679 = vld [vmem:[%s3 + $0x50] sm:$0xf]
        %v680 = vld [vmem:[%s3 + $0x54] sm:$0xff]
        %v681 = vld [vmem:[%s3 + $0x5c] sm:$0xf]
        %v682 = vld [vmem:[%s3 + $0x60] sm:$0xff]
        %v683 = vld [vmem:[%s3 + $0x68] sm:$0xf]
        %v684 = vld [vmem:[%s3 + $0x6c] sm:$0xff]
        %v685 = vld [vmem:[%s3 + $0x74] sm:$0xf]
        %v686 = vld [vmem:[%s3 + $0x78] sm:$0xff]
        %v687 = vld [vmem:[%s3 + $0x80] sm:$0xf]
        %v688 = vld [vmem:[%s3 + $0x84] sm:$0xff]
        %v689 = vld [vmem:[%s3 + $0x8c] sm:$0xf]
        %v690 = vld [vmem:[%s3 + $0x90] sm:$0xff]
        %v691 = vld [vmem:[%s3 + $0x98] sm:$0xf]
        %v692 = vld [vmem:[%s3 + $0x9c] sm:$0xff]
        %v693 = vld [vmem:[%s3 + $0xa4] sm:$0xf]
        %v694 = vld [vmem:[%s3 + $0xa8] sm:$0xff]
        %v695 = vld [vmem:[%s3 + $0xb0] sm:$0xf]
        %v696 = vld [vmem:[%s3 + $0xb4] sm:$0xff]
        %v697 = vld [vmem:[%s3 + $0xbc] sm:$0xf]
        %v698 = vld [vmem:[%s3 + $0xc0] sm:$0xff]
        %v699 = vld [vmem:[%s3 + $0xc8] sm:$0xf]
        %v700 = vld [vmem:[%s3 + $0xcc] sm:$0xff]
        %v701 = vld [vmem:[%s3 + $0xd4] sm:$0xf]
        %v702 = vld [vmem:[%s3 + $0xd8] sm:$0xff]
        %v703 = vld [vmem:[%s3 + $0xe0] sm:$0xf]
        %v704 = vld [vmem:[%s3 + $0xe4] sm:$0xff]
        %v705 = vld [vmem:[%s3 + $0xec] sm:$0xf]
        %v706 = vld [vmem:[%s3 + $0xf0] sm:$0xff]
        %v707 = vld [vmem:[%s3 + $0xf8] sm:$0xf]
        %v708 = vld [vmem:[%s3 + $0xfc] sm:$0xff]
        %v709 = vld [vmem:[%s3 + $0x104] sm:$0xf]
        %v710 = vld [vmem:[%s3 + $0x108] sm:$0xff]
        %v711 = vld [vmem:[%s3 + $0x110] sm:$0xf]
        %v712 = vld [vmem:[%s3 + $0x114] sm:$0xff]
        %v713 = vld [vmem:[%s3 + $0x11c] sm:$0xf]
        %v714 = vld [vmem:[%s3 + $0x120] sm:$0xff]
        %v715 = vld [vmem:[%s3 + $0x128] sm:$0xf]
        %v716 = vld [vmem:[%s3 + $0x12c] sm:$0xff]
        %v717 = vld [vmem:[%s3 + $0x134] sm:$0xf]
        %v718 = vld [vmem:[%s3 + $0x138] sm:$0xff]
        %v719 = vld [vmem:[%s3 + $0x140] sm:$0xf]
        %v720 = vld [vmem:[%s3 + $0x144] sm:$0xff]
        %v721 = vld [vmem:[%s3 + $0x14c] sm:$0xf]
        %v722 = vld [vmem:[%s3 + $0x150] sm:$0xff]
        %v723 = vld [vmem:[%s3 + $0x158] sm:$0xf]
        %v724 = vld [vmem:[%s3 + $0x15c] sm:$0xff]
        %v725 = vld [vmem:[%s3 + $0x164] sm:$0xf]
        %v726 = vld [vmem:[%s3 + $0x168] sm:$0xff]
        %v727 = vld [vmem:[%s3 + $0x170] sm:$0xf]
        %v728 = vld [vmem:[%s3 + $0x174] sm:$0xff]
        %v729 = vld [vmem:[%s3 + $0x17c] sm:$0xf]
        %v730 = vld [vmem:[%s3 + $0x180] sm:$0xff]
        %v731 = vld [vmem:[%s3 + $0x188] sm:$0xf]
        %v732 = vld [vmem:[%s3 + $0x18c] sm:$0xff]
        %v733 = vld [vmem:[%s3 + $0x194] sm:$0xf]
        %v734 = vld [vmem:[%s3 + $0x198] sm:$0xff]
        %v735 = vld [vmem:[%s3 + $0x1a0] sm:$0xf]
        %v736 = vld [vmem:[%s3 + $0x1a4] sm:$0xff]
        %v737 = vld [vmem:[%s3 + $0x1ac] sm:$0xf]
        %v738 = vld [vmem:[%s3 + $0x1b0] sm:$0xff]
        %v739 = vld [vmem:[%s3 + $0x1b8] sm:$0xf]
        %v740 = vld [vmem:[%s3 + $0x1bc] sm:$0xff]
        %v741 = vld [vmem:[%s3 + $0x1c4] sm:$0xf]
        %v742 = vld [vmem:[%s3 + $0x1c8] sm:$0xff]
        %v743 = vld [vmem:[%s3 + $0x1d0] sm:$0xf]
        %v744 = vld [vmem:[%s3 + $0x1d4] sm:$0xff]
        %v745 = vld [vmem:[%s3 + $0x1dc] sm:$0xf]
        %v746 = vld [vmem:[%s3 + $0x1e0] sm:$0xff]
        %v747 = vld [vmem:[%s3 + $0x1e8] sm:$0xf]
        %v748 = vld [vmem:[%s3 + $0x1ec] sm:$0xff]
        %v749 = vld [vmem:[%s3 + $0x1f4] sm:$0xf]
        %v750 = vld [vmem:[%s3 + $0x1f8] sm:$0xff]
        %v751 = vld [vmem:[%s3 + $0x200] sm:$0xf]
        %v752 = vld [vmem:[%s3 + $0x204] sm:$0xff]
        %v753 = vld [vmem:[%s3 + $0x20c] sm:$0xf]
        %v754 = vld [vmem:[%s3 + $0x210] sm:$0xff]
        %v755 = vld [vmem:[%s3 + $0x218] sm:$0xf]
        %v756 = vld [vmem:[%s3 + $0x21c] sm:$0xff]
        %v757 = vld [vmem:[%s3 + $0x224] sm:$0xf]
        %v758 = vld [vmem:[%s3 + $0x228] sm:$0xff]
        %v759 = vld [vmem:[%s3 + $0x230] sm:$0xf]
        %v760 = vld [vmem:[%s3 + $0x234] sm:$0xff]
        %v761 = vld [vmem:[%s3 + $0x23c] sm:$0xf]
        %v762 = vld [vmem:[%s3 + $0x240] sm:$0xff]
        %v763 = vld [vmem:[%s3 + $0x248] sm:$0xf]
        %v764 = vld [vmem:[%s3 + $0x24c] sm:$0xff]
        %v765 = vld [vmem:[%s3 + $0x254] sm:$0xf]
        %v766 = vld [vmem:[%s3 + $0x258] sm:$0xff]
        %v767 = vld [vmem:[%s3 + $0x260] sm:$0xf]
        %v768 = vld [vmem:[%s3 + $0x264] sm:$0xff]
        %v769 = vld [vmem:[%s3 + $0x26c] sm:$0xf]
        %v770 = vld [vmem:[%s3 + $0x270] sm:$0xff]
        %v771 = vld [vmem:[%s3 + $0x278] sm:$0xf]
        %v772 = vld [vmem:[%s3 + $0x27c] sm:$0xff]
        %v773 = vld [vmem:[%s3 + $0x284] sm:$0xf]
        %v774 = vld [vmem:[%s3 + $0x288] sm:$0xff]
        %v775 = vld [vmem:[%s3 + $0x290] sm:$0xf]
        %v776 = vld [vmem:[%s3 + $0x294] sm:$0xff]
        %v777 = vld [vmem:[%s3 + $0x29c] sm:$0xf]
        %v778 = vld [vmem:[%s3 + $0x2a0] sm:$0xff]
        %v779 = vld [vmem:[%s3 + $0x2a8] sm:$0xf]
        %v780 = vld [vmem:[%s3 + $0x2ac] sm:$0xff]
        %v781 = vld [vmem:[%s3 + $0x2b4] sm:$0xf]
        %v782 = vld [vmem:[%s3 + $0x2b8] sm:$0xff]
        %v783 = vld [vmem:[%s3 + $0x2c0] sm:$0xf]
        %v784 = vld [vmem:[%s3 + $0x2c4] sm:$0xff]
        %v785 = vld [vmem:[%s3 + $0x2cc] sm:$0xf]
        %v786 = vld [vmem:[%s3 + $0x2d0] sm:$0xff]
        %v787 = vld [vmem:[%s3 + $0x2d8] sm:$0xf]
        %v788 = vld [vmem:[%s3 + $0x2dc] sm:$0xff]
        %v789 = vld [vmem:[%s3 + $0x2e4] sm:$0xf]
        %v790 = vld [vmem:[%s3 + $0x2e8] sm:$0xff]
        %v791 = vld [vmem:[%s3 + $0x2f0] sm:$0xf]
        %v792 = vld [vmem:[%s3 + $0x2f4] sm:$0xff]
        %v793 = vld [vmem:[%s3 + $0x2fc] sm:$0xf]
        %v922 = vunpack.c.l.b16 %v666
        %v923 = vunpack.c.h.b16 %v666
        %v924 = vunpack.c.l.b16 %v667
        %v925 = vunpack.c.l.b16 %v668
        %v926 = vunpack.c.h.b16 %v668
        %v927 = vunpack.c.l.b16 %v669
        %v928 = vunpack.c.l.b16 %v670
        %v929 = vunpack.c.h.b16 %v670
        %v930 = vunpack.c.l.b16 %v671
        %v931 = vunpack.c.l.b16 %v672
        %v932 = vunpack.c.h.b16 %v672
        %v933 = vunpack.c.l.b16 %v673
        %v934 = vunpack.c.l.b16 %v674
        %v935 = vunpack.c.h.b16 %v674
        %v936 = vunpack.c.l.b16 %v675
        %v937 = vunpack.c.l.b16 %v676
        %v938 = vunpack.c.h.b16 %v676
        %v939 = vunpack.c.l.b16 %v677
        %v940 = vunpack.c.l.b16 %v678
        %v941 = vunpack.c.h.b16 %v678
        %v942 = vunpack.c.l.b16 %v679
        %v943 = vunpack.c.l.b16 %v680
        %v944 = vunpack.c.h.b16 %v680
        %v945 = vunpack.c.l.b16 %v681
        %v946 = vunpack.c.l.b16 %v682
        %v947 = vunpack.c.h.b16 %v682
        %v948 = vunpack.c.l.b16 %v683
        %v949 = vunpack.c.l.b16 %v684
        %v950 = vunpack.c.h.b16 %v684
        %v951 = vunpack.c.l.b16 %v685
        %v952 = vunpack.c.l.b16 %v686
        %v953 = vunpack.c.h.b16 %v686
        %v954 = vunpack.c.l.b16 %v687
        %v955 = vunpack.c.l.b16 %v688
        %v956 = vunpack.c.h.b16 %v688
        %v957 = vunpack.c.l.b16 %v689
        %v958 = vunpack.c.l.b16 %v690
        %v959 = vunpack.c.h.b16 %v690
        %v960 = vunpack.c.l.b16 %v691
        %v961 = vunpack.c.l.b16 %v692
        %v962 = vunpack.c.h.b16 %v692
        %v963 = vunpack.c.l.b16 %v693
        %v964 = vunpack.c.l.b16 %v694
        %v965 = vunpack.c.h.b16 %v694
        %v966 = vunpack.c.l.b16 %v695
        %v967 = vunpack.c.l.b16 %v696
        %v968 = vunpack.c.h.b16 %v696
        %v969 = vunpack.c.l.b16 %v697
        %v970 = vunpack.c.l.b16 %v698
        %v971 = vunpack.c.h.b16 %v698
        %v972 = vunpack.c.l.b16 %v699
        %v973 = vunpack.c.l.b16 %v700
        %v974 = vunpack.c.h.b16 %v700
        %v975 = vunpack.c.l.b16 %v701
        %v976 = vunpack.c.l.b16 %v702
        %v977 = vunpack.c.h.b16 %v702
        %v978 = vunpack.c.l.b16 %v703
        %v979 = vunpack.c.l.b16 %v704
        %v980 = vunpack.c.h.b16 %v704
        %v981 = vunpack.c.l.b16 %v705
        %v982 = vunpack.c.l.b16 %v706
        %v983 = vunpack.c.h.b16 %v706
        %v984 = vunpack.c.l.b16 %v707
        %v985 = vunpack.c.l.b16 %v708
        %v986 = vunpack.c.h.b16 %v708
        %v987 = vunpack.c.l.b16 %v709
        %v988 = vunpack.c.l.b16 %v710
        %v989 = vunpack.c.h.b16 %v710
        %v990 = vunpack.c.l.b16 %v711
        %v991 = vunpack.c.l.b16 %v712
        %v992 = vunpack.c.h.b16 %v712
        %v993 = vunpack.c.l.b16 %v713
        %v994 = vunpack.c.l.b16 %v714
        %v995 = vunpack.c.h.b16 %v714
        %v996 = vunpack.c.l.b16 %v715
        %v997 = vunpack.c.l.b16 %v716
        %v998 = vunpack.c.h.b16 %v716
        %v999 = vunpack.c.l.b16 %v717
        %v1000 = vunpack.c.l.b16 %v718
        %v1001 = vunpack.c.h.b16 %v718
        %v1002 = vunpack.c.l.b16 %v719
        %v1003 = vunpack.c.l.b16 %v720
        %v1004 = vunpack.c.h.b16 %v720
        %v1005 = vunpack.c.l.b16 %v721
        %v1006 = vunpack.c.l.b16 %v722
        %v1007 = vunpack.c.h.b16 %v722
        %v1008 = vunpack.c.l.b16 %v723
        %v1009 = vunpack.c.l.b16 %v724
        %v1010 = vunpack.c.h.b16 %v724
        %v1011 = vunpack.c.l.b16 %v725
        %v1012 = vunpack.c.l.b16 %v726
        %v1013 = vunpack.c.h.b16 %v726
        %v1014 = vunpack.c.l.b16 %v727
        %v1015 = vunpack.c.l.b16 %v728
        %v1016 = vunpack.c.h.b16 %v728
        %v1017 = vunpack.c.l.b16 %v729
        %v1018 = vunpack.c.l.b16 %v730
        %v1019 = vunpack.c.h.b16 %v730
        %v1020 = vunpack.c.l.b16 %v731
        %v1021 = vunpack.c.l.b16 %v732
        %v1022 = vunpack.c.h.b16 %v732
        %v1023 = vunpack.c.l.b16 %v733
        %v1024 = vunpack.c.l.b16 %v734
        %v1025 = vunpack.c.h.b16 %v734
        %v1026 = vunpack.c.l.b16 %v735
        %v1027 = vunpack.c.l.b16 %v736
        %v1028 = vunpack.c.h.b16 %v736
        %v1029 = vunpack.c.l.b16 %v737
        %v1030 = vunpack.c.l.b16 %v738
        %v1031 = vunpack.c.h.b16 %v738
        %v1032 = vunpack.c.l.b16 %v739
        %v1033 = vunpack.c.l.b16 %v740
        %v1034 = vunpack.c.h.b16 %v740
        %v1035 = vunpack.c.l.b16 %v741
        %v1036 = vunpack.c.l.b16 %v742
        %v1037 = vunpack.c.h.b16 %v742
        %v1038 = vunpack.c.l.b16 %v743
        %v1039 = vunpack.c.l.b16 %v744
        %v1040 = vunpack.c.h.b16 %v744
        %v1041 = vunpack.c.l.b16 %v745
        %v1042 = vunpack.c.l.b16 %v746
        %v1043 = vunpack.c.h.b16 %v746
        %v1044 = vunpack.c.l.b16 %v747
        %v1045 = vunpack.c.l.b16 %v748
        %v1046 = vunpack.c.h.b16 %v748
        %v1047 = vunpack.c.l.b16 %v749
        %v1048 = vunpack.c.l.b16 %v750
        %v1049 = vunpack.c.h.b16 %v750
        %v1050 = vunpack.c.l.b16 %v751
        %v1051 = vunpack.c.l.b16 %v752
        %v1052 = vunpack.c.h.b16 %v752
        %v1053 = vunpack.c.l.b16 %v753
        %v1054 = vunpack.c.l.b16 %v754
        %v1055 = vunpack.c.h.b16 %v754
        %v1056 = vunpack.c.l.b16 %v755
        %v1057 = vunpack.c.l.b16 %v756
        %v1058 = vunpack.c.h.b16 %v756
        %v1059 = vunpack.c.l.b16 %v757
        %v1060 = vunpack.c.l.b16 %v758
        %v1061 = vunpack.c.h.b16 %v758
        %v1062 = vunpack.c.l.b16 %v759
        %v1063 = vunpack.c.l.b16 %v760
        %v1064 = vunpack.c.h.b16 %v760
        %v1065 = vunpack.c.l.b16 %v761
        %v1066 = vunpack.c.l.b16 %v762
        %v1067 = vunpack.c.h.b16 %v762
        %v1068 = vunpack.c.l.b16 %v763
        %v1069 = vunpack.c.l.b16 %v764
        %v1070 = vunpack.c.h.b16 %v764
        %v1071 = vunpack.c.l.b16 %v765
        %v1072 = vunpack.c.l.b16 %v766
        %v1073 = vunpack.c.h.b16 %v766
        %v1074 = vunpack.c.l.b16 %v767
        %v1075 = vunpack.c.l.b16 %v768
        %v1076 = vunpack.c.h.b16 %v768
        %v1077 = vunpack.c.l.b16 %v769
        %v1078 = vunpack.c.l.b16 %v770
        %v1079 = vunpack.c.h.b16 %v770
        %v1080 = vunpack.c.l.b16 %v771
        %v1081 = vunpack.c.l.b16 %v772
        %v1082 = vunpack.c.h.b16 %v772
        %v1083 = vunpack.c.l.b16 %v773
        %v1084 = vunpack.c.l.b16 %v774
        %v1085 = vunpack.c.h.b16 %v774
        %v1086 = vunpack.c.l.b16 %v775
        %v1087 = vunpack.c.l.b16 %v776
        %v1088 = vunpack.c.h.b16 %v776
        %v1089 = vunpack.c.l.b16 %v777
        %v1090 = vunpack.c.l.b16 %v778
        %v1091 = vunpack.c.h.b16 %v778
        %v1092 = vunpack.c.l.b16 %v779
        %v1093 = vunpack.c.l.b16 %v780
        %v1094 = vunpack.c.h.b16 %v780
        %v1095 = vunpack.c.l.b16 %v781
        %v1096 = vunpack.c.l.b16 %v782
        %v1097 = vunpack.c.h.b16 %v782
        %v1098 = vunpack.c.l.b16 %v783
        %v1099 = vunpack.c.l.b16 %v784
        %v1100 = vunpack.c.h.b16 %v784
        %v1101 = vunpack.c.l.b16 %v785
        %v1102 = vunpack.c.l.b16 %v786
        %v1103 = vunpack.c.h.b16 %v786
        %v1104 = vunpack.c.l.b16 %v787
        %v1105 = vunpack.c.l.b16 %v788
        %v1106 = vunpack.c.h.b16 %v788
        %v1107 = vunpack.c.l.b16 %v789
        %v1108 = vunpack.c.l.b16 %v790
        %v1109 = vunpack.c.h.b16 %v790
        %v1110 = vunpack.c.l.b16 %v791
        %v1111 = vunpack.c.l.b16 %v792
        %v1112 = vunpack.c.h.b16 %v792
        %v1113 = vunpack.c.l.b16 %v793
        %v1114 = vpack.c.b16 %v925, %v922
        %v1115 = vpack.c.b16 %v926, %v923
        %v1116 = vpack.c.b16 %v927, %v924
        %v1117 = vpack.c.b16 %v931, %v928
        %v1118 = vpack.c.b16 %v932, %v929
        %v1119 = vpack.c.b16 %v933, %v930
        %v1120 = vpack.c.b16 %v937, %v934
        %v1121 = vpack.c.b16 %v938, %v935
        %v1122 = vpack.c.b16 %v939, %v936
        %v1123 = vpack.c.b16 %v943, %v940
        %v1124 = vpack.c.b16 %v944, %v941
        %v1125 = vpack.c.b16 %v945, %v942
        %v1126 = vpack.c.b16 %v949, %v946
        %v1127 = vpack.c.b16 %v950, %v947
        %v1128 = vpack.c.b16 %v951, %v948
        %v1129 = vpack.c.b16 %v955, %v952
        %v1130 = vpack.c.b16 %v956, %v953
        %v1131 = vpack.c.b16 %v957, %v954
        %v1132 = vpack.c.b16 %v961, %v958
        %v1133 = vpack.c.b16 %v962, %v959
        %v1134 = vpack.c.b16 %v963, %v960
        %v1135 = vpack.c.b16 %v967, %v964
        %v1136 = vpack.c.b16 %v968, %v965
        %v1137 = vpack.c.b16 %v969, %v966
        %v1138 = vpack.c.b16 %v973, %v970
        %v1139 = vpack.c.b16 %v974, %v971
        %v1140 = vpack.c.b16 %v975, %v972
        %v1141 = vpack.c.b16 %v979, %v976
        %v1142 = vpack.c.b16 %v980, %v977
        %v1143 = vpack.c.b16 %v981, %v978
        %v1144 = vpack.c.b16 %v985, %v982
        %v1145 = vpack.c.b16 %v986, %v983
        %v1146 = vpack.c.b16 %v987, %v984
        %v1147 = vpack.c.b16 %v991, %v988
        %v1148 = vpack.c.b16 %v992, %v989
        %v1149 = vpack.c.b16 %v993, %v990
        %v1150 = vpack.c.b16 %v997, %v994
        %v1151 = vpack.c.b16 %v998, %v995
        %v1152 = vpack.c.b16 %v999, %v996
        %v1153 = vpack.c.b16 %v1003, %v1000
        %v1154 = vpack.c.b16 %v1004, %v1001
        %v1155 = vpack.c.b16 %v1005, %v1002
        %v1156 = vpack.c.b16 %v1009, %v1006
        %v1157 = vpack.c.b16 %v1010, %v1007
        %v1158 = vpack.c.b16 %v1011, %v1008
        %v1159 = vpack.c.b16 %v1015, %v1012
        %v1160 = vpack.c.b16 %v1016, %v1013
        %v1161 = vpack.c.b16 %v1017, %v1014
        %v1162 = vpack.c.b16 %v1021, %v1018
        %v1163 = vpack.c.b16 %v1022, %v1019
        %v1164 = vpack.c.b16 %v1023, %v1020
        %v1165 = vpack.c.b16 %v1027, %v1024
        %v1166 = vpack.c.b16 %v1028, %v1025
        %v1167 = vpack.c.b16 %v1029, %v1026
        %v1168 = vpack.c.b16 %v1033, %v1030
        %v1169 = vpack.c.b16 %v1034, %v1031
        %v1170 = vpack.c.b16 %v1035, %v1032
        %v1171 = vpack.c.b16 %v1039, %v1036
        %v1172 = vpack.c.b16 %v1040, %v1037
        %v1173 = vpack.c.b16 %v1041, %v1038
        %v1174 = vpack.c.b16 %v1045, %v1042
        %v1175 = vpack.c.b16 %v1046, %v1043
        %v1176 = vpack.c.b16 %v1047, %v1044
        %v1177 = vpack.c.b16 %v1051, %v1048
        %v1178 = vpack.c.b16 %v1052, %v1049
        %v1179 = vpack.c.b16 %v1053, %v1050
        %v1180 = vpack.c.b16 %v1057, %v1054
        %v1181 = vpack.c.b16 %v1058, %v1055
        %v1182 = vpack.c.b16 %v1059, %v1056
        %v1183 = vpack.c.b16 %v1063, %v1060
        %v1184 = vpack.c.b16 %v1064, %v1061
        %v1185 = vpack.c.b16 %v1065, %v1062
        %v1186 = vpack.c.b16 %v1069, %v1066
        %v1187 = vpack.c.b16 %v1070, %v1067
        %v1188 = vpack.c.b16 %v1071, %v1068
        %v1189 = vpack.c.b16 %v1075, %v1072
        %v1190 = vpack.c.b16 %v1076, %v1073
        %v1191 = vpack.c.b16 %v1077, %v1074
        %v1192 = vpack.c.b16 %v1081, %v1078
        %v1193 = vpack.c.b16 %v1082, %v1079
        %v1194 = vpack.c.b16 %v1083, %v1080
        %v1195 = vpack.c.b16 %v1087, %v1084
        %v1196 = vpack.c.b16 %v1088, %v1085
        %v1197 = vpack.c.b16 %v1089, %v1086
        %v1198 = vpack.c.b16 %v1093, %v1090
        %v1199 = vpack.c.b16 %v1094, %v1091
        %v1200 = vpack.c.b16 %v1095, %v1092
        %v1201 = vpack.c.b16 %v1099, %v1096
        %v1202 = vpack.c.b16 %v1100, %v1097
        %v1203 = vpack.c.b16 %v1101, %v1098
        %v1204 = vpack.c.b16 %v1105, %v1102
        %v1205 = vpack.c.b16 %v1106, %v1103
        %v1206 = vpack.c.b16 %v1107, %v1104
        %v1207 = vpack.c.b16 %v1111, %v1108
        %v1208 = vpack.c.b16 %v1112, %v1109
        %v1209 = vpack.c.b16 %v1113, %v1110
        %1306 = vmatprep.subr.bf16.mxu0 %v1115
        %1307 = vmatpush1.bf16.msra.mxu0 %v1114
        %1308 = vmatprep.subr.bf16.mxu0 %v1118
        %1309 = vmatpush1.bf16.msra.mxu0 %v1117
        %1310 = vmatprep.subr.bf16.mxu0 %v1121
        %1311 = vmatpush1.bf16.msra.mxu0 %v1120
        %1312 = vmatprep.subr.bf16.mxu0 %v1124
        %1313 = vmatpush1.bf16.msra.mxu0 %v1123
        %1314 = vmatprep.subr.bf16.mxu0 %v1127
        %1315 = vmatpush1.bf16.msra.mxu0 %v1126
        %1316 = vmatprep.subr.bf16.mxu0 %v1130
        %1317 = vmatpush1.bf16.msra.mxu0 %v1129
        %1318 = vmatprep.subr.bf16.mxu0 %v1133
        %1319 = vmatpush1.bf16.msra.mxu0 %v1132
        %1320 = vmatprep.subr.bf16.mxu0 %v1136
        %1321 = vmatpush1.bf16.msra.mxu0 %v1135
        %1322 = vmatprep.subr.bf16.mxu0 %v1139
        %1323 = vmatpush1.bf16.msra.mxu0 %v1138
        %1324 = vmatprep.subr.bf16.mxu0 %v1142
        %1325 = vmatpush1.bf16.msra.mxu0 %v1141
        %1326 = vmatprep.subr.bf16.mxu0 %v1145
        %1327 = vmatpush1.bf16.msra.mxu0 %v1144
        %1328 = vmatprep.subr.bf16.mxu0 %v1148
        %1329 = vmatpush1.bf16.msra.mxu0 %v1147
        %1330 = vmatprep.subr.bf16.mxu0 %v1151
        %1331 = vmatpush1.bf16.msra.mxu0 %v1150
        %1332 = vmatprep.subr.bf16.mxu0 %v1154
        %1333 = vmatpush1.bf16.msra.mxu0 %v1153
        %1334 = vmatprep.subr.bf16.mxu0 %v1157
        %1335 = vmatpush1.bf16.msra.mxu0 %v1156
        %1336 = vmatprep.subr.bf16.mxu0 %v1160
        %1337 = vmatpush1.bf16.msra.mxu0 %v1159
        %1338 = vmatprep.mubr.bf16.mxu0 %v531
        %1339 = vmatmul.mubr.bf16.gmra.mrb[0].mxu0 %v530
        %v1340 = vpop.f32.mrb[0].mxu0
        %v1341 = vadd.f32 0.0, %v1340
        %v1342 = vpop.f32.mrb[0].mxu0
        %v1343 = vadd.f32 0.0, %v1342
        %v1344 = vpop.f32.mrb[0].mxu0
        %v1345 = vadd.f32 0.0, %v1344
        %v1346 = vpop.f32.mrb[0].mxu0
        %v1347 = vadd.f32 0.0, %v1346
        %1348 = vmatprep.mubr.bf16.mxu0 %v535
        %1349 = vmatmul.mubr.bf16.gmra.mrb[0].mxu0 %v534
        %v1350 = vpop.f32.mrb[0].mxu0
        %v1351 = vadd.f32 0.0, %v1350
        %v1352 = vpop.f32.mrb[0].mxu0
        %v1353 = vadd.f32 0.0, %v1352
        %v1354 = vpop.f32.mrb[0].mxu0
        %v1355 = vadd.f32 0.0, %v1354
        %v1356 = vpop.f32.mrb[0].mxu0
        %v1357 = vadd.f32 0.0, %v1356
        %1358 = vdwg.mxu0
        %1359 = vmatprep.subr.bf16.mxu0 %v1163
        %1360 = vmatpush1.bf16.msra.mxu0 %v1162
        %1361 = vmatprep.subr.bf16.mxu0 %v1166
        %1362 = vmatpush1.bf16.msra.mxu0 %v1165
        %1363 = vmatprep.subr.bf16.mxu0 %v1169
        %1364 = vmatpush1.bf16.msra.mxu0 %v1168
        %1365 = vmatprep.subr.bf16.mxu0 %v1172
        %1366 = vmatpush1.bf16.msra.mxu0 %v1171
        %1367 = vmatprep.subr.bf16.mxu0 %v1175
        %1368 = vmatpush1.bf16.msra.mxu0 %v1174
        %1369 = vmatprep.subr.bf16.mxu0 %v1178
        %1370 = vmatpush1.bf16.msra.mxu0 %v1177
        %1371 = vmatprep.subr.bf16.mxu0 %v1181
        %1372 = vmatpush1.bf16.msra.mxu0 %v1180
        %1373 = vmatprep.subr.bf16.mxu0 %v1184
        %1374 = vmatpush1.bf16.msra.mxu0 %v1183
        %1375 = vmatprep.subr.bf16.mxu0 %v1187
        %1376 = vmatpush1.bf16.msra.mxu0 %v1186
        %1377 = vmatprep.subr.bf16.mxu0 %v1190
        %1378 = vmatpush1.bf16.msra.mxu0 %v1189
        %1379 = vmatprep.subr.bf16.mxu0 %v1193
        %1380 = vmatpush1.bf16.msra.mxu0 %v1192
        %1381 = vmatprep.subr.bf16.mxu0 %v1196
        %1382 = vmatpush1.bf16.msra.mxu0 %v1195
        %1383 = vmatprep.subr.bf16.mxu0 %v1199
        %1384 = vmatpush1.bf16.msra.mxu0 %v1198
        %1385 = vmatprep.subr.bf16.mxu0 %v1202
        %1386 = vmatpush1.bf16.msra.mxu0 %v1201
        %1387 = vmatprep.subr.bf16.mxu0 %v1205
        %1388 = vmatpush1.bf16.msra.mxu0 %v1204
        %1389 = vmatprep.subr.bf16.mxu0 %v1208
        %1390 = vmatpush1.bf16.msra.mxu0 %v1207
        %1391 = vmatprep.mubr.bf16.mxu0 %v533
        %1392 = vmatmul.mubr.bf16.gmra.mrb[0].mxu0 %v532
        %v1393 = vpop.f32.mrb[0].mxu0
        %v1394 = vadd.f32 %v1341, %v1393
        %v1395 = vpop.f32.mrb[0].mxu0
        %v1396 = vadd.f32 %v1343, %v1395
        %v1397 = vpop.f32.mrb[0].mxu0
        %v1398 = vadd.f32 %v1345, %v1397
        %v1399 = vpop.f32.mrb[0].mxu0
        %v1400 = vadd.f32 %v1347, %v1399
        %1401 = vmatprep.mubr.bf16.mxu0 %v537
        %1402 = vmatmul.mubr.bf16.gmra.mrb[0].mxu0 %v536
        %v1403 = vpop.f32.mrb[0].mxu0
        %v1404 = vadd.f32 %v1351, %v1403
        %v1405 = vpop.f32.mrb[0].mxu0
        %v1406 = vadd.f32 %v1353, %v1405
        %v1407 = vpop.f32.mrb[0].mxu0
        %v1408 = vadd.f32 %v1355, %v1407
        %v1409 = vpop.f32.mrb[0].mxu0
        %v1410 = vadd.f32 %v1357, %v1409
        %1411 = vdwg.mxu0
        %1412 = vmatprep.subr.bf16.mxu0 0
        %1413 = vmatpush1.bf16.msra.mxu0 %v1116
        %1414 = vmatprep.subr.bf16.mxu0 0
        %1415 = vmatpush1.bf16.msra.mxu0 %v1119
        %1416 = vmatprep.subr.bf16.mxu0 0
        %1417 = vmatpush1.bf16.msra.mxu0 %v1122
        %1418 = vmatprep.subr.bf16.mxu0 0
        %1419 = vmatpush1.bf16.msra.mxu0 %v1125
        %1420 = vmatprep.subr.bf16.mxu0 0
        %1421 = vmatpush1.bf16.msra.mxu0 %v1128
        %1422 = vmatprep.subr.bf16.mxu0 0
        %1423 = vmatpush1.bf16.msra.mxu0 %v1131
        %1424 = vmatprep.subr.bf16.mxu0 0
        %1425 = vmatpush1.bf16.msra.mxu0 %v1134
        %1426 = vmatprep.subr.bf16.mxu0 0
        %1427 = vmatpush1.bf16.msra.mxu0 %v1137
        %1428 = vmatprep.subr.bf16.mxu0 0
        %1429 = vmatpush1.bf16.msra.mxu0 %v1140
        %1430 = vmatprep.subr.bf16.mxu0 0
        %1431 = vmatpush1.bf16.msra.mxu0 %v1143
        %1432 = vmatprep.subr.bf16.mxu0 0
        %1433 = vmatpush1.bf16.msra.mxu0 %v1146
        %1434 = vmatprep.subr.bf16.mxu0 0
        %1435 = vmatpush1.bf16.msra.mxu0 %v1149
        %1436 = vmatprep.subr.bf16.mxu0 0
        %1437 = vmatpush1.bf16.msra.mxu0 %v1152
        %1438 = vmatprep.subr.bf16.mxu0 0
        %1439 = vmatpush1.bf16.msra.mxu0 %v1155
        %1440 = vmatprep.subr.bf16.mxu0 0
        %1441 = vmatpush1.bf16.msra.mxu0 %v1158
        %1442 = vmatprep.subr.bf16.mxu0 0
        %1443 = vmatpush1.bf16.msra.mxu0 %v1161
        %1444 = vmatprep.mubr.bf16.mxu0 %v531
        %1445 = vmatmul.mubr.bf16.gmra.mrb[0].mxu0 %v530
        %v1446 = vpop.f32.mrb[0].mxu0
        %v1447 = vadd.f32 0.0, %v1446
        %v1448 = vpop.f32.mrb[0].mxu0
        %v1449 = vpop.f32.mrb[0].mxu0
        %v1450 = vadd.f32 0.0, %v1449
        %v1451 = vpop.f32.mrb[0].mxu0
        %1452 = vmatprep.mubr.bf16.mxu0 %v535
        %1453 = vmatmul.mubr.bf16.gmra.mrb[0].mxu0 %v534
        %v1454 = vpop.f32.mrb[0].mxu0
        %v1455 = vadd.f32 0.0, %v1454
        %v1456 = vpop.f32.mrb[0].mxu0
        %v1457 = vpop.f32.mrb[0].mxu0
        %v1458 = vadd.f32 0.0, %v1457
        %v1459 = vpop.f32.mrb[0].mxu0
        %1460 = vdwg.mxu0
        %1461 = vmatprep.subr.bf16.mxu0 0
        %1462 = vmatpush1.bf16.msra.mxu0 %v1164
        %1463 = vmatprep.subr.bf16.mxu0 0
        %1464 = vmatpush1.bf16.msra.mxu0 %v1167
        %1465 = vmatprep.subr.bf16.mxu0 0
        %1466 = vmatpush1.bf16.msra.mxu0 %v1170
        %1467 = vmatprep.subr.bf16.mxu0 0
        %1468 = vmatpush1.bf16.msra.mxu0 %v1173
        %1469 = vmatprep.subr.bf16.mxu0 0
        %1470 = vmatpush1.bf16.msra.mxu0 %v1176
        %1471 = vmatprep.subr.bf16.mxu0 0
        %1472 = vmatpush1.bf16.msra.mxu0 %v1179
        %1473 = vmatprep.subr.bf16.mxu0 0
        %1474 = vmatpush1.bf16.msra.mxu0 %v1182
        %1475 = vmatprep.subr.bf16.mxu0 0
        %1476 = vmatpush1.bf16.msra.mxu0 %v1185
        %1477 = vmatprep.subr.bf16.mxu0 0
        %1478 = vmatpush1.bf16.msra.mxu0 %v1188
        %1479 = vmatprep.subr.bf16.mxu0 0
        %1480 = vmatpush1.bf16.msra.mxu0 %v1191
        %1481 = vmatprep.subr.bf16.mxu0 0
        %1482 = vmatpush1.bf16.msra.mxu0 %v1194
        %1483 = vmatprep.subr.bf16.mxu0 0
        %1484 = vmatpush1.bf16.msra.mxu0 %v1197
        %1485 = vmatprep.subr.bf16.mxu0 0
        %1486 = vmatpush1.bf16.msra.mxu0 %v1200
        %1487 = vmatprep.subr.bf16.mxu0 0
        %1488 = vmatpush1.bf16.msra.mxu0 %v1203
        %1489 = vmatprep.subr.bf16.mxu0 0
        %1490 = vmatpush1.bf16.msra.mxu0 %v1206
        %1491 = vmatprep.subr.bf16.mxu0 0
        %1492 = vmatpush1.bf16.msra.mxu0 %v1209
        %1493 = vmatprep.mubr.bf16.mxu0 %v533
        %1494 = vmatmul.mubr.bf16.gmra.mrb[0].mxu0 %v532
        %v1495 = vpop.f32.mrb[0].mxu0
        %v1496 = vadd.f32 %v1447, %v1495
        %v1497 = vpop.f32.mrb[0].mxu0
        %v1498 = vpop.f32.mrb[0].mxu0
        %v1499 = vadd.f32 %v1450, %v1498
        %v1500 = vpop.f32.mrb[0].mxu0
        %1501 = vmatprep.mubr.bf16.mxu0 %v537
        %1502 = vmatmul.mubr.bf16.gmra.mrb[0].mxu0 %v536
        %v1503 = vpop.f32.mrb[0].mxu0
        %v1504 = vadd.f32 %v1455, %v1503
        %v1505 = vpop.f32.mrb[0].mxu0
        %v1506 = vpop.f32.mrb[0].mxu0
        %v1507 = vadd.f32 %v1458, %v1506
        %v1508 = vpop.f32.mrb[0].mxu0
        %1509 = vdwg.mxu0
        %v1638 = vunpack.c.l.b16 %v538
        %v1639 = vunpack.c.h.b16 %v538
        %v1640 = vunpack.c.l.b16 %v539
        %v1641 = vunpack.c.l.b16 %v540
        %v1642 = vunpack.c.h.b16 %v540
        %v1643 = vunpack.c.l.b16 %v541
        %v1644 = vunpack.c.l.b16 %v542
        %v1645 = vunpack.c.h.b16 %v542
        %v1646 = vunpack.c.l.b16 %v543
        %v1647 = vunpack.c.l.b16 %v544
        %v1648 = vunpack.c.h.b16 %v544
        %v1649 = vunpack.c.l.b16 %v545
        %v1650 = vunpack.c.l.b16 %v546
        %v1651 = vunpack.c.h.b16 %v546
        %v1652 = vunpack.c.l.b16 %v547
        %v1653 = vunpack.c.l.b16 %v548
        %v1654 = vunpack.c.h.b16 %v548
        %v1655 = vunpack.c.l.b16 %v549
        %v1656 = vunpack.c.l.b16 %v550
        %v1657 = vunpack.c.h.b16 %v550
        %v1658 = vunpack.c.l.b16 %v551
        %v1659 = vunpack.c.l.b16 %v552
        %v1660 = vunpack.c.h.b16 %v552
        %v1661 = vunpack.c.l.b16 %v553
        %v1662 = vunpack.c.l.b16 %v554
        %v1663 = vunpack.c.h.b16 %v554
        %v1664 = vunpack.c.l.b16 %v555
        %v1665 = vunpack.c.l.b16 %v556
        %v1666 = vunpack.c.h.b16 %v556
        %v1667 = vunpack.c.l.b16 %v557
        %v1668 = vunpack.c.l.b16 %v558
        %v1669 = vunpack.c.h.b16 %v558
        %v1670 = vunpack.c.l.b16 %v559
        %v1671 = vunpack.c.l.b16 %v560
        %v1672 = vunpack.c.h.b16 %v560
        %v1673 = vunpack.c.l.b16 %v561
        %v1674 = vunpack.c.l.b16 %v562
        %v1675 = vunpack.c.h.b16 %v562
        %v1676 = vunpack.c.l.b16 %v563
        %v1677 = vunpack.c.l.b16 %v564
        %v1678 = vunpack.c.h.b16 %v564
        %v1679 = vunpack.c.l.b16 %v565
        %v1680 = vunpack.c.l.b16 %v566
        %v1681 = vunpack.c.h.b16 %v566
        %v1682 = vunpack.c.l.b16 %v567
        %v1683 = vunpack.c.l.b16 %v568
        %v1684 = vunpack.c.h.b16 %v568
        %v1685 = vunpack.c.l.b16 %v569
        %v1686 = vunpack.c.l.b16 %v570
        %v1687 = vunpack.c.h.b16 %v570
        %v1688 = vunpack.c.l.b16 %v571
        %v1689 = vunpack.c.l.b16 %v572
        %v1690 = vunpack.c.h.b16 %v572
        %v1691 = vunpack.c.l.b16 %v573
        %v1692 = vunpack.c.l.b16 %v574
        %v1693 = vunpack.c.h.b16 %v574
        %v1694 = vunpack.c.l.b16 %v575
        %v1695 = vunpack.c.l.b16 %v576
        %v1696 = vunpack.c.h.b16 %v576
        %v1697 = vunpack.c.l.b16 %v577
        %v1698 = vunpack.c.l.b16 %v578
        %v1699 = vunpack.c.h.b16 %v578
        %v1700 = vunpack.c.l.b16 %v579
        %v1701 = vunpack.c.l.b16 %v580
        %v1702 = vunpack.c.h.b16 %v580
        %v1703 = vunpack.c.l.b16 %v581
        %v1704 = vunpack.c.l.b16 %v582
        %v1705 = vunpack.c.h.b16 %v582
        %v1706 = vunpack.c.l.b16 %v583
        %v1707 = vunpack.c.l.b16 %v584
        %v1708 = vunpack.c.h.b16 %v584
        %v1709 = vunpack.c.l.b16 %v585
        %v1710 = vunpack.c.l.b16 %v586
        %v1711 = vunpack.c.h.b16 %v586
        %v1712 = vunpack.c.l.b16 %v587
        %v1713 = vunpack.c.l.b16 %v588
        %v1714 = vunpack.c.h.b16 %v588
        %v1715 = vunpack.c.l.b16 %v589
        %v1716 = vunpack.c.l.b16 %v590
        %v1717 = vunpack.c.h.b16 %v590
        %v1718 = vunpack.c.l.b16 %v591
        %v1719 = vunpack.c.l.b16 %v592
        %v1720 = vunpack.c.h.b16 %v592
        %v1721 = vunpack.c.l.b16 %v593
        %v1722 = vunpack.c.l.b16 %v594
        %v1723 = vunpack.c.h.b16 %v594
        %v1724 = vunpack.c.l.b16 %v595
        %v1725 = vunpack.c.l.b16 %v596
        %v1726 = vunpack.c.h.b16 %v596
        %v1727 = vunpack.c.l.b16 %v597
        %v1728 = vunpack.c.l.b16 %v598
        %v1729 = vunpack.c.h.b16 %v598
        %v1730 = vunpack.c.l.b16 %v599
        %v1731 = vunpack.c.l.b16 %v600
        %v1732 = vunpack.c.h.b16 %v600
        %v1733 = vunpack.c.l.b16 %v601
        %v1734 = vunpack.c.l.b16 %v602
        %v1735 = vunpack.c.h.b16 %v602
        %v1736 = vunpack.c.l.b16 %v603
        %v1737 = vunpack.c.l.b16 %v604
        %v1738 = vunpack.c.h.b16 %v604
        %v1739 = vunpack.c.l.b16 %v605
        %v1740 = vunpack.c.l.b16 %v606
        %v1741 = vunpack.c.h.b16 %v606
        %v1742 = vunpack.c.l.b16 %v607
        %v1743 = vunpack.c.l.b16 %v608
        %v1744 = vunpack.c.h.b16 %v608
        %v1745 = vunpack.c.l.b16 %v609
        %v1746 = vunpack.c.l.b16 %v610
        %v1747 = vunpack.c.h.b16 %v610
        %v1748 = vunpack.c.l.b16 %v611
        %v1749 = vunpack.c.l.b16 %v612
        %v1750 = vunpack.c.h.b16 %v612
        %v1751 = vunpack.c.l.b16 %v613
        %v1752 = vunpack.c.l.b16 %v614
        %v1753 = vunpack.c.h.b16 %v614
        %v1754 = vunpack.c.l.b16 %v615
        %v1755 = vunpack.c.l.b16 %v616
        %v1756 = vunpack.c.h.b16 %v616
        %v1757 = vunpack.c.l.b16 %v617
        %v1758 = vunpack.c.l.b16 %v618
        %v1759 = vunpack.c.h.b16 %v618
        %v1760 = vunpack.c.l.b16 %v619
        %v1761 = vunpack.c.l.b16 %v620
        %v1762 = vunpack.c.h.b16 %v620
        %v1763 = vunpack.c.l.b16 %v621
        %v1764 = vunpack.c.l.b16 %v622
        %v1765 = vunpack.c.h.b16 %v622
        %v1766 = vunpack.c.l.b16 %v623
        %v1767 = vunpack.c.l.b16 %v624
        %v1768 = vunpack.c.h.b16 %v624
        %v1769 = vunpack.c.l.b16 %v625
        %v1770 = vunpack.c.l.b16 %v626
        %v1771 = vunpack.c.h.b16 %v626
        %v1772 = vunpack.c.l.b16 %v627
        %v1773 = vunpack.c.l.b16 %v628
        %v1774 = vunpack.c.h.b16 %v628
        %v1775 = vunpack.c.l.b16 %v629
        %v1776 = vunpack.c.l.b16 %v630
        %v1777 = vunpack.c.h.b16 %v630
        %v1778 = vunpack.c.l.b16 %v631
        %v1779 = vunpack.c.l.b16 %v632
        %v1780 = vunpack.c.h.b16 %v632
        %v1781 = vunpack.c.l.b16 %v633
        %v1782 = vunpack.c.l.b16 %v634
        %v1783 = vunpack.c.h.b16 %v634
        %v1784 = vunpack.c.l.b16 %v635
        %v1785 = vunpack.c.l.b16 %v636
        %v1786 = vunpack.c.h.b16 %v636
        %v1787 = vunpack.c.l.b16 %v637
        %v1788 = vunpack.c.l.b16 %v638
        %v1789 = vunpack.c.h.b16 %v638
        %v1790 = vunpack.c.l.b16 %v639
        %v1791 = vunpack.c.l.b16 %v640
        %v1792 = vunpack.c.h.b16 %v640
        %v1793 = vunpack.c.l.b16 %v641
        %v1794 = vunpack.c.l.b16 %v642
        %v1795 = vunpack.c.h.b16 %v642
        %v1796 = vunpack.c.l.b16 %v643
        %v1797 = vunpack.c.l.b16 %v644
        %v1798 = vunpack.c.h.b16 %v644
        %v1799 = vunpack.c.l.b16 %v645
        %v1800 = vunpack.c.l.b16 %v646
        %v1801 = vunpack.c.h.b16 %v646
        %v1802 = vunpack.c.l.b16 %v647
        %v1803 = vunpack.c.l.b16 %v648
        %v1804 = vunpack.c.h.b16 %v648
        %v1805 = vunpack.c.l.b16 %v649
        %v1806 = vunpack.c.l.b16 %v650
        %v1807 = vunpack.c.h.b16 %v650
        %v1808 = vunpack.c.l.b16 %v651
        %v1809 = vunpack.c.l.b16 %v652
        %v1810 = vunpack.c.h.b16 %v652
        %v1811 = vunpack.c.l.b16 %v653
        %v1812 = vunpack.c.l.b16 %v654
        %v1813 = vunpack.c.h.b16 %v654
        %v1814 = vunpack.c.l.b16 %v655
        %v1815 = vunpack.c.l.b16 %v656
        %v1816 = vunpack.c.h.b16 %v656
        %v1817 = vunpack.c.l.b16 %v657
        %v1818 = vunpack.c.l.b16 %v658
        %v1819 = vunpack.c.h.b16 %v658
        %v1820 = vunpack.c.l.b16 %v659
        %v1821 = vunpack.c.l.b16 %v660
        %v1822 = vunpack.c.h.b16 %v660
        %v1823 = vunpack.c.l.b16 %v661
        %v1824 = vunpack.c.l.b16 %v662
        %v1825 = vunpack.c.h.b16 %v662
        %v1826 = vunpack.c.l.b16 %v663
        %v1827 = vunpack.c.l.b16 %v664
        %v1828 = vunpack.c.h.b16 %v664
        %v1829 = vunpack.c.l.b16 %v665
        %v1830 = vpack.c.b16 %v1641, %v1638
        %v1831 = vpack.c.b16 %v1642, %v1639
        %v1832 = vpack.c.b16 %v1643, %v1640
        %v1833 = vpack.c.b16 %v1647, %v1644
        %v1834 = vpack.c.b16 %v1648, %v1645
        %v1835 = vpack.c.b16 %v1649, %v1646
        %v1836 = vpack.c.b16 %v1653, %v1650
        %v1837 = vpack.c.b16 %v1654, %v1651
        %v1838 = vpack.c.b16 %v1655, %v1652
        %v1839 = vpack.c.b16 %v1659, %v1656
        %v1840 = vpack.c.b16 %v1660, %v1657
        %v1841 = vpack.c.b16 %v1661, %v1658
        %v1842 = vpack.c.b16 %v1665, %v1662
        %v1843 = vpack.c.b16 %v1666, %v1663
        %v1844 = vpack.c.b16 %v1667, %v1664
        %v1845 = vpack.c.b16 %v1671, %v1668
        %v1846 = vpack.c.b16 %v1672, %v1669
        %v1847 = vpack.c.b16 %v1673, %v1670
        %v1848 = vpack.c.b16 %v1677, %v1674
        %v1849 = vpack.c.b16 %v1678, %v1675
        %v1850 = vpack.c.b16 %v1679, %v1676
        %v1851 = vpack.c.b16 %v1683, %v1680
        %v1852 = vpack.c.b16 %v1684, %v1681
        %v1853 = vpack.c.b16 %v1685, %v1682
        %v1854 = vpack.c.b16 %v1689, %v1686
        %v1855 = vpack.c.b16 %v1690, %v1687
        %v1856 = vpack.c.b16 %v1691, %v1688
        %v1857 = vpack.c.b16 %v1695, %v1692
        %v1858 = vpack.c.b16 %v1696, %v1693
        %v1859 = vpack.c.b16 %v1697, %v1694
        %v1860 = vpack.c.b16 %v1701, %v1698
        %v1861 = vpack.c.b16 %v1702, %v1699
        %v1862 = vpack.c.b16 %v1703, %v1700
        %v1863 = vpack.c.b16 %v1707, %v1704
        %v1864 = vpack.c.b16 %v1708, %v1705
        %v1865 = vpack.c.b16 %v1709, %v1706
        %v1866 = vpack.c.b16 %v1713, %v1710
        %v1867 = vpack.c.b16 %v1714, %v1711
        %v1868 = vpack.c.b16 %v1715, %v1712
        %v1869 = vpack.c.b16 %v1719, %v1716
        %v1870 = vpack.c.b16 %v1720, %v1717
        %v1871 = vpack.c.b16 %v1721, %v1718
        %v1872 = vpack.c.b16 %v1725, %v1722
        %v1873 = vpack.c.b16 %v1726, %v1723
        %v1874 = vpack.c.b16 %v1727, %v1724
        %v1875 = vpack.c.b16 %v1731, %v1728
        %v1876 = vpack.c.b16 %v1732, %v1729
        %v1877 = vpack.c.b16 %v1733, %v1730
        %v1878 = vpack.c.b16 %v1737, %v1734
        %v1879 = vpack.c.b16 %v1738, %v1735
        %v1880 = vpack.c.b16 %v1739, %v1736
        %v1881 = vpack.c.b16 %v1743, %v1740
        %v1882 = vpack.c.b16 %v1744, %v1741
        %v1883 = vpack.c.b16 %v1745, %v1742
        %v1884 = vpack.c.b16 %v1749, %v1746
        %v1885 = vpack.c.b16 %v1750, %v1747
        %v1886 = vpack.c.b16 %v1751, %v1748
        %v1887 = vpack.c.b16 %v1755, %v1752
        %v1888 = vpack.c.b16 %v1756, %v1753
        %v1889 = vpack.c.b16 %v1757, %v1754
        %v1890 = vpack.c.b16 %v1761, %v1758
        %v1891 = vpack.c.b16 %v1762, %v1759
        %v1892 = vpack.c.b16 %v1763, %v1760
        %v1893 = vpack.c.b16 %v1767, %v1764
        %v1894 = vpack.c.b16 %v1768, %v1765
        %v1895 = vpack.c.b16 %v1769, %v1766
        %v1896 = vpack.c.b16 %v1773, %v1770
        %v1897 = vpack.c.b16 %v1774, %v1771
        %v1898 = vpack.c.b16 %v1775, %v1772
        %v1899 = vpack.c.b16 %v1779, %v1776
        %v1900 = vpack.c.b16 %v1780, %v1777
        %v1901 = vpack.c.b16 %v1781, %v1778
        %v1902 = vpack.c.b16 %v1785, %v1782
        %v1903 = vpack.c.b16 %v1786, %v1783
        %v1904 = vpack.c.b16 %v1787, %v1784
        %v1905 = vpack.c.b16 %v1791, %v1788
        %v1906 = vpack.c.b16 %v1792, %v1789
        %v1907 = vpack.c.b16 %v1793, %v1790
        %v1908 = vpack.c.b16 %v1797, %v1794
        %v1909 = vpack.c.b16 %v1798, %v1795
        %v1910 = vpack.c.b16 %v1799, %v1796
        %v1911 = vpack.c.b16 %v1803, %v1800
        %v1912 = vpack.c.b16 %v1804, %v1801
        %v1913 = vpack.c.b16 %v1805, %v1802
        %v1914 = vpack.c.b16 %v1809, %v1806
        %v1915 = vpack.c.b16 %v1810, %v1807
        %v1916 = vpack.c.b16 %v1811, %v1808
        %v1917 = vpack.c.b16 %v1815, %v1812
        %v1918 = vpack.c.b16 %v1816, %v1813
        %v1919 = vpack.c.b16 %v1817, %v1814
        %v1920 = vpack.c.b16 %v1821, %v1818
        %v1921 = vpack.c.b16 %v1822, %v1819
        %v1922 = vpack.c.b16 %v1823, %v1820
        %v1923 = vpack.c.b16 %v1827, %v1824
        %v1924 = vpack.c.b16 %v1828, %v1825
        %v1925 = vpack.c.b16 %v1829, %v1826
        %2022 = vmatprep.subr.bf16.mxu0 %v1831
        %2023 = vmatpush1.bf16.msra.mxu0 %v1830
        %2024 = vmatprep.subr.bf16.mxu0 %v1834
        %2025 = vmatpush1.bf16.msra.mxu0 %v1833
        %2026 = vmatprep.subr.bf16.mxu0 %v1837
        %2027 = vmatpush1.bf16.msra.mxu0 %v1836
        %2028 = vmatprep.subr.bf16.mxu0 %v1840
        %2029 = vmatpush1.bf16.msra.mxu0 %v1839
        %2030 = vmatprep.subr.bf16.mxu0 %v1843
        %2031 = vmatpush1.bf16.msra.mxu0 %v1842
        %2032 = vmatprep.subr.bf16.mxu0 %v1846
        %2033 = vmatpush1.bf16.msra.mxu0 %v1845
        %2034 = vmatprep.subr.bf16.mxu0 %v1849
        %2035 = vmatpush1.bf16.msra.mxu0 %v1848
        %2036 = vmatprep.subr.bf16.mxu0 %v1852
        %2037 = vmatpush1.bf16.msra.mxu0 %v1851
        %2038 = vmatprep.subr.bf16.mxu0 %v1855
        %2039 = vmatpush1.bf16.msra.mxu0 %v1854
        %2040 = vmatprep.subr.bf16.mxu0 %v1858
        %2041 = vmatpush1.bf16.msra.mxu0 %v1857
        %2042 = vmatprep.subr.bf16.mxu0 %v1861
        %2043 = vmatpush1.bf16.msra.mxu0 %v1860
        %2044 = vmatprep.subr.bf16.mxu0 %v1864
        %2045 = vmatpush1.bf16.msra.mxu0 %v1863
        %2046 = vmatprep.subr.bf16.mxu0 %v1867
        %2047 = vmatpush1.bf16.msra.mxu0 %v1866
        %2048 = vmatprep.subr.bf16.mxu0 %v1870
        %2049 = vmatpush1.bf16.msra.mxu0 %v1869
        %2050 = vmatprep.subr.bf16.mxu0 %v1873
        %2051 = vmatpush1.bf16.msra.mxu0 %v1872
        %2052 = vmatprep.subr.bf16.mxu0 %v1876
        %2053 = vmatpush1.bf16.msra.mxu0 %v1875
        %2054 = vmatprep.mubr.bf16.mxu0 %v523
        %2055 = vmatmul.mubr.bf16.gmra.mrb[0].mxu0 %v522
        %v2056 = vpop.f32.mrb[0].mxu0
        %v2057 = vadd.f32 %v1394, %v2056
        %v2058 = vpop.f32.mrb[0].mxu0
        %v2059 = vadd.f32 %v1396, %v2058
        %v2060 = vpop.f32.mrb[0].mxu0
        %v2061 = vadd.f32 %v1398, %v2060
        %v2062 = vpop.f32.mrb[0].mxu0
        %v2063 = vadd.f32 %v1400, %v2062
        %2064 = vmatprep.mubr.bf16.mxu0 %v527
        %2065 = vmatmul.mubr.bf16.gmra.mrb[0].mxu0 %v526
        %v2066 = vpop.f32.mrb[0].mxu0
        %v2067 = vadd.f32 %v1404, %v2066
        %v2068 = vpop.f32.mrb[0].mxu0
        %v2069 = vadd.f32 %v1406, %v2068
        %v2070 = vpop.f32.mrb[0].mxu0
        %v2071 = vadd.f32 %v1408, %v2070
        %v2072 = vpop.f32.mrb[0].mxu0
        %v2073 = vadd.f32 %v1410, %v2072
        %2074 = vdwg.mxu0
        %2075 = vmatprep.subr.bf16.mxu0 %v1879
        %2076 = vmatpush1.bf16.msra.mxu0 %v1878
        %2077 = vmatprep.subr.bf16.mxu0 %v1882
        %2078 = vmatpush1.bf16.msra.mxu0 %v1881
        %2079 = vmatprep.subr.bf16.mxu0 %v1885
        %2080 = vmatpush1.bf16.msra.mxu0 %v1884
        %2081 = vmatprep.subr.bf16.mxu0 %v1888
        %2082 = vmatpush1.bf16.msra.mxu0 %v1887
        %2083 = vmatprep.subr.bf16.mxu0 %v1891
        %2084 = vmatpush1.bf16.msra.mxu0 %v1890
        %2085 = vmatprep.subr.bf16.mxu0 %v1894
        %2086 = vmatpush1.bf16.msra.mxu0 %v1893
        %2087 = vmatprep.subr.bf16.mxu0 %v1897
        %2088 = vmatpush1.bf16.msra.mxu0 %v1896
        %2089 = vmatprep.subr.bf16.mxu0 %v1900
        %2090 = vmatpush1.bf16.msra.mxu0 %v1899
        %2091 = vmatprep.subr.bf16.mxu0 %v1903
        %2092 = vmatpush1.bf16.msra.mxu0 %v1902
        %2093 = vmatprep.subr.bf16.mxu0 %v1906
        %2094 = vmatpush1.bf16.msra.mxu0 %v1905
        %2095 = vmatprep.subr.bf16.mxu0 %v1909
        %2096 = vmatpush1.bf16.msra.mxu0 %v1908
        %2097 = vmatprep.subr.bf16.mxu0 %v1912
        %2098 = vmatpush1.bf16.msra.mxu0 %v1911
        %2099 = vmatprep.subr.bf16.mxu0 %v1915
        %2100 = vmatpush1.bf16.msra.mxu0 %v1914
        %2101 = vmatprep.subr.bf16.mxu0 %v1918
        %2102 = vmatpush1.bf16.msra.mxu0 %v1917
        %2103 = vmatprep.subr.bf16.mxu0 %v1921
        %2104 = vmatpush1.bf16.msra.mxu0 %v1920
        %2105 = vmatprep.subr.bf16.mxu0 %v1924
        %2106 = vmatpush1.bf16.msra.mxu0 %v1923
        %2107 = vmatprep.mubr.bf16.mxu0 %v525
        %2108 = vmatmul.mubr.bf16.gmra.mrb[0].mxu0 %v524
        %v2109 = vpop.f32.mrb[0].mxu0
        %v2110 = vadd.f32 %v2057, %v2109
        %v2111 = vpop.f32.mrb[0].mxu0
        %v2112 = vadd.f32 %v2059, %v2111
        %v2113 = vpop.f32.mrb[0].mxu0
        %v2114 = vadd.f32 %v2061, %v2113
        %v2115 = vpop.f32.mrb[0].mxu0
        %v2116 = vadd.f32 %v2063, %v2115
        %2117 = vmatprep.mubr.bf16.mxu0 %v529
        %2118 = vmatmul.mubr.bf16.gmra.mrb[0].mxu0 %v528
        %v2119 = vpop.f32.mrb[0].mxu0
        %v2120 = vadd.f32 %v2067, %v2119
        %v2121 = vpop.f32.mrb[0].mxu0
        %v2122 = vadd.f32 %v2069, %v2121
        %v2123 = vpop.f32.mrb[0].mxu0
        %v2124 = vadd.f32 %v2071, %v2123
        %v2125 = vpop.f32.mrb[0].mxu0
        %v2126 = vadd.f32 %v2073, %v2125
        %2127 = vdwg.mxu0
        %2128 = vmatprep.subr.bf16.mxu0 0
        %2129 = vmatpush1.bf16.msra.mxu0 %v1832
        %2130 = vmatprep.subr.bf16.mxu0 0
        %2131 = vmatpush1.bf16.msra.mxu0 %v1835
        %2132 = vmatprep.subr.bf16.mxu0 0
        %2133 = vmatpush1.bf16.msra.mxu0 %v1838
        %2134 = vmatprep.subr.bf16.mxu0 0
        %2135 = vmatpush1.bf16.msra.mxu0 %v1841
        %2136 = vmatprep.subr.bf16.mxu0 0
        %2137 = vmatpush1.bf16.msra.mxu0 %v1844
        %2138 = vmatprep.subr.bf16.mxu0 0
        %2139 = vmatpush1.bf16.msra.mxu0 %v1847
        %2140 = vmatprep.subr.bf16.mxu0 0
        %2141 = vmatpush1.bf16.msra.mxu0 %v1850
        %2142 = vmatprep.subr.bf16.mxu0 0
        %2143 = vmatpush1.bf16.msra.mxu0 %v1853
        %2144 = vmatprep.subr.bf16.mxu0 0
        %2145 = vmatpush1.bf16.msra.mxu0 %v1856
        %2146 = vmatprep.subr.bf16.mxu0 0
        %2147 = vmatpush1.bf16.msra.mxu0 %v1859
        %2148 = vmatprep.subr.bf16.mxu0 0
        %2149 = vmatpush1.bf16.msra.mxu0 %v1862
        %2150 = vmatprep.subr.bf16.mxu0 0
        %2151 = vmatpush1.bf16.msra.mxu0 %v1865
        %2152 = vmatprep.subr.bf16.mxu0 0
        %2153 = vmatpush1.bf16.msra.mxu0 %v1868
        %2154 = vmatprep.subr.bf16.mxu0 0
        %2155 = vmatpush1.bf16.msra.mxu0 %v1871
        %2156 = vmatprep.subr.bf16.mxu0 0
        %2157 = vmatpush1.bf16.msra.mxu0 %v1874
        %2158 = vmatprep.subr.bf16.mxu0 0
        %2159 = vmatpush1.bf16.msra.mxu0 %v1877
        %2160 = vmatprep.mubr.bf16.mxu0 %v523
        %2161 = vmatmul.mubr.bf16.gmra.mrb[0].mxu0 %v522
        %v2162 = vpop.f32.mrb[0].mxu0
        %v2163 = vadd.f32 %v1496, %v2162
        %v2164 = vpop.f32.mrb[0].mxu0
        %v2165 = vpop.f32.mrb[0].mxu0
        %v2166 = vadd.f32 %v1499, %v2165
        %v2167 = vpop.f32.mrb[0].mxu0
        %2168 = vmatprep.mubr.bf16.mxu0 %v527
        %2169 = vmatmul.mubr.bf16.gmra.mrb[0].mxu0 %v526
        %v2170 = vpop.f32.mrb[0].mxu0
        %v2171 = vadd.f32 %v1504, %v2170
        %v2172 = vpop.f32.mrb[0].mxu0
        %v2173 = vpop.f32.mrb[0].mxu0
        %v2174 = vadd.f32 %v1507, %v2173
        %v2175 = vpop.f32.mrb[0].mxu0
        %2176 = vdwg.mxu0
        %2177 = vmatprep.subr.bf16.mxu0 0
        %2178 = vmatpush1.bf16.msra.mxu0 %v1880
        %2179 = vmatprep.subr.bf16.mxu0 0
        %2180 = vmatpush1.bf16.msra.mxu0 %v1883
        %2181 = vmatprep.subr.bf16.mxu0 0
        %2182 = vmatpush1.bf16.msra.mxu0 %v1886
        %2183 = vmatprep.subr.bf16.mxu0 0
        %2184 = vmatpush1.bf16.msra.mxu0 %v1889
        %2185 = vmatprep.subr.bf16.mxu0 0
        %2186 = vmatpush1.bf16.msra.mxu0 %v1892
        %2187 = vmatprep.subr.bf16.mxu0 0
        %2188 = vmatpush1.bf16.msra.mxu0 %v1895
        %2189 = vmatprep.subr.bf16.mxu0 0
        %2190 = vmatpush1.bf16.msra.mxu0 %v1898
        %2191 = vmatprep.subr.bf16.mxu0 0
        %2192 = vmatpush1.bf16.msra.mxu0 %v1901
        %2193 = vmatprep.subr.bf16.mxu0 0
        %2194 = vmatpush1.bf16.msra.mxu0 %v1904
        %2195 = vmatprep.subr.bf16.mxu0 0
        %2196 = vmatpush1.bf16.msra.mxu0 %v1907
        %2197 = vmatprep.subr.bf16.mxu0 0
        %2198 = vmatpush1.bf16.msra.mxu0 %v1910
        %2199 = vmatprep.subr.bf16.mxu0 0
        %2200 = vmatpush1.bf16.msra.mxu0 %v1913
        %2201 = vmatprep.subr.bf16.mxu0 0
        %2202 = vmatpush1.bf16.msra.mxu0 %v1916
        %2203 = vmatprep.subr.bf16.mxu0 0
        %2204 = vmatpush1.bf16.msra.mxu0 %v1919
        %2205 = vmatprep.subr.bf16.mxu0 0
        %2206 = vmatpush1.bf16.msra.mxu0 %v1922
        %2207 = vmatprep.subr.bf16.mxu0 0
        %2208 = vmatpush1.bf16.msra.mxu0 %v1925
        %2209 = vmatprep.mubr.bf16.mxu0 %v525
        %2210 = vmatmul.mubr.bf16.gmra.mrb[0].mxu0 %v524
        %v2211 = vpop.f32.mrb[0].mxu0
        %v2212 = vadd.f32 %v2163, %v2211
        %v2213 = vpop.f32.mrb[0].mxu0
        %v2214 = vpop.f32.mrb[0].mxu0
        %v2215 = vadd.f32 %v2166, %v2214
        %v2216 = vpop.f32.mrb[0].mxu0
        %2217 = vmatprep.mubr.bf16.mxu0 %v529
        %2218 = vmatmul.mubr.bf16.gmra.mrb[0].mxu0 %v528
        %v2219 = vpop.f32.mrb[0].mxu0
        %v2220 = vadd.f32 %v2171, %v2219
        %v2221 = vpop.f32.mrb[0].mxu0
        %v2222 = vpop.f32.mrb[0].mxu0
        %v2223 = vadd.f32 %v2174, %v2222
        %v2224 = vpop.f32.mrb[0].mxu0
        %2225 = vdwg.mxu0
        %v2226 = vpack.c.bf16 %v2114, %v2110
        %v2227 = vpack.c.bf16 %v2116, %v2112
        %v2228 = vpack.c.bf16 %v2215, %v2212
        %v2229 = vpack.c.bf16 %v2124, %v2120
        %v2230 = vpack.c.bf16 %v2126, %v2122
        %v2231 = vpack.c.bf16 %v2223, %v2220
        %v2232 = vld [vmem:[%s4] sm:$0xf]
        %v2233 = vld [vmem:[%s4 + $0x4] sm:$0xf]
        %v2234 = vld [vmem:[%s4 + $0x8] sm:$0xf]
        %v2235 = vld [vmem:[%s4 + $0xc] sm:$0xf]
        %v2240 = vunpack.c.l.b16 %v2232
        %v2241 = vunpack.c.l.b16 %v2233
        %v2242 = vunpack.c.l.b16 %v2234
        %v2243 = vunpack.c.l.b16 %v2235
        %v2244 = vpack.c.b16 %v2241, %v2240
        %v2245 = vpack.c.b16 %v2243, %v2242
        %vm2246 = vcmask 261120
        %v2248 = vsel %vm2246, %v2244, 0
        %v2251 = vsel %vm2246, %v2245, 0
        %2253 = vmatprep.subr.bf16.mxu0 %v2227
        %2254 = vmatpush1.bf16.msra.mxu0 %v2226
        %2255 = vmatprep.subr.bf16.mxu0 %v2230
        %2256 = vmatpush1.bf16.msra.mxu0 %v2229
        %2257 = vmatprep.subr.bf16.mxu0 0
        %2258 = vmatpush1.bf16.msra.mxu0 0
        %2259 = vmatprep.subr.bf16.mxu0 0
        %2260 = vmatpush1.bf16.msra.mxu0 0
        %2261 = vmatprep.subr.bf16.mxu0 0
        %2262 = vmatpush1.bf16.msra.mxu0 0
        %2263 = vmatprep.subr.bf16.mxu0 0
        %2264 = vmatpush1.bf16.msra.mxu0 0
        %2265 = vmatprep.subr.bf16.mxu0 0
        %2266 = vmatpush1.bf16.msra.mxu0 0
        %2267 = vmatprep.subr.bf16.mxu0 0
        %2268 = vmatpush1.bf16.msra.mxu0 0
        %2269 = vmatprep.subr.bf16.mxu0 0
        %2270 = vmatpush1.bf16.msra.mxu0 0
        %2271 = vmatprep.subr.bf16.mxu0 0
        %2272 = vmatpush1.bf16.msra.mxu0 0
        %2273 = vmatprep.subr.bf16.mxu0 0
        %2274 = vmatpush1.bf16.msra.mxu0 0
        %2275 = vmatprep.subr.bf16.mxu0 0
        %2276 = vmatpush1.bf16.msra.mxu0 0
        %2277 = vmatprep.subr.bf16.mxu0 0
        %2278 = vmatpush1.bf16.msra.mxu0 0
        %2279 = vmatprep.subr.bf16.mxu0 0
        %2280 = vmatpush1.bf16.msra.mxu0 0
        %2281 = vmatprep.subr.bf16.mxu0 0
        %2282 = vmatpush1.bf16.msra.mxu0 0
        %2283 = vmatprep.subr.bf16.mxu0 0
        %2284 = vmatpush1.bf16.msra.mxu0 0
        %2285 = vmatprep.mubr.bf16.mxu0 0
        %2286 = vmatmul.mubr.bf16.gmra.mrb[0].mxu0 %v2248
        %v2287 = vpop.f32.mrb[0].mxu0
        %v2288 = vadd.f32 0.0, %v2287
        %v2289 = vpop.f32.mrb[0].mxu0
        %v2290 = vadd.f32 0.0, %v2289
        %v2291 = vpop.f32.mrb[0].mxu0
        %v2292 = vadd.f32 0.0, %v2291
        %v2293 = vpop.f32.mrb[0].mxu0
        %v2294 = vadd.f32 0.0, %v2293
        %2295 = vmatprep.mubr.bf16.mxu0 0
        %2296 = vmatmul.mubr.bf16.gmra.mrb[0].mxu0 %v2251
        %v2297 = vpop.f32.mrb[0].mxu0
        %v2298 = vadd.f32 0.0, %v2297
        %v2299 = vpop.f32.mrb[0].mxu0
        %v2300 = vadd.f32 0.0, %v2299
        %v2301 = vpop.f32.mrb[0].mxu0
        %v2302 = vadd.f32 0.0, %v2301
        %v2303 = vpop.f32.mrb[0].mxu0
        %v2304 = vadd.f32 0.0, %v2303
        %2305 = vdwg.mxu0
        %2306 = vmatprep.subr.bf16.mxu0 0
        %2307 = vmatpush1.bf16.msra.mxu0 %v2228
        %2308 = vmatprep.subr.bf16.mxu0 0
        %2309 = vmatpush1.bf16.msra.mxu0 %v2231
        %2310 = vmatprep.subr.bf16.mxu0 0
        %2311 = vmatpush1.bf16.msra.mxu0 0
        %2312 = vmatprep.subr.bf16.mxu0 0
        %2313 = vmatpush1.bf16.msra.mxu0 0
        %2314 = vmatprep.subr.bf16.mxu0 0
        %2315 = vmatpush1.bf16.msra.mxu0 0
        %2316 = vmatprep.subr.bf16.mxu0 0
        %2317 = vmatpush1.bf16.msra.mxu0 0
        %2318 = vmatprep.subr.bf16.mxu0 0
        %2319 = vmatpush1.bf16.msra.mxu0 0
        %2320 = vmatprep.subr.bf16.mxu0 0
        %2321 = vmatpush1.bf16.msra.mxu0 0
        %2322 = vmatprep.subr.bf16.mxu0 0
        %2323 = vmatpush1.bf16.msra.mxu0 0
        %2324 = vmatprep.subr.bf16.mxu0 0
        %2325 = vmatpush1.bf16.msra.mxu0 0
        %2326 = vmatprep.subr.bf16.mxu0 0
        %2327 = vmatpush1.bf16.msra.mxu0 0
        %2328 = vmatprep.subr.bf16.mxu0 0
        %2329 = vmatpush1.bf16.msra.mxu0 0
        %2330 = vmatprep.subr.bf16.mxu0 0
        %2331 = vmatpush1.bf16.msra.mxu0 0
        %2332 = vmatprep.subr.bf16.mxu0 0
        %2333 = vmatpush1.bf16.msra.mxu0 0
        %2334 = vmatprep.subr.bf16.mxu0 0
        %2335 = vmatpush1.bf16.msra.mxu0 0
        %2336 = vmatprep.subr.bf16.mxu0 0
        %2337 = vmatpush1.bf16.msra.mxu0 0
        %2338 = vmatprep.mubr.bf16.mxu0 0
        %2339 = vmatmul.mubr.bf16.gmra.mrb[0].mxu0 %v2248
        %v2340 = vpop.f32.mrb[0].mxu0
        %v2341 = vadd.f32 0.0, %v2340
        %v2342 = vpop.f32.mrb[0].mxu0
        %v2343 = vpop.f32.mrb[0].mxu0
        %v2344 = vadd.f32 0.0, %v2343
        %v2345 = vpop.f32.mrb[0].mxu0
        %2346 = vmatprep.mubr.bf16.mxu0 0
        %2347 = vmatmul.mubr.bf16.gmra.mrb[0].mxu0 %v2251
        %v2348 = vpop.f32.mrb[0].mxu0
        %v2349 = vadd.f32 0.0, %v2348
        %v2350 = vpop.f32.mrb[0].mxu0
        %v2351 = vpop.f32.mrb[0].mxu0
        %v2352 = vadd.f32 0.0, %v2351
        %v2353 = vpop.f32.mrb[0].mxu0
        %2354 = vdwg.mxu0
        %v2355 = vpack.c.bf16 %v2292, %v2288
        %v2356 = vpack.c.bf16 %v2294, %v2290
        %v2357 = vpack.c.bf16 %v2344, %v2341
        %v2358 = vpack.c.bf16 %v2302, %v2298
        %v2359 = vpack.c.bf16 %v2304, %v2300
        %v2360 = vpack.c.bf16 %v2352, %v2349
        %v2361 = vld [vmem:[%s5] sm:$0xff]
        %v2362 = vld [vmem:[%s5 + $0x8] sm:$0xff]
        %v2363 = vld [vmem:[%s5 + $0x10] sm:$0xff]
        %v2364 = vld [vmem:[%s5 + $0x18] sm:$0xff]
        %v2365 = vld [vmem:[%s5 + $0x20] sm:$0xff]
        %v2366 = vld [vmem:[%s5 + $0x28] sm:$0xff]
        %v2367 = vld [vmem:[%s5 + $0x30] sm:$0xff]
        %v2368 = vld [vmem:[%s5 + $0x38] sm:$0xff]
        %v2369 = vld [vmem:[%s5 + $0x40] sm:$0xff]
        %v2370 = vld [vmem:[%s5 + $0x48] sm:$0xff]
        %v2371 = vld [vmem:[%s5 + $0x50] sm:$0xff]
        %v2372 = vld [vmem:[%s5 + $0x58] sm:$0xff]
        %v2373 = vld [vmem:[%s5 + $0x60] sm:$0xff]
        %v2374 = vld [vmem:[%s5 + $0x68] sm:$0xff]
        %v2375 = vld [vmem:[%s5 + $0x70] sm:$0xff]
        %v2376 = vld [vmem:[%s5 + $0x78] sm:$0xff]
        %v2377 = vld [vmem:[%s5 + $0x80] sm:$0xff]
        %v2378 = vld [vmem:[%s5 + $0x88] sm:$0xff]
        %v2379 = vld [vmem:[%s5 + $0x90] sm:$0xff]
        %v2380 = vld [vmem:[%s5 + $0x98] sm:$0xff]
        %v2381 = vld [vmem:[%s5 + $0xa0] sm:$0xff]
        %v2382 = vld [vmem:[%s5 + $0xa8] sm:$0xff]
        %v2383 = vld [vmem:[%s5 + $0xb0] sm:$0xff]
        %v2384 = vld [vmem:[%s5 + $0xb8] sm:$0xff]
        %v2385 = vld [vmem:[%s5 + $0xc0] sm:$0xff]
        %v2386 = vld [vmem:[%s5 + $0xc8] sm:$0xff]
        %v2387 = vld [vmem:[%s5 + $0xd0] sm:$0xff]
        %v2388 = vld [vmem:[%s5 + $0xd8] sm:$0xff]
        %v2389 = vld [vmem:[%s5 + $0xe0] sm:$0xff]
        %v2390 = vld [vmem:[%s5 + $0xe8] sm:$0xff]
        %v2391 = vld [vmem:[%s5 + $0xf0] sm:$0xff]
        %v2392 = vld [vmem:[%s5 + $0xf8] sm:$0xff]
        %v2393 = vld [vmem:[%s5 + $0x100] sm:$0xff]
        %v2394 = vld [vmem:[%s5 + $0x108] sm:$0xff]
        %v2395 = vld [vmem:[%s5 + $0x110] sm:$0xff]
        %v2396 = vld [vmem:[%s5 + $0x118] sm:$0xff]
        %v2397 = vld [vmem:[%s5 + $0x120] sm:$0xff]
        %v2398 = vld [vmem:[%s5 + $0x128] sm:$0xff]
        %v2399 = vld [vmem:[%s5 + $0x130] sm:$0xff]
        %v2400 = vld [vmem:[%s5 + $0x138] sm:$0xff]
        %v2401 = vld [vmem:[%s5 + $0x140] sm:$0xff]
        %v2402 = vld [vmem:[%s5 + $0x148] sm:$0xff]
        %v2403 = vld [vmem:[%s5 + $0x150] sm:$0xff]
        %v2404 = vld [vmem:[%s5 + $0x158] sm:$0xff]
        %v2405 = vld [vmem:[%s5 + $0x160] sm:$0xff]
        %v2406 = vld [vmem:[%s5 + $0x168] sm:$0xff]
        %v2407 = vld [vmem:[%s5 + $0x170] sm:$0xff]
        %v2408 = vld [vmem:[%s5 + $0x178] sm:$0xff]
        %v2409 = vld [vmem:[%s5 + $0x180] sm:$0xff]
        %v2410 = vld [vmem:[%s5 + $0x188] sm:$0xff]
        %v2411 = vld [vmem:[%s5 + $0x190] sm:$0xff]
        %v2412 = vld [vmem:[%s5 + $0x198] sm:$0xff]
        %v2413 = vld [vmem:[%s5 + $0x1a0] sm:$0xff]
        %v2414 = vld [vmem:[%s5 + $0x1a8] sm:$0xff]
        %v2415 = vld [vmem:[%s5 + $0x1b0] sm:$0xff]
        %v2416 = vld [vmem:[%s5 + $0x1b8] sm:$0xff]
        %v2417 = vld [vmem:[%s5 + $0x1c0] sm:$0xff]
        %v2418 = vld [vmem:[%s5 + $0x1c8] sm:$0xff]
        %v2419 = vld [vmem:[%s5 + $0x1d0] sm:$0xff]
        %v2420 = vld [vmem:[%s5 + $0x1d8] sm:$0xff]
        %v2421 = vld [vmem:[%s5 + $0x1e0] sm:$0xff]
        %v2422 = vld [vmem:[%s5 + $0x1e8] sm:$0xff]
        %v2423 = vld [vmem:[%s5 + $0x1f0] sm:$0xff]
        %v2424 = vld [vmem:[%s5 + $0x1f8] sm:$0xff]
        %v2425 = vld [vmem:[%s5 + $0x200] sm:$0xff]
        %v2426 = vld [vmem:[%s5 + $0x208] sm:$0xff]
        %v2427 = vld [vmem:[%s5 + $0x210] sm:$0xff]
        %v2428 = vld [vmem:[%s5 + $0x218] sm:$0xff]
        %v2429 = vld [vmem:[%s5 + $0x220] sm:$0xff]
        %v2430 = vld [vmem:[%s5 + $0x228] sm:$0xff]
        %v2431 = vld [vmem:[%s5 + $0x230] sm:$0xff]
        %v2432 = vld [vmem:[%s5 + $0x238] sm:$0xff]
        %v2433 = vld [vmem:[%s6] sm:$0xff]
        %v2434 = vld [vmem:[%s6 + $0x8] sm:$0xff]
        %v2435 = vld [vmem:[%s6 + $0x10] sm:$0xff]
        %v2436 = vld [vmem:[%s6 + $0x18] sm:$0xff]
        %v2437 = vld [vmem:[%s6 + $0x20] sm:$0xff]
        %v2438 = vld [vmem:[%s6 + $0x28] sm:$0xff]
        %v2439 = vld [vmem:[%s6 + $0x30] sm:$0xff]
        %v2440 = vld [vmem:[%s6 + $0x38] sm:$0xff]
        %v2441 = vld [vmem:[%s6 + $0x40] sm:$0xff]
        %v2442 = vld [vmem:[%s6 + $0x48] sm:$0xff]
        %v2443 = vld [vmem:[%s6 + $0x50] sm:$0xff]
        %v2444 = vld [vmem:[%s6 + $0x58] sm:$0xff]
        %v2445 = vld [vmem:[%s6 + $0x60] sm:$0xff]
        %v2446 = vld [vmem:[%s6 + $0x68] sm:$0xff]
        %v2447 = vld [vmem:[%s6 + $0x70] sm:$0xff]
        %v2448 = vld [vmem:[%s6 + $0x78] sm:$0xff]
        %v2449 = vld [vmem:[%s6 + $0x80] sm:$0xff]
        %v2450 = vld [vmem:[%s6 + $0x88] sm:$0xff]
        %v2451 = vld [vmem:[%s6 + $0x90] sm:$0xff]
        %v2452 = vld [vmem:[%s6 + $0x98] sm:$0xff]
        %v2453 = vld [vmem:[%s6 + $0xa0] sm:$0xff]
        %v2454 = vld [vmem:[%s6 + $0xa8] sm:$0xff]
        %v2455 = vld [vmem:[%s6 + $0xb0] sm:$0xff]
        %v2456 = vld [vmem:[%s6 + $0xb8] sm:$0xff]
        %v2457 = vld [vmem:[%s6 + $0xc0] sm:$0xff]
        %v2458 = vld [vmem:[%s6 + $0xc8] sm:$0xff]
        %v2459 = vld [vmem:[%s6 + $0xd0] sm:$0xff]
        %v2460 = vld [vmem:[%s6 + $0xd8] sm:$0xff]
        %v2461 = vld [vmem:[%s6 + $0xe0] sm:$0xff]
        %v2462 = vld [vmem:[%s6 + $0xe8] sm:$0xff]
        %v2463 = vld [vmem:[%s6 + $0xf0] sm:$0xff]
        %v2464 = vld [vmem:[%s6 + $0xf8] sm:$0xff]
        %v2465 = vld [vmem:[%s6 + $0x100] sm:$0xff]
        %v2466 = vld [vmem:[%s6 + $0x108] sm:$0xff]
        %v2467 = vld [vmem:[%s6 + $0x110] sm:$0xff]
        %v2468 = vld [vmem:[%s6 + $0x118] sm:$0xff]
        %v2469 = vld [vmem:[%s6 + $0x120] sm:$0xff]
        %v2470 = vld [vmem:[%s6 + $0x128] sm:$0xff]
        %v2471 = vld [vmem:[%s6 + $0x130] sm:$0xff]
        %v2472 = vld [vmem:[%s6 + $0x138] sm:$0xff]
        %v2473 = vld [vmem:[%s6 + $0x140] sm:$0xff]
        %v2474 = vld [vmem:[%s6 + $0x148] sm:$0xff]
        %v2475 = vld [vmem:[%s6 + $0x150] sm:$0xff]
        %v2476 = vld [vmem:[%s6 + $0x158] sm:$0xff]
        %v2477 = vld [vmem:[%s6 + $0x160] sm:$0xff]
        %v2478 = vld [vmem:[%s6 + $0x168] sm:$0xff]
        %v2479 = vld [vmem:[%s6 + $0x170] sm:$0xff]
        %v2480 = vld [vmem:[%s6 + $0x178] sm:$0xff]
        %v2481 = vld [vmem:[%s6 + $0x180] sm:$0xff]
        %v2482 = vld [vmem:[%s6 + $0x188] sm:$0xff]
        %v2483 = vld [vmem:[%s6 + $0x190] sm:$0xff]
        %v2484 = vld [vmem:[%s6 + $0x198] sm:$0xff]
        %v2485 = vld [vmem:[%s6 + $0x1a0] sm:$0xff]
        %v2486 = vld [vmem:[%s6 + $0x1a8] sm:$0xff]
        %v2487 = vld [vmem:[%s6 + $0x1b0] sm:$0xff]
        %v2488 = vld [vmem:[%s6 + $0x1b8] sm:$0xff]
        %v2489 = vld [vmem:[%s6 + $0x1c0] sm:$0xff]
        %v2490 = vld [vmem:[%s6 + $0x1c8] sm:$0xff]
        %v2491 = vld [vmem:[%s6 + $0x1d0] sm:$0xff]
        %v2492 = vld [vmem:[%s6 + $0x1d8] sm:$0xff]
        %v2493 = vld [vmem:[%s6 + $0x1e0] sm:$0xff]
        %v2494 = vld [vmem:[%s6 + $0x1e8] sm:$0xff]
        %v2495 = vld [vmem:[%s6 + $0x1f0] sm:$0xff]
        %v2496 = vld [vmem:[%s6 + $0x1f8] sm:$0xff]
        %v2497 = vld [vmem:[%s6 + $0x200] sm:$0xff]
        %v2498 = vld [vmem:[%s6 + $0x208] sm:$0xff]
        %v2499 = vld [vmem:[%s6 + $0x210] sm:$0xff]
        %v2500 = vld [vmem:[%s6 + $0x218] sm:$0xff]
        %v2501 = vld [vmem:[%s6 + $0x220] sm:$0xff]
        %v2502 = vld [vmem:[%s6 + $0x228] sm:$0xff]
        %v2503 = vld [vmem:[%s6 + $0x230] sm:$0xff]
        %v2504 = vld [vmem:[%s6 + $0x238] sm:$0xff]
        %v2577 = vunpack.c.l.b16 %v2433
        %v2578 = vunpack.c.h.b16 %v2433
        %v2579 = vunpack.c.l.b16 %v2434
        %v2580 = vunpack.c.h.b16 %v2434
        %v2581 = vunpack.c.l.b16 %v2435
        %v2582 = vunpack.c.h.b16 %v2435
        %v2583 = vunpack.c.l.b16 %v2436
        %v2584 = vunpack.c.h.b16 %v2436
        %v2585 = vunpack.c.l.b16 %v2437
        %v2586 = vunpack.c.h.b16 %v2437
        %v2587 = vunpack.c.l.b16 %v2438
        %v2588 = vunpack.c.h.b16 %v2438
        %v2589 = vunpack.c.l.b16 %v2439
        %v2590 = vunpack.c.h.b16 %v2439
        %v2591 = vunpack.c.l.b16 %v2440
        %v2592 = vunpack.c.h.b16 %v2440
        %v2593 = vunpack.c.l.b16 %v2441
        %v2594 = vunpack.c.h.b16 %v2441
        %v2595 = vunpack.c.l.b16 %v2442
        %v2596 = vunpack.c.h.b16 %v2442
        %v2597 = vunpack.c.l.b16 %v2443
        %v2598 = vunpack.c.h.b16 %v2443
        %v2599 = vunpack.c.l.b16 %v2444
        %v2600 = vunpack.c.h.b16 %v2444
        %v2601 = vunpack.c.l.b16 %v2445
        %v2602 = vunpack.c.h.b16 %v2445
        %v2603 = vunpack.c.l.b16 %v2446
        %v2604 = vunpack.c.h.b16 %v2446
        %v2605 = vunpack.c.l.b16 %v2447
        %v2606 = vunpack.c.h.b16 %v2447
        %v2607 = vunpack.c.l.b16 %v2448
        %v2608 = vunpack.c.h.b16 %v2448
        %v2609 = vunpack.c.l.b16 %v2449
        %v2610 = vunpack.c.h.b16 %v2449
        %v2611 = vunpack.c.l.b16 %v2450
        %v2612 = vunpack.c.h.b16 %v2450
        %v2613 = vunpack.c.l.b16 %v2451
        %v2614 = vunpack.c.h.b16 %v2451
        %v2615 = vunpack.c.l.b16 %v2452
        %v2616 = vunpack.c.h.b16 %v2452
        %v2617 = vunpack.c.l.b16 %v2453
        %v2618 = vunpack.c.h.b16 %v2453
        %v2619 = vunpack.c.l.b16 %v2454
        %v2620 = vunpack.c.h.b16 %v2454
        %v2621 = vunpack.c.l.b16 %v2455
        %v2622 = vunpack.c.h.b16 %v2455
        %v2623 = vunpack.c.l.b16 %v2456
        %v2624 = vunpack.c.h.b16 %v2456
        %v2625 = vunpack.c.l.b16 %v2457
        %v2626 = vunpack.c.h.b16 %v2457
        %v2627 = vunpack.c.l.b16 %v2458
        %v2628 = vunpack.c.h.b16 %v2458
        %v2629 = vunpack.c.l.b16 %v2459
        %v2630 = vunpack.c.h.b16 %v2459
        %v2631 = vunpack.c.l.b16 %v2460
        %v2632 = vunpack.c.h.b16 %v2460
        %v2633 = vunpack.c.l.b16 %v2461
        %v2634 = vunpack.c.h.b16 %v2461
        %v2635 = vunpack.c.l.b16 %v2462
        %v2636 = vunpack.c.h.b16 %v2462
        %v2637 = vunpack.c.l.b16 %v2463
        %v2638 = vunpack.c.h.b16 %v2463
        %v2639 = vunpack.c.l.b16 %v2464
        %v2640 = vunpack.c.h.b16 %v2464
        %v2641 = vunpack.c.l.b16 %v2465
        %v2642 = vunpack.c.h.b16 %v2465
        %v2643 = vunpack.c.l.b16 %v2466
        %v2644 = vunpack.c.h.b16 %v2466
        %v2645 = vunpack.c.l.b16 %v2467
        %v2646 = vunpack.c.h.b16 %v2467
        %v2647 = vunpack.c.l.b16 %v2468
        %v2648 = vunpack.c.h.b16 %v2468
        %v2649 = vunpack.c.l.b16 %v2469
        %v2650 = vunpack.c.h.b16 %v2469
        %v2651 = vunpack.c.l.b16 %v2470
        %v2652 = vunpack.c.h.b16 %v2470
        %v2653 = vunpack.c.l.b16 %v2471
        %v2654 = vunpack.c.h.b16 %v2471
        %v2655 = vunpack.c.l.b16 %v2472
        %v2656 = vunpack.c.h.b16 %v2472
        %v2657 = vunpack.c.l.b16 %v2473
        %v2658 = vunpack.c.h.b16 %v2473
        %v2659 = vunpack.c.l.b16 %v2474
        %v2660 = vunpack.c.h.b16 %v2474
        %v2661 = vunpack.c.l.b16 %v2475
        %v2662 = vunpack.c.h.b16 %v2475
        %v2663 = vunpack.c.l.b16 %v2476
        %v2664 = vunpack.c.h.b16 %v2476
        %v2665 = vunpack.c.l.b16 %v2477
        %v2666 = vunpack.c.h.b16 %v2477
        %v2667 = vunpack.c.l.b16 %v2478
        %v2668 = vunpack.c.h.b16 %v2478
        %v2669 = vunpack.c.l.b16 %v2479
        %v2670 = vunpack.c.h.b16 %v2479
        %v2671 = vunpack.c.l.b16 %v2480
        %v2672 = vunpack.c.h.b16 %v2480
        %v2673 = vunpack.c.l.b16 %v2481
        %v2674 = vunpack.c.h.b16 %v2481
        %v2675 = vunpack.c.l.b16 %v2482
        %v2676 = vunpack.c.h.b16 %v2482
        %v2677 = vunpack.c.l.b16 %v2483
        %v2678 = vunpack.c.h.b16 %v2483
        %v2679 = vunpack.c.l.b16 %v2484
        %v2680 = vunpack.c.h.b16 %v2484
        %v2681 = vunpack.c.l.b16 %v2485
        %v2682 = vunpack.c.h.b16 %v2485
        %v2683 = vunpack.c.l.b16 %v2486
        %v2684 = vunpack.c.h.b16 %v2486
        %v2685 = vunpack.c.l.b16 %v2487
        %v2686 = vunpack.c.h.b16 %v2487
        %v2687 = vunpack.c.l.b16 %v2488
        %v2688 = vunpack.c.h.b16 %v2488
        %v2689 = vunpack.c.l.b16 %v2489
        %v2690 = vunpack.c.h.b16 %v2489
        %v2691 = vunpack.c.l.b16 %v2490
        %v2692 = vunpack.c.h.b16 %v2490
        %v2693 = vunpack.c.l.b16 %v2491
        %v2694 = vunpack.c.h.b16 %v2491
        %v2695 = vunpack.c.l.b16 %v2492
        %v2696 = vunpack.c.h.b16 %v2492
        %v2697 = vunpack.c.l.b16 %v2493
        %v2698 = vunpack.c.h.b16 %v2493
        %v2699 = vunpack.c.l.b16 %v2494
        %v2700 = vunpack.c.h.b16 %v2494
        %v2701 = vunpack.c.l.b16 %v2495
        %v2702 = vunpack.c.h.b16 %v2495
        %v2703 = vunpack.c.l.b16 %v2496
        %v2704 = vunpack.c.h.b16 %v2496
        %v2705 = vunpack.c.l.b16 %v2497
        %v2706 = vunpack.c.h.b16 %v2497
        %v2707 = vunpack.c.l.b16 %v2498
        %v2708 = vunpack.c.h.b16 %v2498
        %v2709 = vunpack.c.l.b16 %v2499
        %v2710 = vunpack.c.h.b16 %v2499
        %v2711 = vunpack.c.l.b16 %v2500
        %v2712 = vunpack.c.h.b16 %v2500
        %v2713 = vunpack.c.l.b16 %v2501
        %v2714 = vunpack.c.h.b16 %v2501
        %v2715 = vunpack.c.l.b16 %v2502
        %v2716 = vunpack.c.h.b16 %v2502
        %v2717 = vunpack.c.l.b16 %v2503
        %v2718 = vunpack.c.h.b16 %v2503
        %v2719 = vunpack.c.l.b16 %v2504
        %v2720 = vunpack.c.h.b16 %v2504
        %v2721 = vpack.c.b16 %v2581, %v2577
        %v2722 = vpack.c.b16 %v2582, %v2578
        %v2723 = vpack.c.b16 %v2583, %v2579
        %v2724 = vpack.c.b16 %v2584, %v2580
        %v2725 = vpack.c.b16 %v2589, %v2585
        %v2726 = vpack.c.b16 %v2590, %v2586
        %v2727 = vpack.c.b16 %v2591, %v2587
        %v2728 = vpack.c.b16 %v2592, %v2588
        %v2729 = vpack.c.b16 %v2597, %v2593
        %v2730 = vpack.c.b16 %v2598, %v2594
        %v2731 = vpack.c.b16 %v2599, %v2595
        %v2732 = vpack.c.b16 %v2600, %v2596
        %v2733 = vpack.c.b16 %v2605, %v2601
        %v2734 = vpack.c.b16 %v2606, %v2602
        %v2735 = vpack.c.b16 %v2607, %v2603
        %v2736 = vpack.c.b16 %v2608, %v2604
        %v2737 = vpack.c.b16 %v2613, %v2609
        %v2738 = vpack.c.b16 %v2614, %v2610
        %v2739 = vpack.c.b16 %v2615, %v2611
        %v2740 = vpack.c.b16 %v2616, %v2612
        %v2741 = vpack.c.b16 %v2621, %v2617
        %v2742 = vpack.c.b16 %v2622, %v2618
        %v2743 = vpack.c.b16 %v2623, %v2619
        %v2744 = vpack.c.b16 %v2624, %v2620
        %v2745 = vpack.c.b16 %v2629, %v2625
        %v2746 = vpack.c.b16 %v2630, %v2626
        %v2747 = vpack.c.b16 %v2631, %v2627
        %v2748 = vpack.c.b16 %v2632, %v2628
        %v2749 = vpack.c.b16 %v2637, %v2633
        %v2750 = vpack.c.b16 %v2638, %v2634
        %v2751 = vpack.c.b16 %v2639, %v2635
        %v2752 = vpack.c.b16 %v2640, %v2636
        %v2753 = vpack.c.b16 %v2645, %v2641
        %v2754 = vpack.c.b16 %v2646, %v2642
        %v2755 = vpack.c.b16 %v2647, %v2643
        %v2756 = vpack.c.b16 %v2648, %v2644
        %v2757 = vpack.c.b16 %v2653, %v2649
        %v2758 = vpack.c.b16 %v2654, %v2650
        %v2759 = vpack.c.b16 %v2655, %v2651
        %v2760 = vpack.c.b16 %v2656, %v2652
        %v2761 = vpack.c.b16 %v2661, %v2657
        %v2762 = vpack.c.b16 %v2662, %v2658
        %v2763 = vpack.c.b16 %v2663, %v2659
        %v2764 = vpack.c.b16 %v2664, %v2660
        %v2765 = vpack.c.b16 %v2669, %v2665
        %v2766 = vpack.c.b16 %v2670, %v2666
        %v2767 = vpack.c.b16 %v2671, %v2667
        %v2768 = vpack.c.b16 %v2672, %v2668
        %v2769 = vpack.c.b16 %v2677, %v2673
        %v2770 = vpack.c.b16 %v2678, %v2674
        %v2771 = vpack.c.b16 %v2679, %v2675
        %v2772 = vpack.c.b16 %v2680, %v2676
        %v2773 = vpack.c.b16 %v2685, %v2681
        %v2774 = vpack.c.b16 %v2686, %v2682
        %v2775 = vpack.c.b16 %v2687, %v2683
        %v2776 = vpack.c.b16 %v2688, %v2684
        %v2777 = vpack.c.b16 %v2693, %v2689
        %v2778 = vpack.c.b16 %v2694, %v2690
        %v2779 = vpack.c.b16 %v2695, %v2691
        %v2780 = vpack.c.b16 %v2696, %v2692
        %v2781 = vpack.c.b16 %v2701, %v2697
        %v2782 = vpack.c.b16 %v2702, %v2698
        %v2783 = vpack.c.b16 %v2703, %v2699
        %v2784 = vpack.c.b16 %v2704, %v2700
        %v2785 = vpack.c.b16 %v2709, %v2705
        %v2786 = vpack.c.b16 %v2710, %v2706
        %v2787 = vpack.c.b16 %v2711, %v2707
        %v2788 = vpack.c.b16 %v2712, %v2708
        %v2789 = vpack.c.b16 %v2717, %v2713
        %v2790 = vpack.c.b16 %v2718, %v2714
        %v2791 = vpack.c.b16 %v2719, %v2715
        %v2792 = vpack.c.b16 %v2720, %v2716
        %v2866 = vsel %vm2246, %v2360, 0
        %2868 = vmatprep.subr.bf16.mxu0 %v2722
        %2869 = vmatpush1.bf16.msra.mxu0 %v2721
        %2870 = vmatprep.subr.bf16.mxu0 %v2726
        %2871 = vmatpush1.bf16.msra.mxu0 %v2725
        %2872 = vmatprep.subr.bf16.mxu0 %v2730
        %2873 = vmatpush1.bf16.msra.mxu0 %v2729
        %2874 = vmatprep.subr.bf16.mxu0 %v2734
        %2875 = vmatpush1.bf16.msra.mxu0 %v2733
        %2876 = vmatprep.subr.bf16.mxu0 %v2738
        %2877 = vmatpush1.bf16.msra.mxu0 %v2737
        %2878 = vmatprep.subr.bf16.mxu0 %v2742
        %2879 = vmatpush1.bf16.msra.mxu0 %v2741
        %2880 = vmatprep.subr.bf16.mxu0 %v2746
        %2881 = vmatpush1.bf16.msra.mxu0 %v2745
        %2882 = vmatprep.subr.bf16.mxu0 %v2750
        %2883 = vmatpush1.bf16.msra.mxu0 %v2749
        %2884 = vmatprep.subr.bf16.mxu0 %v2754
        %2885 = vmatpush1.bf16.msra.mxu0 %v2753
        %2886 = vmatprep.subr.bf16.mxu0 %v2758
        %2887 = vmatpush1.bf16.msra.mxu0 %v2757
        %2888 = vmatprep.subr.bf16.mxu0 %v2762
        %2889 = vmatpush1.bf16.msra.mxu0 %v2761
        %2890 = vmatprep.subr.bf16.mxu0 %v2766
        %2891 = vmatpush1.bf16.msra.mxu0 %v2765
        %2892 = vmatprep.subr.bf16.mxu0 %v2770
        %2893 = vmatpush1.bf16.msra.mxu0 %v2769
        %2894 = vmatprep.subr.bf16.mxu0 %v2774
        %2895 = vmatpush1.bf16.msra.mxu0 %v2773
        %2896 = vmatprep.subr.bf16.mxu0 %v2778
        %2897 = vmatpush1.bf16.msra.mxu0 %v2777
        %2898 = vmatprep.subr.bf16.mxu0 %v2782
        %2899 = vmatpush1.bf16.msra.mxu0 %v2781
        %2900 = vmatprep.mubr.bf16.mxu0 %v2359
        %2901 = vmatmul.mubr.bf16.gmra.mrb[0].mxu0 %v2358
        %v2902 = vpop.f32.mrb[0].mxu0
        %v2903 = vadd.f32 0.0, %v2902
        %v2904 = vpop.f32.mrb[0].mxu0
        %v2905 = vadd.f32 0.0, %v2904
        %v2906 = vpop.f32.mrb[0].mxu0
        %v2907 = vadd.f32 0.0, %v2906
        %v2908 = vpop.f32.mrb[0].mxu0
        %v2909 = vadd.f32 0.0, %v2908
        %2910 = vdwg.mxu0
        %2911 = vmatprep.subr.bf16.mxu0 %v2786
        %2912 = vmatpush1.bf16.msra.mxu0 %v2785
        %2913 = vmatprep.subr.bf16.mxu0 %v2790
        %2914 = vmatpush1.bf16.msra.mxu0 %v2789
        %2915 = vmatprep.subr.bf16.mxu0 0
        %2916 = vmatpush1.bf16.msra.mxu0 0
        %2917 = vmatprep.subr.bf16.mxu0 0
        %2918 = vmatpush1.bf16.msra.mxu0 0
        %2919 = vmatprep.subr.bf16.mxu0 0
        %2920 = vmatpush1.bf16.msra.mxu0 0
        %2921 = vmatprep.subr.bf16.mxu0 0
        %2922 = vmatpush1.bf16.msra.mxu0 0
        %2923 = vmatprep.subr.bf16.mxu0 0
        %2924 = vmatpush1.bf16.msra.mxu0 0
        %2925 = vmatprep.subr.bf16.mxu0 0
        %2926 = vmatpush1.bf16.msra.mxu0 0
        %2927 = vmatprep.subr.bf16.mxu0 0
        %2928 = vmatpush1.bf16.msra.mxu0 0
        %2929 = vmatprep.subr.bf16.mxu0 0
        %2930 = vmatpush1.bf16.msra.mxu0 0
        %2931 = vmatprep.subr.bf16.mxu0 0
        %2932 = vmatpush1.bf16.msra.mxu0 0
        %2933 = vmatprep.subr.bf16.mxu0 0
        %2934 = vmatpush1.bf16.msra.mxu0 0
        %2935 = vmatprep.subr.bf16.mxu0 0
        %2936 = vmatpush1.bf16.msra.mxu0 0
        %2937 = vmatprep.subr.bf16.mxu0 0
        %2938 = vmatpush1.bf16.msra.mxu0 0
        %2939 = vmatprep.subr.bf16.mxu0 0
        %2940 = vmatpush1.bf16.msra.mxu0 0
        %2941 = vmatprep.subr.bf16.mxu0 0
        %2942 = vmatpush1.bf16.msra.mxu0 0
        %2943 = vmatprep.mubr.bf16.mxu0 0
        %2944 = vmatmul.mubr.bf16.gmra.mrb[0].mxu0 %v2866
        %v2945 = vpop.f32.mrb[0].mxu0
        %v2946 = vadd.f32 %v2903, %v2945
        %v2947 = vpop.f32.mrb[0].mxu0
        %v2948 = vadd.f32 %v2905, %v2947
        %v2949 = vpop.f32.mrb[0].mxu0
        %v2950 = vadd.f32 %v2907, %v2949
        %v2951 = vpop.f32.mrb[0].mxu0
        %v2952 = vadd.f32 %v2909, %v2951
        %2953 = vdwg.mxu0
        %2954 = vmatprep.subr.bf16.mxu0 %v2724
        %2955 = vmatpush1.bf16.msra.mxu0 %v2723
        %2956 = vmatprep.subr.bf16.mxu0 %v2728
        %2957 = vmatpush1.bf16.msra.mxu0 %v2727
        %2958 = vmatprep.subr.bf16.mxu0 %v2732
        %2959 = vmatpush1.bf16.msra.mxu0 %v2731
        %2960 = vmatprep.subr.bf16.mxu0 %v2736
        %2961 = vmatpush1.bf16.msra.mxu0 %v2735
        %2962 = vmatprep.subr.bf16.mxu0 %v2740
        %2963 = vmatpush1.bf16.msra.mxu0 %v2739
        %2964 = vmatprep.subr.bf16.mxu0 %v2744
        %2965 = vmatpush1.bf16.msra.mxu0 %v2743
        %2966 = vmatprep.subr.bf16.mxu0 %v2748
        %2967 = vmatpush1.bf16.msra.mxu0 %v2747
        %2968 = vmatprep.subr.bf16.mxu0 %v2752
        %2969 = vmatpush1.bf16.msra.mxu0 %v2751
        %2970 = vmatprep.subr.bf16.mxu0 %v2756
        %2971 = vmatpush1.bf16.msra.mxu0 %v2755
        %2972 = vmatprep.subr.bf16.mxu0 %v2760
        %2973 = vmatpush1.bf16.msra.mxu0 %v2759
        %2974 = vmatprep.subr.bf16.mxu0 %v2764
        %2975 = vmatpush1.bf16.msra.mxu0 %v2763
        %2976 = vmatprep.subr.bf16.mxu0 %v2768
        %2977 = vmatpush1.bf16.msra.mxu0 %v2767
        %2978 = vmatprep.subr.bf16.mxu0 %v2772
        %2979 = vmatpush1.bf16.msra.mxu0 %v2771
        %2980 = vmatprep.subr.bf16.mxu0 %v2776
        %2981 = vmatpush1.bf16.msra.mxu0 %v2775
        %2982 = vmatprep.subr.bf16.mxu0 %v2780
        %2983 = vmatpush1.bf16.msra.mxu0 %v2779
        %2984 = vmatprep.subr.bf16.mxu0 %v2784
        %2985 = vmatpush1.bf16.msra.mxu0 %v2783
        %2986 = vmatprep.mubr.bf16.mxu0 %v2359
        %2987 = vmatmul.mubr.bf16.gmra.mrb[0].mxu0 %v2358
        %v2988 = vpop.f32.mrb[0].mxu0
        %v2989 = vadd.f32 0.0, %v2988
        %v2990 = vpop.f32.mrb[0].mxu0
        %v2991 = vadd.f32 0.0, %v2990
        %v2992 = vpop.f32.mrb[0].mxu0
        %v2993 = vadd.f32 0.0, %v2992
        %v2994 = vpop.f32.mrb[0].mxu0
        %v2995 = vadd.f32 0.0, %v2994
        %2996 = vdwg.mxu0
        %2997 = vmatprep.subr.bf16.mxu0 %v2788
        %2998 = vmatpush1.bf16.msra.mxu0 %v2787
        %2999 = vmatprep.subr.bf16.mxu0 %v2792
        %3000 = vmatpush1.bf16.msra.mxu0 %v2791
        %3001 = vmatprep.subr.bf16.mxu0 0
        %3002 = vmatpush1.bf16.msra.mxu0 0
        %3003 = vmatprep.subr.bf16.mxu0 0
        %3004 = vmatpush1.bf16.msra.mxu0 0
        %3005 = vmatprep.subr.bf16.mxu0 0
        %3006 = vmatpush1.bf16.msra.mxu0 0
        %3007 = vmatprep.subr.bf16.mxu0 0
        %3008 = vmatpush1.bf16.msra.mxu0 0
        %3009 = vmatprep.subr.bf16.mxu0 0
        %3010 = vmatpush1.bf16.msra.mxu0 0
        %3011 = vmatprep.subr.bf16.mxu0 0
        %3012 = vmatpush1.bf16.msra.mxu0 0
        %3013 = vmatprep.subr.bf16.mxu0 0
        %3014 = vmatpush1.bf16.msra.mxu0 0
        %3015 = vmatprep.subr.bf16.mxu0 0
        %3016 = vmatpush1.bf16.msra.mxu0 0
        %3017 = vmatprep.subr.bf16.mxu0 0
        %3018 = vmatpush1.bf16.msra.mxu0 0
        %3019 = vmatprep.subr.bf16.mxu0 0
        %3020 = vmatpush1.bf16.msra.mxu0 0
        %3021 = vmatprep.subr.bf16.mxu0 0
        %3022 = vmatpush1.bf16.msra.mxu0 0
        %3023 = vmatprep.subr.bf16.mxu0 0
        %3024 = vmatpush1.bf16.msra.mxu0 0
        %3025 = vmatprep.subr.bf16.mxu0 0
        %3026 = vmatpush1.bf16.msra.mxu0 0
        %3027 = vmatprep.subr.bf16.mxu0 0
        %3028 = vmatpush1.bf16.msra.mxu0 0
        %3029 = vmatprep.mubr.bf16.mxu0 0
        %3030 = vmatmul.mubr.bf16.gmra.mrb[0].mxu0 %v2866
        %v3031 = vpop.f32.mrb[0].mxu0
        %v3032 = vadd.f32 %v2989, %v3031
        %v3033 = vpop.f32.mrb[0].mxu0
        %v3034 = vadd.f32 %v2991, %v3033
        %v3035 = vpop.f32.mrb[0].mxu0
        %v3036 = vadd.f32 %v2993, %v3035
        %v3037 = vpop.f32.mrb[0].mxu0
        %v3038 = vadd.f32 %v2995, %v3037
        %3039 = vdwg.mxu0
        %v3112 = vunpack.c.l.b16 %v2361
        %v3113 = vunpack.c.h.b16 %v2361
        %v3114 = vunpack.c.l.b16 %v2362
        %v3115 = vunpack.c.h.b16 %v2362
        %v3116 = vunpack.c.l.b16 %v2363
        %v3117 = vunpack.c.h.b16 %v2363
        %v3118 = vunpack.c.l.b16 %v2364
        %v3119 = vunpack.c.h.b16 %v2364
        %v3120 = vunpack.c.l.b16 %v2365
        %v3121 = vunpack.c.h.b16 %v2365
        %v3122 = vunpack.c.l.b16 %v2366
        %v3123 = vunpack.c.h.b16 %v2366
        %v3124 = vunpack.c.l.b16 %v2367
        %v3125 = vunpack.c.h.b16 %v2367
        %v3126 = vunpack.c.l.b16 %v2368
        %v3127 = vunpack.c.h.b16 %v2368
        %v3128 = vunpack.c.l.b16 %v2369
        %v3129 = vunpack.c.h.b16 %v2369
        %v3130 = vunpack.c.l.b16 %v2370
        %v3131 = vunpack.c.h.b16 %v2370
        %v3132 = vunpack.c.l.b16 %v2371
        %v3133 = vunpack.c.h.b16 %v2371
        %v3134 = vunpack.c.l.b16 %v2372
        %v3135 = vunpack.c.h.b16 %v2372
        %v3136 = vunpack.c.l.b16 %v2373
        %v3137 = vunpack.c.h.b16 %v2373
        %v3138 = vunpack.c.l.b16 %v2374
        %v3139 = vunpack.c.h.b16 %v2374
        %v3140 = vunpack.c.l.b16 %v2375
        %v3141 = vunpack.c.h.b16 %v2375
        %v3142 = vunpack.c.l.b16 %v2376
        %v3143 = vunpack.c.h.b16 %v2376
        %v3144 = vunpack.c.l.b16 %v2377
        %v3145 = vunpack.c.h.b16 %v2377
        %v3146 = vunpack.c.l.b16 %v2378
        %v3147 = vunpack.c.h.b16 %v2378
        %v3148 = vunpack.c.l.b16 %v2379
        %v3149 = vunpack.c.h.b16 %v2379
        %v3150 = vunpack.c.l.b16 %v2380
        %v3151 = vunpack.c.h.b16 %v2380
        %v3152 = vunpack.c.l.b16 %v2381
        %v3153 = vunpack.c.h.b16 %v2381
        %v3154 = vunpack.c.l.b16 %v2382
        %v3155 = vunpack.c.h.b16 %v2382
        %v3156 = vunpack.c.l.b16 %v2383
        %v3157 = vunpack.c.h.b16 %v2383
        %v3158 = vunpack.c.l.b16 %v2384
        %v3159 = vunpack.c.h.b16 %v2384
        %v3160 = vunpack.c.l.b16 %v2385
        %v3161 = vunpack.c.h.b16 %v2385
        %v3162 = vunpack.c.l.b16 %v2386
        %v3163 = vunpack.c.h.b16 %v2386
        %v3164 = vunpack.c.l.b16 %v2387
        %v3165 = vunpack.c.h.b16 %v2387
        %v3166 = vunpack.c.l.b16 %v2388
        %v3167 = vunpack.c.h.b16 %v2388
        %v3168 = vunpack.c.l.b16 %v2389
        %v3169 = vunpack.c.h.b16 %v2389
        %v3170 = vunpack.c.l.b16 %v2390
        %v3171 = vunpack.c.h.b16 %v2390
        %v3172 = vunpack.c.l.b16 %v2391
        %v3173 = vunpack.c.h.b16 %v2391
        %v3174 = vunpack.c.l.b16 %v2392
        %v3175 = vunpack.c.h.b16 %v2392
        %v3176 = vunpack.c.l.b16 %v2393
        %v3177 = vunpack.c.h.b16 %v2393
        %v3178 = vunpack.c.l.b16 %v2394
        %v3179 = vunpack.c.h.b16 %v2394
        %v3180 = vunpack.c.l.b16 %v2395
        %v3181 = vunpack.c.h.b16 %v2395
        %v3182 = vunpack.c.l.b16 %v2396
        %v3183 = vunpack.c.h.b16 %v2396
        %v3184 = vunpack.c.l.b16 %v2397
        %v3185 = vunpack.c.h.b16 %v2397
        %v3186 = vunpack.c.l.b16 %v2398
        %v3187 = vunpack.c.h.b16 %v2398
        %v3188 = vunpack.c.l.b16 %v2399
        %v3189 = vunpack.c.h.b16 %v2399
        %v3190 = vunpack.c.l.b16 %v2400
        %v3191 = vunpack.c.h.b16 %v2400
        %v3192 = vunpack.c.l.b16 %v2401
        %v3193 = vunpack.c.h.b16 %v2401
        %v3194 = vunpack.c.l.b16 %v2402
        %v3195 = vunpack.c.h.b16 %v2402
        %v3196 = vunpack.c.l.b16 %v2403
        %v3197 = vunpack.c.h.b16 %v2403
        %v3198 = vunpack.c.l.b16 %v2404
        %v3199 = vunpack.c.h.b16 %v2404
        %v3200 = vunpack.c.l.b16 %v2405
        %v3201 = vunpack.c.h.b16 %v2405
        %v3202 = vunpack.c.l.b16 %v2406
        %v3203 = vunpack.c.h.b16 %v2406
        %v3204 = vunpack.c.l.b16 %v2407
        %v3205 = vunpack.c.h.b16 %v2407
        %v3206 = vunpack.c.l.b16 %v2408
        %v3207 = vunpack.c.h.b16 %v2408
        %v3208 = vunpack.c.l.b16 %v2409
        %v3209 = vunpack.c.h.b16 %v2409
        %v3210 = vunpack.c.l.b16 %v2410
        %v3211 = vunpack.c.h.b16 %v2410
        %v3212 = vunpack.c.l.b16 %v2411
        %v3213 = vunpack.c.h.b16 %v2411
        %v3214 = vunpack.c.l.b16 %v2412
        %v3215 = vunpack.c.h.b16 %v2412
        %v3216 = vunpack.c.l.b16 %v2413
        %v3217 = vunpack.c.h.b16 %v2413
        %v3218 = vunpack.c.l.b16 %v2414
        %v3219 = vunpack.c.h.b16 %v2414
        %v3220 = vunpack.c.l.b16 %v2415
        %v3221 = vunpack.c.h.b16 %v2415
        %v3222 = vunpack.c.l.b16 %v2416
        %v3223 = vunpack.c.h.b16 %v2416
        %v3224 = vunpack.c.l.b16 %v2417
        %v3225 = vunpack.c.h.b16 %v2417
        %v3226 = vunpack.c.l.b16 %v2418
        %v3227 = vunpack.c.h.b16 %v2418
        %v3228 = vunpack.c.l.b16 %v2419
        %v3229 = vunpack.c.h.b16 %v2419
        %v3230 = vunpack.c.l.b16 %v2420
        %v3231 = vunpack.c.h.b16 %v2420
        %v3232 = vunpack.c.l.b16 %v2421
        %v3233 = vunpack.c.h.b16 %v2421
        %v3234 = vunpack.c.l.b16 %v2422
        %v3235 = vunpack.c.h.b16 %v2422
        %v3236 = vunpack.c.l.b16 %v2423
        %v3237 = vunpack.c.h.b16 %v2423
        %v3238 = vunpack.c.l.b16 %v2424
        %v3239 = vunpack.c.h.b16 %v2424
        %v3240 = vunpack.c.l.b16 %v2425
        %v3241 = vunpack.c.h.b16 %v2425
        %v3242 = vunpack.c.l.b16 %v2426
        %v3243 = vunpack.c.h.b16 %v2426
        %v3244 = vunpack.c.l.b16 %v2427
        %v3245 = vunpack.c.h.b16 %v2427
        %v3246 = vunpack.c.l.b16 %v2428
        %v3247 = vunpack.c.h.b16 %v2428
        %v3248 = vunpack.c.l.b16 %v2429
        %v3249 = vunpack.c.h.b16 %v2429
        %v3250 = vunpack.c.l.b16 %v2430
        %v3251 = vunpack.c.h.b16 %v2430
        %v3252 = vunpack.c.l.b16 %v2431
        %v3253 = vunpack.c.h.b16 %v2431
        %v3254 = vunpack.c.l.b16 %v2432
        %v3255 = vunpack.c.h.b16 %v2432
        %v3256 = vpack.c.b16 %v3116, %v3112
        %v3257 = vpack.c.b16 %v3117, %v3113
        %v3258 = vpack.c.b16 %v3118, %v3114
        %v3259 = vpack.c.b16 %v3119, %v3115
        %v3260 = vpack.c.b16 %v3124, %v3120
        %v3261 = vpack.c.b16 %v3125, %v3121
        %v3262 = vpack.c.b16 %v3126, %v3122
        %v3263 = vpack.c.b16 %v3127, %v3123
        %v3264 = vpack.c.b16 %v3132, %v3128
        %v3265 = vpack.c.b16 %v3133, %v3129
        %v3266 = vpack.c.b16 %v3134, %v3130
        %v3267 = vpack.c.b16 %v3135, %v3131
        %v3268 = vpack.c.b16 %v3140, %v3136
        %v3269 = vpack.c.b16 %v3141, %v3137
        %v3270 = vpack.c.b16 %v3142, %v3138
        %v3271 = vpack.c.b16 %v3143, %v3139
        %v3272 = vpack.c.b16 %v3148, %v3144
        %v3273 = vpack.c.b16 %v3149, %v3145
        %v3274 = vpack.c.b16 %v3150, %v3146
        %v3275 = vpack.c.b16 %v3151, %v3147
        %v3276 = vpack.c.b16 %v3156, %v3152
        %v3277 = vpack.c.b16 %v3157, %v3153
        %v3278 = vpack.c.b16 %v3158, %v3154
        %v3279 = vpack.c.b16 %v3159, %v3155
        %v3280 = vpack.c.b16 %v3164, %v3160
        %v3281 = vpack.c.b16 %v3165, %v3161
        %v3282 = vpack.c.b16 %v3166, %v3162
        %v3283 = vpack.c.b16 %v3167, %v3163
        %v3284 = vpack.c.b16 %v3172, %v3168
        %v3285 = vpack.c.b16 %v3173, %v3169
        %v3286 = vpack.c.b16 %v3174, %v3170
        %v3287 = vpack.c.b16 %v3175, %v3171
        %v3288 = vpack.c.b16 %v3180, %v3176
        %v3289 = vpack.c.b16 %v3181, %v3177
        %v3290 = vpack.c.b16 %v3182, %v3178
        %v3291 = vpack.c.b16 %v3183, %v3179
        %v3292 = vpack.c.b16 %v3188, %v3184
        %v3293 = vpack.c.b16 %v3189, %v3185
        %v3294 = vpack.c.b16 %v3190, %v3186
        %v3295 = vpack.c.b16 %v3191, %v3187
        %v3296 = vpack.c.b16 %v3196, %v3192
        %v3297 = vpack.c.b16 %v3197, %v3193
        %v3298 = vpack.c.b16 %v3198, %v3194
        %v3299 = vpack.c.b16 %v3199, %v3195
        %v3300 = vpack.c.b16 %v3204, %v3200
        %v3301 = vpack.c.b16 %v3205, %v3201
        %v3302 = vpack.c.b16 %v3206, %v3202
        %v3303 = vpack.c.b16 %v3207, %v3203
        %v3304 = vpack.c.b16 %v3212, %v3208
        %v3305 = vpack.c.b16 %v3213, %v3209
        %v3306 = vpack.c.b16 %v3214, %v3210
        %v3307 = vpack.c.b16 %v3215, %v3211
        %v3308 = vpack.c.b16 %v3220, %v3216
        %v3309 = vpack.c.b16 %v3221, %v3217
        %v3310 = vpack.c.b16 %v3222, %v3218
        %v3311 = vpack.c.b16 %v3223, %v3219
        %v3312 = vpack.c.b16 %v3228, %v3224
        %v3313 = vpack.c.b16 %v3229, %v3225
        %v3314 = vpack.c.b16 %v3230, %v3226
        %v3315 = vpack.c.b16 %v3231, %v3227
        %v3316 = vpack.c.b16 %v3236, %v3232
        %v3317 = vpack.c.b16 %v3237, %v3233
        %v3318 = vpack.c.b16 %v3238, %v3234
        %v3319 = vpack.c.b16 %v3239, %v3235
        %v3320 = vpack.c.b16 %v3244, %v3240
        %v3321 = vpack.c.b16 %v3245, %v3241
        %v3322 = vpack.c.b16 %v3246, %v3242
        %v3323 = vpack.c.b16 %v3247, %v3243
        %v3324 = vpack.c.b16 %v3252, %v3248
        %v3325 = vpack.c.b16 %v3253, %v3249
        %v3326 = vpack.c.b16 %v3254, %v3250
        %v3327 = vpack.c.b16 %v3255, %v3251
        %v3401 = vsel %vm2246, %v2357, 0
        %3403 = vmatprep.subr.bf16.mxu0 %v3257
        %3404 = vmatpush1.bf16.msra.mxu0 %v3256
        %3405 = vmatprep.subr.bf16.mxu0 %v3261
        %3406 = vmatpush1.bf16.msra.mxu0 %v3260
        %3407 = vmatprep.subr.bf16.mxu0 %v3265
        %3408 = vmatpush1.bf16.msra.mxu0 %v3264
        %3409 = vmatprep.subr.bf16.mxu0 %v3269
        %3410 = vmatpush1.bf16.msra.mxu0 %v3268
        %3411 = vmatprep.subr.bf16.mxu0 %v3273
        %3412 = vmatpush1.bf16.msra.mxu0 %v3272
        %3413 = vmatprep.subr.bf16.mxu0 %v3277
        %3414 = vmatpush1.bf16.msra.mxu0 %v3276
        %3415 = vmatprep.subr.bf16.mxu0 %v3281
        %3416 = vmatpush1.bf16.msra.mxu0 %v3280
        %3417 = vmatprep.subr.bf16.mxu0 %v3285
        %3418 = vmatpush1.bf16.msra.mxu0 %v3284
        %3419 = vmatprep.subr.bf16.mxu0 %v3289
        %3420 = vmatpush1.bf16.msra.mxu0 %v3288
        %3421 = vmatprep.subr.bf16.mxu0 %v3293
        %3422 = vmatpush1.bf16.msra.mxu0 %v3292
        %3423 = vmatprep.subr.bf16.mxu0 %v3297
        %3424 = vmatpush1.bf16.msra.mxu0 %v3296
        %3425 = vmatprep.subr.bf16.mxu0 %v3301
        %3426 = vmatpush1.bf16.msra.mxu0 %v3300
        %3427 = vmatprep.subr.bf16.mxu0 %v3305
        %3428 = vmatpush1.bf16.msra.mxu0 %v3304
        %3429 = vmatprep.subr.bf16.mxu0 %v3309
        %3430 = vmatpush1.bf16.msra.mxu0 %v3308
        %3431 = vmatprep.subr.bf16.mxu0 %v3313
        %3432 = vmatpush1.bf16.msra.mxu0 %v3312
        %3433 = vmatprep.subr.bf16.mxu0 %v3317
        %3434 = vmatpush1.bf16.msra.mxu0 %v3316
        %3435 = vmatprep.mubr.bf16.mxu0 %v2356
        %3436 = vmatmul.mubr.bf16.gmra.mrb[0].mxu0 %v2355
        %v3437 = vpop.f32.mrb[0].mxu0
        %v3438 = vadd.f32 %v2946, %v3437
        %v3439 = vpop.f32.mrb[0].mxu0
        %v3440 = vadd.f32 %v2948, %v3439
        %v3441 = vpop.f32.mrb[0].mxu0
        %v3442 = vadd.f32 %v2950, %v3441
        %v3443 = vpop.f32.mrb[0].mxu0
        %v3444 = vadd.f32 %v2952, %v3443
        %3445 = vdwg.mxu0
        %3446 = vmatprep.subr.bf16.mxu0 %v3321
        %3447 = vmatpush1.bf16.msra.mxu0 %v3320
        %3448 = vmatprep.subr.bf16.mxu0 %v3325
        %3449 = vmatpush1.bf16.msra.mxu0 %v3324
        %3450 = vmatprep.subr.bf16.mxu0 0
        %3451 = vmatpush1.bf16.msra.mxu0 0
        %3452 = vmatprep.subr.bf16.mxu0 0
        %3453 = vmatpush1.bf16.msra.mxu0 0
        %3454 = vmatprep.subr.bf16.mxu0 0
        %3455 = vmatpush1.bf16.msra.mxu0 0
        %3456 = vmatprep.subr.bf16.mxu0 0
        %3457 = vmatpush1.bf16.msra.mxu0 0
        %3458 = vmatprep.subr.bf16.mxu0 0
        %3459 = vmatpush1.bf16.msra.mxu0 0
        %3460 = vmatprep.subr.bf16.mxu0 0
        %3461 = vmatpush1.bf16.msra.mxu0 0
        %3462 = vmatprep.subr.bf16.mxu0 0
        %3463 = vmatpush1.bf16.msra.mxu0 0
        %3464 = vmatprep.subr.bf16.mxu0 0
        %3465 = vmatpush1.bf16.msra.mxu0 0
        %3466 = vmatprep.subr.bf16.mxu0 0
        %3467 = vmatpush1.bf16.msra.mxu0 0
        %3468 = vmatprep.subr.bf16.mxu0 0
        %3469 = vmatpush1.bf16.msra.mxu0 0
        %3470 = vmatprep.subr.bf16.mxu0 0
        %3471 = vmatpush1.bf16.msra.mxu0 0
        %3472 = vmatprep.subr.bf16.mxu0 0
        %3473 = vmatpush1.bf16.msra.mxu0 0
        %3474 = vmatprep.subr.bf16.mxu0 0
        %3475 = vmatpush1.bf16.msra.mxu0 0
        %3476 = vmatprep.subr.bf16.mxu0 0
        %3477 = vmatpush1.bf16.msra.mxu0 0
        %3478 = vmatprep.mubr.bf16.mxu0 0
        %3479 = vmatmul.mubr.bf16.gmra.mrb[0].mxu0 %v3401
        %v3480 = vpop.f32.mrb[0].mxu0
        %v3481 = vadd.f32 %v3438, %v3480
        %v3482 = vpop.f32.mrb[0].mxu0
        %v3483 = vadd.f32 %v3440, %v3482
        %v3484 = vpop.f32.mrb[0].mxu0
        %v3485 = vadd.f32 %v3442, %v3484
        %v3486 = vpop.f32.mrb[0].mxu0
        %v3487 = vadd.f32 %v3444, %v3486
        %3488 = vdwg.mxu0
        %3489 = vmatprep.subr.bf16.mxu0 %v3259
        %3490 = vmatpush1.bf16.msra.mxu0 %v3258
        %3491 = vmatprep.subr.bf16.mxu0 %v3263
        %3492 = vmatpush1.bf16.msra.mxu0 %v3262
        %3493 = vmatprep.subr.bf16.mxu0 %v3267
        %3494 = vmatpush1.bf16.msra.mxu0 %v3266
        %3495 = vmatprep.subr.bf16.mxu0 %v3271
        %3496 = vmatpush1.bf16.msra.mxu0 %v3270
        %3497 = vmatprep.subr.bf16.mxu0 %v3275
        %3498 = vmatpush1.bf16.msra.mxu0 %v3274
        %3499 = vmatprep.subr.bf16.mxu0 %v3279
        %3500 = vmatpush1.bf16.msra.mxu0 %v3278
        %3501 = vmatprep.subr.bf16.mxu0 %v3283
        %3502 = vmatpush1.bf16.msra.mxu0 %v3282
        %3503 = vmatprep.subr.bf16.mxu0 %v3287
        %3504 = vmatpush1.bf16.msra.mxu0 %v3286
        %3505 = vmatprep.subr.bf16.mxu0 %v3291
        %3506 = vmatpush1.bf16.msra.mxu0 %v3290
        %3507 = vmatprep.subr.bf16.mxu0 %v3295
        %3508 = vmatpush1.bf16.msra.mxu0 %v3294
        %3509 = vmatprep.subr.bf16.mxu0 %v3299
        %3510 = vmatpush1.bf16.msra.mxu0 %v3298
        %3511 = vmatprep.subr.bf16.mxu0 %v3303
        %3512 = vmatpush1.bf16.msra.mxu0 %v3302
        %3513 = vmatprep.subr.bf16.mxu0 %v3307
        %3514 = vmatpush1.bf16.msra.mxu0 %v3306
        %3515 = vmatprep.subr.bf16.mxu0 %v3311
        %3516 = vmatpush1.bf16.msra.mxu0 %v3310
        %3517 = vmatprep.subr.bf16.mxu0 %v3315
        %3518 = vmatpush1.bf16.msra.mxu0 %v3314
        %3519 = vmatprep.subr.bf16.mxu0 %v3319
        %3520 = vmatpush1.bf16.msra.mxu0 %v3318
        %3521 = vmatprep.mubr.bf16.mxu0 %v2356
        %3522 = vmatmul.mubr.bf16.gmra.mrb[0].mxu0 %v2355
        %v3523 = vpop.f32.mrb[0].mxu0
        %v3524 = vadd.f32 %v3032, %v3523
        %v3525 = vpop.f32.mrb[0].mxu0
        %v3526 = vadd.f32 %v3034, %v3525
        %v3527 = vpop.f32.mrb[0].mxu0
        %v3528 = vadd.f32 %v3036, %v3527
        %v3529 = vpop.f32.mrb[0].mxu0
        %v3530 = vadd.f32 %v3038, %v3529
        %3531 = vdwg.mxu0
        %3532 = vmatprep.subr.bf16.mxu0 %v3323
        %3533 = vmatpush1.bf16.msra.mxu0 %v3322
        %3534 = vmatprep.subr.bf16.mxu0 %v3327
        %3535 = vmatpush1.bf16.msra.mxu0 %v3326
        %3536 = vmatprep.subr.bf16.mxu0 0
        %3537 = vmatpush1.bf16.msra.mxu0 0
        %3538 = vmatprep.subr.bf16.mxu0 0
        %3539 = vmatpush1.bf16.msra.mxu0 0
        %3540 = vmatprep.subr.bf16.mxu0 0
        %3541 = vmatpush1.bf16.msra.mxu0 0
        %3542 = vmatprep.subr.bf16.mxu0 0
        %3543 = vmatpush1.bf16.msra.mxu0 0
        %3544 = vmatprep.subr.bf16.mxu0 0
        %3545 = vmatpush1.bf16.msra.mxu0 0
        %3546 = vmatprep.subr.bf16.mxu0 0
        %3547 = vmatpush1.bf16.msra.mxu0 0
        %3548 = vmatprep.subr.bf16.mxu0 0
        %3549 = vmatpush1.bf16.msra.mxu0 0
        %3550 = vmatprep.subr.bf16.mxu0 0
        %3551 = vmatpush1.bf16.msra.mxu0 0
        %3552 = vmatprep.subr.bf16.mxu0 0
        %3553 = vmatpush1.bf16.msra.mxu0 0
        %3554 = vmatprep.subr.bf16.mxu0 0
        %3555 = vmatpush1.bf16.msra.mxu0 0
        %3556 = vmatprep.subr.bf16.mxu0 0
        %3557 = vmatpush1.bf16.msra.mxu0 0
        %3558 = vmatprep.subr.bf16.mxu0 0
        %3559 = vmatpush1.bf16.msra.mxu0 0
        %3560 = vmatprep.subr.bf16.mxu0 0
        %3561 = vmatpush1.bf16.msra.mxu0 0
        %3562 = vmatprep.subr.bf16.mxu0 0
        %3563 = vmatpush1.bf16.msra.mxu0 0
        %3564 = vmatprep.mubr.bf16.mxu0 0
        %3565 = vmatmul.mubr.bf16.gmra.mrb[0].mxu0 %v3401
        %v3566 = vpop.f32.mrb[0].mxu0
        %v3567 = vadd.f32 %v3524, %v3566
        %v3568 = vpop.f32.mrb[0].mxu0
        %v3569 = vadd.f32 %v3526, %v3568
        %v3570 = vpop.f32.mrb[0].mxu0
        %v3571 = vadd.f32 %v3528, %v3570
        %v3572 = vpop.f32.mrb[0].mxu0
        %v3573 = vadd.f32 %v3530, %v3572
        %3574 = vdwg.mxu0
        %v3575 = vld [vmem:[%s7] sm:$0xff]
        %v3576 = vld [vmem:[%s7 + $0x8] sm:$0xff]
        %v3577 = vld [vmem:[%s7 + $0x10] sm:$0xff]
        %v3578 = vld [vmem:[%s7 + $0x18] sm:$0xff]
        %v3579 = vld [vmem:[%s7 + $0x20] sm:$0xff]
        %v3580 = vld [vmem:[%s7 + $0x28] sm:$0xff]
        %v3581 = vld [vmem:[%s7 + $0x30] sm:$0xff]
        %v3582 = vld [vmem:[%s7 + $0x38] sm:$0xff]
        %v3583 = vadd.f32 %v3481, %v3575
        %v3584 = vadd.f32 %v3483, %v3576
        %v3585 = vadd.f32 %v3567, %v3577
        %v3586 = vadd.f32 %v3569, %v3578
        %v3587 = vadd.f32 %v3485, %v3579
        %v3588 = vadd.f32 %v3487, %v3580
        %v3589 = vadd.f32 %v3571, %v3581
        %v3590 = vadd.f32 %v3573, %v3582
        %3591 = vst [vmem:[%s301] sm:$0xff] %v3583
        %3592 = vst [vmem:[%s301 + $0x8] sm:$0xff] %v3584
        %3593 = vst [vmem:[%s301 + $0x10] sm:$0xff] %v3585
        %3594 = vst [vmem:[%s301 + $0x18] sm:$0xff] %v3586
        %3595 = vst [vmem:[%s301 + $0x20] sm:$0xff] %v3587
        %3596 = vst [vmem:[%s301 + $0x28] sm:$0xff] %v3588
        %3597 = vst [vmem:[%s301 + $0x30] sm:$0xff] %v3589
        %3598 = vst [vmem:[%s301 + $0x38] sm:$0xff] %v3590
        %s3599 = sand.u32 %s203, 1
        %s3600 = scalar_lea.sflag [#allocation3], %s3599
        %s3601 = sand.u32 %s203, 1
        %s3602 = smul.addr %s3601, 64
        %s3603 = scalar_lea.vmem [#allocation2], %s3602
        // Predicated region
        $region53: #{tpu_custom_call.1} parent=51 // pred_check
          %p3604 = pneg %p213
        $region54: #{tpu_custom_call.1} parent=51 // pred_check_branch
          %3606 = sbr.rel (%p3604) target = $region56
        $region55: #{tpu_custom_call.1} parent=51 // pred_region
          %s3607 = smul.u32 2, %s22
          %s3609 = ssub.s32 1024, 1024
          %3610 = vsyncadd %s3600, %s3609
          %s3611 = smul.addr %s3607, 4
          %s3612 = smul.addr %s3611, 128
          %s3613 = scalar_lea.hbm %s8, %s3612
          %s3614 = sshll.u32 %s3603, 4
          %s3615 = int_to_ptr.vmem [resolvable:$true] %s3614
          %3620 = dma.vmem_to_hbm [thread:$0]  %s3615, 1024, %s3613, %s3600, 512, 512, 32
        $region56: #{tpu_custom_call.1} parent=51 // pred_fallthru
          _
      $region52: #{tpu_custom_call.1} parent=5 // pred_fallthru
        _
      %p3621 = scmp.le.s32.totalorder 2, %s17
      // Predicated region
      $region57: #{tpu_custom_call.1} parent=5 // pred_check
        %p3622 = pneg %p3621
      $region58: #{tpu_custom_call.1} parent=5 // pred_check_branch
        %3624 = sbr.rel (%p3622) target = $region60
      $region59: #{tpu_custom_call.1} parent=5 // pred_region
        %s3625 = ssub.s32 %s17, 2
        // Predicated region
        $region61: #{tpu_custom_call.1} parent=59 // pred_check
          %p3626 = pneg %p219
        $region62: #{tpu_custom_call.1} parent=59 // pred_check_branch
          %3628 = sbr.rel (%p3626) target = $region64
        $region63: #{tpu_custom_call.1} parent=59 // pred_region
          %s3629 = sand.u32 %s204, 1
          %s3630 = scalar_lea.sflag [#allocation3], %s3629
          %s3631 = sand.u32 %s204, 1
          %s3632 = smul.addr %s3631, 64
          %s3633 = scalar_lea.vmem [#allocation2], %s3632
          %3634 = dma.done %s3630, 1024
        $region64: #{tpu_custom_call.1} parent=59 // pred_fallthru
          _
      $region60: #{tpu_custom_call.1} parent=5 // pred_fallthru
        _
    $region6: #{tpu_custom_call.1} parent=1 // loop_footer
      %s21 = sadd.s32 1, %s17
    $region7: #{tpu_custom_call.1} parent=1 // loop_footer_branch
      %16 = sbr.rel target = $region3
    $region8: #{tpu_custom_call.1} parent=1 // loop_exit
      _
    %3635 = vsyncpa [#allocation3], 1
    %s3636 = scalar_lea.sflag [#allocation3], 1
    %3637 = vsyncpa %s3636, 1

</llo_original>
